<compile_context>
chip_gen: v7x
topology: tpu7x:2x2x1
jax: 0.10.0
libtpu: 0.0.40
codegen_flags: <defaults>
</compile_context>

<pallas_src>
import math
import functools

import numpy as np
import jax
import jax.numpy as jnp
from jax import lax
from jax.experimental import pallas as pl
from jax.experimental.pallas import tpu as pltpu


def attention_kernel(x_ref, wq_ref, wk_ref, wv_ref, wo_ref,
                     cos_ref, sin_ref, out_ref,
                     *, n_heads, n_kv_heads, head_dim):
    n_rep = n_heads // n_kv_heads
    scale = 1.0 / math.sqrt(head_dim)
    half = head_dim // 2

    xb = x_ref[...]                                                     # (S, dim) bf16

    # fused projections: one wide bf16 matmul each, f32 accumulation
    q_all = jnp.dot(xb, wq_ref[...], preferred_element_type=jnp.float32)   # (S, H*Dh)
    k_all = jnp.dot(xb, wk_ref[...], preferred_element_type=jnp.float32)   # (S, Hkv*Dh)
    v_all = jnp.dot(xb, wv_ref[...], preferred_element_type=jnp.float32)   # (S, Hkv*Dh)

    cos = cos_ref[...]                                                  # (S, Dh) f32  [c|c]
    sin = sin_ref[...]                                                  # (S, Dh) f32  [-s|s]

    def rope(t):  # half-rotation RoPE on de-interleaved features (XLU roll, no MXU)
        return t * cos + pltpu.roll(t, half, axis=1) * sin

    # static head loop (n_heads is a compile-time constant; small here).
    heads_out = []
    for kvh in range(n_kv_heads):
        sl = slice(kvh * head_dim, (kvh + 1) * head_dim)
        k = rope(k_all[:, sl]).astype(jnp.bfloat16)                     # (S, Dh)
        v = v_all[:, sl].astype(jnp.bfloat16)                           # (S, Dh)
        for r in range(n_rep):
            h = kvh * n_rep + r
            q = rope(q_all[:, h * head_dim:(h + 1) * head_dim])
            q = (q * scale).astype(jnp.bfloat16)                        # fold 1/sqrt(Dh) into q
            s = lax.dot_general(q, k, (((1,), (1,)), ((), ())),
                                preferred_element_type=jnp.float32)     # (S, S) f32
            m = jnp.max(s, axis=-1, keepdims=True)
            e = jnp.exp(s - m)
            denom = jnp.sum(e, axis=-1, keepdims=True)
            p = (e * pl.reciprocal(denom, approx=True)).astype(jnp.bfloat16)
            heads_out.append(jnp.dot(p, v, preferred_element_type=jnp.float32))

    attn = jnp.concatenate(heads_out, axis=-1).astype(jnp.bfloat16)     # (S, dim)
    out = jnp.dot(attn, wo_ref[...], preferred_element_type=jnp.float32)  # (S, dim)
    out_ref[...] = out.astype(out_ref.dtype)


def attention_forward(x, freqs_cos, freqs_sin, wq, wk, wv, wo,
                      n_heads, n_kv_heads):
    """x: (B,S,dim) f32.  Weights pre-transposed to (in_dim, out_dim) so y = x @ W."""
    B, S, dim = x.shape
    head_dim = dim // n_heads
    half = head_dim // 2

    # de-interleave the per-head feature axis of Wq / Wk:
    # [x0,x1,x2,x3,...] -> [x0,x2,... | x1,x3,...]   (even half | odd half)
    perm = np.arange(head_dim).reshape(half, 2).T.reshape(-1)
    q_cols = np.concatenate([h * head_dim + perm for h in range(n_heads)])
    k_cols = np.concatenate([h * head_dim + perm for h in range(n_kv_heads)])
    wq_de = wq[:, q_cols]
    wk_de = wk[:, k_cols]

    # half-rotation RoPE tables: out = t*[c|c] + roll(t, Dh/2)*[-s|s]
    cos2 = jnp.concatenate([freqs_cos, freqs_cos], axis=-1).astype(jnp.float32)   # (S, Dh)
    sin2 = jnp.concatenate([-freqs_sin, freqs_sin], axis=-1).astype(jnp.float32)  # (S, Dh)

    # bf16 operands for the MXU; accumulation stays f32 inside the kernel
    xb = x.astype(jnp.bfloat16)
    wq_b = wq_de.astype(jnp.bfloat16)
    wk_b = wk_de.astype(jnp.bfloat16)
    wv_b = wv.astype(jnp.bfloat16)
    wo_b = wo.astype(jnp.bfloat16)

    kernel = functools.partial(attention_kernel, n_heads=n_heads,
                               n_kv_heads=n_kv_heads, head_dim=head_dim)

    out = pl.pallas_call(
        kernel,
        out_shape=jax.ShapeDtypeStruct((B, S, dim), x.dtype),
        grid=(B,),
        in_specs=[
            pl.BlockSpec((None, S, dim), lambda b: (b, 0, 0)),              # x
            pl.BlockSpec((dim, n_heads * head_dim), lambda b: (0, 0)),      # Wq^T (de-interleaved)
            pl.BlockSpec((dim, n_kv_heads * head_dim), lambda b: (0, 0)),   # Wk^T (de-interleaved)
            pl.BlockSpec((dim, n_kv_heads * head_dim), lambda b: (0, 0)),   # Wv^T
            pl.BlockSpec((n_heads * head_dim, dim), lambda b: (0, 0)),      # Wo^T
            pl.BlockSpec((S, head_dim), lambda b: (0, 0)),                  # cos table
            pl.BlockSpec((S, head_dim), lambda b: (0, 0)),                  # sin table
        ],
        out_specs=pl.BlockSpec((None, S, dim), lambda b: (b, 0, 0)),
        compiler_params=pltpu.CompilerParams(
            dimension_semantics=("parallel",)),
    )(xb, wq_b, wk_b, wv_b, wo_b, cos2, sin2)
    return out


def reference_attention(x, freqs_cos, freqs_sin, wq, wk, wv, wo,
                        n_heads, n_kv_heads):
    """Pure-JAX (f32) re-implementation of the PyTorch forward (for validation)."""
    B, S, dim = x.shape
    Dh = dim // n_heads
    n_rep = n_heads // n_kv_heads
    xq = (x @ wq).reshape(B, S, n_heads, Dh)
    xk = (x @ wk).reshape(B, S, n_kv_heads, Dh)
    xv = (x @ wv).reshape(B, S, n_kv_heads, Dh)

    def rope(t):
        tr, ti = t[..., 0::2], t[..., 1::2]
        c = freqs_cos[None, :, None, :]
        s = freqs_sin[None, :, None, :]
        o_r = tr * c - ti * s
        o_i = tr * s + ti * c
        return jnp.stack([o_r, o_i], axis=-1).reshape(t.shape)

    xq, xk = rope(xq), rope(xk)
    xk = jnp.repeat(xk, n_rep, axis=2)
    xv = jnp.repeat(xv, n_rep, axis=2)
    xq = xq.transpose(0, 2, 1, 3)
    xk = xk.transpose(0, 2, 1, 3)
    xv = xv.transpose(0, 2, 1, 3)
    scores = jnp.einsum('bhqd,bhkd->bhqk', xq, xk) / math.sqrt(Dh)
    probs = jax.nn.softmax(scores, axis=-1)
    out = jnp.einsum('bhqk,bhkd->bhqd', probs, xv)
    out = out.transpose(0, 2, 1, 3).reshape(B, S, dim)
    return out @ wo


if __name__ == "__main__":
    # small ModelArgs-consistent shapes: dim=512, n_heads=4, n_kv_heads=2
    B, S, dim, n_heads, n_kv_heads = 2, 16, 512, 4, 2
    Dh = dim // n_heads  # 128

    key = jax.random.PRNGKey(0)
    k1, k2, k3, k4, k5 = jax.random.split(key, 5)
    x = jax.random.normal(k1, (B, S, dim), jnp.float32)
    wq = jax.random.normal(k2, (dim, n_heads * Dh), jnp.float32) * 0.02
    wk = jax.random.normal(k3, (dim, n_kv_heads * Dh), jnp.float32) * 0.02
    wv = jax.random.normal(k4, (dim, n_kv_heads * Dh), jnp.float32) * 0.02
    wo = jax.random.normal(k5, (n_heads * Dh, dim), jnp.float32) * 0.02

    # rotary tables, same recipe as llama precompute_freqs_cis
    inv = 1.0 / (10000.0 ** (np.arange(0, Dh, 2, dtype=np.float32) / Dh))
    ang = np.outer(np.arange(S, dtype=np.float32), inv)
    freqs_cos = jnp.asarray(np.cos(ang), jnp.float32)   # (S, Dh//2)
    freqs_sin = jnp.asarray(np.sin(ang), jnp.float32)   # (S, Dh//2)

    out = attention_forward(x, freqs_cos, freqs_sin, wq, wk, wv, wo,
                            n_heads, n_kv_heads)
    out = jax.block_until_ready(out)

    ref = reference_attention(x, freqs_cos, freqs_sin, wq, wk, wv, wo,
                              n_heads, n_kv_heads)
    err = float(jnp.max(jnp.abs(out - ref)))
    # bf16 matmul operands (f32 accumulation) -> allow a slightly looser bound
    assert err < 2e-2, f"max abs err too large: {err}"
    print("KERNEL_OK")
</pallas_src>

<mosaic_0001>
module attributes {stable_mosaic.version = 11 : i64} {
  func.func @attention_kernel(%arg0: i32, %arg1: memref<1x16x512xbf16, #tpu.memory_space<vmem>>, %arg2: memref<512x512xbf16, #tpu.memory_space<vmem>>, %arg3: memref<512x256xbf16, #tpu.memory_space<vmem>>, %arg4: memref<512x256xbf16, #tpu.memory_space<vmem>>, %arg5: memref<512x512xbf16, #tpu.memory_space<vmem>>, %arg6: memref<16x128xf32, #tpu.memory_space<vmem>>, %arg7: memref<16x128xf32, #tpu.memory_space<vmem>>, %arg8: memref<1x16x512xf32, #tpu.memory_space<vmem>>) attributes {dimension_semantics = [#tpu.dimension_semantics<parallel>], iteration_bounds = array<i64: 2>, scalar_prefetch = 0 : i64, scratch_operands = 0 : i64, tpu.core_type = #tpu.core_type<tc>, window_params = [{transform_indices = @transform_0, window_bounds = array<i64: 1, 16, 512>}, {pipeline_mode = #tpu.pipeline_mode<synchronous>, transform_indices = @transform_1, window_bounds = array<i64: 512, 512>}, {pipeline_mode = #tpu.pipeline_mode<synchronous>, transform_indices = @transform_2, window_bounds = array<i64: 512, 256>}, {pipeline_mode = #tpu.pipeline_mode<synchronous>, transform_indices = @transform_3, window_bounds = array<i64: 512, 256>}, {pipeline_mode = #tpu.pipeline_mode<synchronous>, transform_indices = @transform_4, window_bounds = array<i64: 512, 512>}, {pipeline_mode = #tpu.pipeline_mode<synchronous>, transform_indices = @transform_5, window_bounds = array<i64: 16, 128>}, {pipeline_mode = #tpu.pipeline_mode<synchronous>, transform_indices = @transform_6, window_bounds = array<i64: 16, 128>}, {transform_indices = @transform_7, window_bounds = array<i64: 1, 16, 512>}]} {
    %c0 = arith.constant 0 : index
    %c0_0 = arith.constant 0 : index
    %c0_1 = arith.constant 0 : index
    %0 = vector.load %arg1[%c0, %c0_0, %c0_1] : memref<1x16x512xbf16, #tpu.memory_space<vmem>>, vector<1x16x512xbf16>
    %1 = vector.shape_cast %0 : vector<1x16x512xbf16> to vector<16x512xbf16>
    %c0_2 = arith.constant 0 : index
    %c0_3 = arith.constant 0 : index
    %2 = vector.load %arg2[%c0_2, %c0_3] : memref<512x512xbf16, #tpu.memory_space<vmem>>, vector<512x512xbf16>
    %cst = arith.constant dense<0.000000e+00> : vector<16x512xf32>
    %3 = tpu.matmul %1, %2, %cst {dimension_numbers = #tpu.dot_dimension_numbers<[1], [0], [0], [1], [0, 0, 1, 1], [], []>} : vector<16x512xbf16>, vector<512x512xbf16>, vector<16x512xf32> -> vector<16x512xf32>
    %c0_4 = arith.constant 0 : index
    %c0_5 = arith.constant 0 : index
    %4 = vector.load %arg3[%c0_4, %c0_5] : memref<512x256xbf16, #tpu.memory_space<vmem>>, vector<512x256xbf16>
    %cst_6 = arith.constant dense<0.000000e+00> : vector<16x256xf32>
    %5 = tpu.matmul %1, %4, %cst_6 {dimension_numbers = #tpu.dot_dimension_numbers<[1], [0], [0], [1], [0, 0, 1, 1], [], []>} : vector<16x512xbf16>, vector<512x256xbf16>, vector<16x256xf32> -> vector<16x256xf32>
    %c0_7 = arith.constant 0 : index
    %c0_8 = arith.constant 0 : index
    %6 = vector.load %arg4[%c0_7, %c0_8] : memref<512x256xbf16, #tpu.memory_space<vmem>>, vector<512x256xbf16>
    %cst_9 = arith.constant dense<0.000000e+00> : vector<16x256xf32>
    %7 = tpu.matmul %1, %6, %cst_9 {dimension_numbers = #tpu.dot_dimension_numbers<[1], [0], [0], [1], [0, 0, 1, 1], [], []>} : vector<16x512xbf16>, vector<512x256xbf16>, vector<16x256xf32> -> vector<16x256xf32>
    %c0_10 = arith.constant 0 : index
    %c0_11 = arith.constant 0 : index
    %8 = vector.load %arg6[%c0_10, %c0_11] : memref<16x128xf32, #tpu.memory_space<vmem>>, vector<16x128xf32>
    %c0_12 = arith.constant 0 : index
    %c0_13 = arith.constant 0 : index
    %9 = vector.load %arg7[%c0_12, %c0_13] : memref<16x128xf32, #tpu.memory_space<vmem>>, vector<16x128xf32>
    %10 = vector.extract_strided_slice %5 {offsets = [0, 0], sizes = [16, 128], strides = [1, 1]} : vector<16x256xf32> to vector<16x128xf32>
    %11 = arith.mulf %10, %8 : vector<16x128xf32>
    %c64_i32 = arith.constant 64 : i32
    %12 = tpu.dynamic_rotate %10 by %c64_i32 dim 1 : vector<16x128xf32>, i32 -> vector<16x128xf32>
    %13 = arith.mulf %12, %9 : vector<16x128xf32>
    %14 = arith.addf %11, %13 : vector<16x128xf32>
    %15 = arith.truncf %14 : vector<16x128xf32> to vector<16x128xbf16>
    %16 = vector.extract_strided_slice %7 {offsets = [0, 0], sizes = [16, 128], strides = [1, 1]} : vector<16x256xf32> to vector<16x128xf32>
    %17 = arith.truncf %16 : vector<16x128xf32> to vector<16x128xbf16>
    %18 = vector.extract_strided_slice %3 {offsets = [0, 0], sizes = [16, 128], strides = [1, 1]} : vector<16x512xf32> to vector<16x128xf32>
    %19 = arith.mulf %18, %8 : vector<16x128xf32>
    %c64_i32_14 = arith.constant 64 : i32
    %20 = tpu.dynamic_rotate %18 by %c64_i32_14 dim 1 : vector<16x128xf32>, i32 -> vector<16x128xf32>
    %21 = arith.mulf %20, %9 : vector<16x128xf32>
    %22 = arith.addf %19, %21 : vector<16x128xf32>
    %cst_15 = arith.constant 0.0883883461 : f32
    %23 = vector.broadcast %cst_15 : f32 to vector<16x128xf32>
    %24 = arith.mulf %22, %23 : vector<16x128xf32>
    %25 = arith.truncf %24 : vector<16x128xf32> to vector<16x128xbf16>
    %cst_16 = arith.constant dense<0.000000e+00> : vector<16x16xf32>
    %26 = tpu.matmul %25, %15, %cst_16 {dimension_numbers = #tpu.dot_dimension_numbers<[1], [1], [0], [0], [0, 0, 1, 0], [], []>} : vector<16x128xbf16>, vector<16x128xbf16>, vector<16x16xf32> -> vector<16x16xf32>
    %cst_17 = arith.constant dense<0xFF800000> : vector<16xf32>
    %27 = vector.multi_reduction <maximumf>, %26, %cst_17 [1] : vector<16x16xf32> to vector<16xf32>
    %28 = vector.shape_cast %27 : vector<16xf32> to vector<16x1xf32>
    %29 = vector.broadcast %28 : vector<16x1xf32> to vector<16x16xf32>
    %30 = arith.subf %26, %29 : vector<16x16xf32>
    %31 = math.exp %30 : vector<16x16xf32>
    %cst_18 = arith.constant dense<0.000000e+00> : vector<16xf32>
    %32 = vector.multi_reduction <add>, %31, %cst_18 [1] : vector<16x16xf32> to vector<16xf32>
    %33 = vector.shape_cast %32 : vector<16xf32> to vector<16x1xf32>
    %34 = tpu.reciprocal %33 {approx = true} : vector<16x1xf32> -> vector<16x1xf32>
    %35 = vector.broadcast %34 : vector<16x1xf32> to vector<16x16xf32>
    %36 = arith.mulf %31, %35 : vector<16x16xf32>
    %37 = arith.truncf %36 : vector<16x16xf32> to vector<16x16xbf16>
    %cst_19 = arith.constant dense<0.000000e+00> : vector<16x128xf32>
    %38 = tpu.matmul %37, %17, %cst_19 {dimension_numbers = #tpu.dot_dimension_numbers<[1], [0], [0], [1], [0, 0, 1, 1], [], []>} : vector<16x16xbf16>, vector<16x128xbf16>, vector<16x128xf32> -> vector<16x128xf32>
    %39 = vector.extract_strided_slice %3 {offsets = [0, 128], sizes = [16, 128], strides = [1, 1]} : vector<16x512xf32> to vector<16x128xf32>
    %40 = arith.mulf %39, %8 : vector<16x128xf32>
    %c64_i32_20 = arith.constant 64 : i32
    %41 = tpu.dynamic_rotate %39 by %c64_i32_20 dim 1 : vector<16x128xf32>, i32 -> vector<16x128xf32>
    %42 = arith.mulf %41, %9 : vector<16x128xf32>
    %43 = arith.addf %40, %42 : vector<16x128xf32>
    %cst_21 = arith.constant 0.0883883461 : f32
    %44 = vector.broadcast %cst_21 : f32 to vector<16x128xf32>
    %45 = arith.mulf %43, %44 : vector<16x128xf32>
    %46 = arith.truncf %45 : vector<16x128xf32> to vector<16x128xbf16>
    %cst_22 = arith.constant dense<0.000000e+00> : vector<16x16xf32>
    %47 = tpu.matmul %46, %15, %cst_22 {dimension_numbers = #tpu.dot_dimension_numbers<[1], [1], [0], [0], [0, 0, 1, 0], [], []>} : vector<16x128xbf16>, vector<16x128xbf16>, vector<16x16xf32> -> vector<16x16xf32>
    %cst_23 = arith.constant dense<0xFF800000> : vector<16xf32>
    %48 = vector.multi_reduction <maximumf>, %47, %cst_23 [1] : vector<16x16xf32> to vector<16xf32>
    %49 = vector.shape_cast %48 : vector<16xf32> to vector<16x1xf32>
    %50 = vector.broadcast %49 : vector<16x1xf32> to vector<16x16xf32>
    %51 = arith.subf %47, %50 : vector<16x16xf32>
    %52 = math.exp %51 : vector<16x16xf32>
    %cst_24 = arith.constant dense<0.000000e+00> : vector<16xf32>
    %53 = vector.multi_reduction <add>, %52, %cst_24 [1] : vector<16x16xf32> to vector<16xf32>
    %54 = vector.shape_cast %53 : vector<16xf32> to vector<16x1xf32>
    %55 = tpu.reciprocal %54 {approx = true} : vector<16x1xf32> -> vector<16x1xf32>
    %56 = vector.broadcast %55 : vector<16x1xf32> to vector<16x16xf32>
    %57 = arith.mulf %52, %56 : vector<16x16xf32>
    %58 = arith.truncf %57 : vector<16x16xf32> to vector<16x16xbf16>
    %cst_25 = arith.constant dense<0.000000e+00> : vector<16x128xf32>
    %59 = tpu.matmul %58, %17, %cst_25 {dimension_numbers = #tpu.dot_dimension_numbers<[1], [0], [0], [1], [0, 0, 1, 1], [], []>} : vector<16x16xbf16>, vector<16x128xbf16>, vector<16x128xf32> -> vector<16x128xf32>
    %60 = vector.extract_strided_slice %5 {offsets = [0, 128], sizes = [16, 128], strides = [1, 1]} : vector<16x256xf32> to vector<16x128xf32>
    %61 = arith.mulf %60, %8 : vector<16x128xf32>
    %c64_i32_26 = arith.constant 64 : i32
    %62 = tpu.dynamic_rotate %60 by %c64_i32_26 dim 1 : vector<16x128xf32>, i32 -> vector<16x128xf32>
    %63 = arith.mulf %62, %9 : vector<16x128xf32>
    %64 = arith.addf %61, %63 : vector<16x128xf32>
    %65 = arith.truncf %64 : vector<16x128xf32> to vector<16x128xbf16>
    %66 = vector.extract_strided_slice %7 {offsets = [0, 128], sizes = [16, 128], strides = [1, 1]} : vector<16x256xf32> to vector<16x128xf32>
    %67 = arith.truncf %66 : vector<16x128xf32> to vector<16x128xbf16>
    %68 = vector.extract_strided_slice %3 {offsets = [0, 256], sizes = [16, 128], strides = [1, 1]} : vector<16x512xf32> to vector<16x128xf32>
    %69 = arith.mulf %68, %8 : vector<16x128xf32>
    %c64_i32_27 = arith.constant 64 : i32
    %70 = tpu.dynamic_rotate %68 by %c64_i32_27 dim 1 : vector<16x128xf32>, i32 -> vector<16x128xf32>
    %71 = arith.mulf %70, %9 : vector<16x128xf32>
    %72 = arith.addf %69, %71 : vector<16x128xf32>
    %cst_28 = arith.constant 0.0883883461 : f32
    %73 = vector.broadcast %cst_28 : f32 to vector<16x128xf32>
    %74 = arith.mulf %72, %73 : vector<16x128xf32>
    %75 = arith.truncf %74 : vector<16x128xf32> to vector<16x128xbf16>
    %cst_29 = arith.constant dense<0.000000e+00> : vector<16x16xf32>
    %76 = tpu.matmul %75, %65, %cst_29 {dimension_numbers = #tpu.dot_dimension_numbers<[1], [1], [0], [0], [0, 0, 1, 0], [], []>} : vector<16x128xbf16>, vector<16x128xbf16>, vector<16x16xf32> -> vector<16x16xf32>
    %cst_30 = arith.constant dense<0xFF800000> : vector<16xf32>
    %77 = vector.multi_reduction <maximumf>, %76, %cst_30 [1] : vector<16x16xf32> to vector<16xf32>
    %78 = vector.shape_cast %77 : vector<16xf32> to vector<16x1xf32>
    %79 = vector.broadcast %78 : vector<16x1xf32> to vector<16x16xf32>
    %80 = arith.subf %76, %79 : vector<16x16xf32>
    %81 = math.exp %80 : vector<16x16xf32>
    %cst_31 = arith.constant dense<0.000000e+00> : vector<16xf32>
    %82 = vector.multi_reduction <add>, %81, %cst_31 [1] : vector<16x16xf32> to vector<16xf32>
    %83 = vector.shape_cast %82 : vector<16xf32> to vector<16x1xf32>
    %84 = tpu.reciprocal %83 {approx = true} : vector<16x1xf32> -> vector<16x1xf32>
    %85 = vector.broadcast %84 : vector<16x1xf32> to vector<16x16xf32>
    %86 = arith.mulf %81, %85 : vector<16x16xf32>
    %87 = arith.truncf %86 : vector<16x16xf32> to vector<16x16xbf16>
    %cst_32 = arith.constant dense<0.000000e+00> : vector<16x128xf32>
    %88 = tpu.matmul %87, %67, %cst_32 {dimension_numbers = #tpu.dot_dimension_numbers<[1], [0], [0], [1], [0, 0, 1, 1], [], []>} : vector<16x16xbf16>, vector<16x128xbf16>, vector<16x128xf32> -> vector<16x128xf32>
    %89 = vector.extract_strided_slice %3 {offsets = [0, 384], sizes = [16, 128], strides = [1, 1]} : vector<16x512xf32> to vector<16x128xf32>
    %90 = arith.mulf %89, %8 : vector<16x128xf32>
    %c64_i32_33 = arith.constant 64 : i32
    %91 = tpu.dynamic_rotate %89 by %c64_i32_33 dim 1 : vector<16x128xf32>, i32 -> vector<16x128xf32>
    %92 = arith.mulf %91, %9 : vector<16x128xf32>
    %93 = arith.addf %90, %92 : vector<16x128xf32>
    %cst_34 = arith.constant 0.0883883461 : f32
    %94 = vector.broadcast %cst_34 : f32 to vector<16x128xf32>
    %95 = arith.mulf %93, %94 : vector<16x128xf32>
    %96 = arith.truncf %95 : vector<16x128xf32> to vector<16x128xbf16>
    %cst_35 = arith.constant dense<0.000000e+00> : vector<16x16xf32>
    %97 = tpu.matmul %96, %65, %cst_35 {dimension_numbers = #tpu.dot_dimension_numbers<[1], [1], [0], [0], [0, 0, 1, 0], [], []>} : vector<16x128xbf16>, vector<16x128xbf16>, vector<16x16xf32> -> vector<16x16xf32>
    %cst_36 = arith.constant dense<0xFF800000> : vector<16xf32>
    %98 = vector.multi_reduction <maximumf>, %97, %cst_36 [1] : vector<16x16xf32> to vector<16xf32>
    %99 = vector.shape_cast %98 : vector<16xf32> to vector<16x1xf32>
    %100 = vector.broadcast %99 : vector<16x1xf32> to vector<16x16xf32>
    %101 = arith.subf %97, %100 : vector<16x16xf32>
    %102 = math.exp %101 : vector<16x16xf32>
    %cst_37 = arith.constant dense<0.000000e+00> : vector<16xf32>
    %103 = vector.multi_reduction <add>, %102, %cst_37 [1] : vector<16x16xf32> to vector<16xf32>
    %104 = vector.shape_cast %103 : vector<16xf32> to vector<16x1xf32>
    %105 = tpu.reciprocal %104 {approx = true} : vector<16x1xf32> -> vector<16x1xf32>
    %106 = vector.broadcast %105 : vector<16x1xf32> to vector<16x16xf32>
    %107 = arith.mulf %102, %106 : vector<16x16xf32>
    %108 = arith.truncf %107 : vector<16x16xf32> to vector<16x16xbf16>
    %cst_38 = arith.constant dense<0.000000e+00> : vector<16x128xf32>
    %109 = tpu.matmul %108, %67, %cst_38 {dimension_numbers = #tpu.dot_dimension_numbers<[1], [0], [0], [1], [0, 0, 1, 1], [], []>} : vector<16x16xbf16>, vector<16x128xbf16>, vector<16x128xf32> -> vector<16x128xf32>
    %110 = tpu.concatenate %38, %59, %88, %109 in 1 : vector<16x128xf32>, vector<16x128xf32>, vector<16x128xf32>, vector<16x128xf32> -> vector<16x512xf32>
    %111 = arith.truncf %110 : vector<16x512xf32> to vector<16x512xbf16>
    %c0_39 = arith.constant 0 : index
    %c0_40 = arith.constant 0 : index
    %112 = vector.load %arg5[%c0_39, %c0_40] : memref<512x512xbf16, #tpu.memory_space<vmem>>, vector<512x512xbf16>
    %cst_41 = arith.constant dense<0.000000e+00> : vector<16x512xf32>
    %113 = tpu.matmul %111, %112, %cst_41 {dimension_numbers = #tpu.dot_dimension_numbers<[1], [0], [0], [1], [0, 0, 1, 1], [], []>} : vector<16x512xbf16>, vector<512x512xbf16>, vector<16x512xf32> -> vector<16x512xf32>
    %c0_42 = arith.constant 0 : index
    %c0_43 = arith.constant 0 : index
    %c0_44 = arith.constant 0 : index
    %114 = vector.load %arg8[%c0_42, %c0_43, %c0_44] : memref<1x16x512xf32, #tpu.memory_space<vmem>>, vector<1x16x512xf32>
    %115 = vector.shape_cast %114 : vector<1x16x512xf32> to vector<16x512xf32>
    %116 = vector.shape_cast %113 : vector<16x512xf32> to vector<1x16x512xf32>
    tpu.vector_store %arg8[%c0_42, %c0_43, %c0_44], %116 {strides = array<i32>} : memref<1x16x512xf32, #tpu.memory_space<vmem>>, vector<1x16x512xf32>,
    return
  }
  func.func @transform_0(%arg0: i32) -> (i32, i32, i32) {
    %c0_i32 = arith.constant 0 : i32
    %c0_i32_0 = arith.constant 0 : i32
    %c0_i32_1 = arith.constant 0 : i32
    return %arg0, %c0_i32, %c0_i32_0 : i32, i32, i32
  }
  func.func @transform_1(%arg0: i32) -> (i32, i32) {
    %c0_i32 = arith.constant 0 : i32
    %c0_i32_0 = arith.constant 0 : i32
    %c0_i32_1 = arith.constant 0 : i32
    return %c0_i32, %c0_i32_0 : i32, i32
  }
  func.func @transform_2(%arg0: i32) -> (i32, i32) {
    %c0_i32 = arith.constant 0 : i32
    %c0_i32_0 = arith.constant 0 : i32
    %c0_i32_1 = arith.constant 0 : i32
    return %c0_i32, %c0_i32_0 : i32, i32
  }
  func.func @transform_3(%arg0: i32) -> (i32, i32) {
    %c0_i32 = arith.constant 0 : i32
    %c0_i32_0 = arith.constant 0 : i32
    %c0_i32_1 = arith.constant 0 : i32
    return %c0_i32, %c0_i32_0 : i32, i32
  }
  func.func @transform_4(%arg0: i32) -> (i32, i32) {
    %c0_i32 = arith.constant 0 : i32
    %c0_i32_0 = arith.constant 0 : i32
    %c0_i32_1 = arith.constant 0 : i32
    return %c0_i32, %c0_i32_0 : i32, i32
  }
  func.func @transform_5(%arg0: i32) -> (i32, i32) {
    %c0_i32 = arith.constant 0 : i32
    %c0_i32_0 = arith.constant 0 : i32
    %c0_i32_1 = arith.constant 0 : i32
    return %c0_i32, %c0_i32_0 : i32, i32
  }
  func.func @transform_6(%arg0: i32) -> (i32, i32) {
    %c0_i32 = arith.constant 0 : i32
    %c0_i32_0 = arith.constant 0 : i32
    %c0_i32_1 = arith.constant 0 : i32
    return %c0_i32, %c0_i32_0 : i32, i32
  }
  func.func @transform_7(%arg0: i32) -> (i32, i32, i32) {
    %c0_i32 = arith.constant 0 : i32
    %c0_i32_0 = arith.constant 0 : i32
    %c0_i32_1 = arith.constant 0 : i32
    return %arg0, %c0_i32, %c0_i32_0 : i32, i32, i32
  }
}

</mosaic_0001>

<llo_original>
// kernel: tpu_custom_call.1
$region0: #{tpu_custom_call.1}
  #allocation0 [shape = 'u32[]', space=smem, size = 0x4, offset = 0x4, fixed_abs, tag = 'smem constant byte address 0x4 - core index']
  #allocation1 [shape = 'u32[144,128]{1,0:T(1,128)}', space=vmem, size = 0x12000, scoped, tag = 'internal scratch']
  %s0 = inlined_call_operand.hbm [shape: bf16[2,16,512], index: 0, kind: input, shape index: {}]
  %s1 = inlined_call_operand.hbm [shape: bf16[512,512], index: 1, kind: input, shape index: {}]
  %s2 = inlined_call_operand.hbm [shape: bf16[512,256], index: 2, kind: input, shape index: {}]
  %s3 = inlined_call_operand.hbm [shape: bf16[512,256], index: 3, kind: input, shape index: {}]
  %s4 = inlined_call_operand.hbm [shape: bf16[512,512], index: 4, kind: input, shape index: {}]
  %s5 = inlined_call_operand.vmem [shape: f32[16,128], index: 5, kind: input, shape index: {}]
  %s6 = inlined_call_operand.hbm [shape: f32[16,128], index: 6, kind: input, shape index: {}]
  %s7 = inlined_call_operand.hbm [shape: f32[2,16,512], index: 7, kind: output, shape index: {}]
  %s8 = sld [smem:[#allocation0]]
  $region85: #{tpu_custom_call.1} parent=0
    _
  %s10 = ssub.s32 1, %s8
  %s11 = scalar_select 0, %s10, %s8
  $region1: #{tpu_custom_call.1} parent=0
    #allocation2 [shape = 'u8[32768]{0}', space=vmem, size = 0x8000, scoped, tag = 'input window, operand 0']
    #allocation3 [shape = 's32[2]{0}', space=sflag, size = 0x8, scoped, tag = 'scoped memory for tpu_custom_call.1']
    #allocation4 [shape = 's32[2]{0}', space=sflag, size = 0x8, scoped, tag = 'scoped memory for tpu_custom_call.1']
    #allocation5 [shape = 'u8[524288]{0}', space=vmem, size = 0x80000, scoped, tag = 'input window, operand 1, single buffered']
    #allocation6 [shape = 's32[1]{0}', space=sflag, size = 0x4, scoped, tag = 'scoped memory for tpu_custom_call.1']
    #allocation7 [shape = 'u8[262144]{0}', space=vmem, size = 0x40000, scoped, tag = 'input window, operand 2, single buffered']
    #allocation8 [shape = 'u8[262144]{0}', space=vmem, size = 0x40000, scoped, tag = 'input window, operand 3, single buffered']
    #allocation9 [shape = 's32[1]{0}', space=sflag, size = 0x4, scoped, tag = 'scoped memory for tpu_custom_call.1']
    #allocation10 [shape = 'u8[524288]{0}', space=vmem, size = 0x80000, scoped, tag = 'input window, operand 4, single buffered']
    #allocation11 [shape = 'u8[8192]{0}', space=vmem, size = 0x2000, scoped, tag = 'input window, operand 6, single buffered']
    #allocation12 [shape = 's32[1]{0}', space=sflag, size = 0x4, scoped, tag = 'scoped memory for tpu_custom_call.1']
    #allocation13 [shape = 'u8[65536]{0}', space=vmem, size = 0x10000, scoped, tag = 'output window, operand 0']
    %12 = vsyncpa [#allocation3], 0
    %s13 = scalar_lea.sflag [#allocation3], 1
    %14 = vsyncpa %s13, 0
    %15 = vsyncpa [#allocation6], 0
    %16 = vsyncpa [#allocation9], 0
    %17 = vsyncpa [#allocation12], 0
    %18 = vsyncpa [#allocation4], 0
    %s19 = scalar_lea.sflag [#allocation4], 1
    %20 = vsyncpa %s19, 0
    loop: start=0, step=1, limit=4
    $region2: #{tpu_custom_call.1} parent=1 // loop_pre_header
      _
    $region3: #{tpu_custom_call.1} parent=1 // loop_header
      %s22 = sphi 0, %s26
      %p23 = scmp.ge.s32.totalorder %s22, 4
      %s32 = sphi 0, %s34
      %s35 = sphi 0, %s32
      %s36 = sphi 0, %s35
      %s52 = sphi 0, %s36
      %s56 = sphi 0, %s56
      %s58 = sphi 0, %s56
      %s59 = sphi 0, %s58
      %s73 = sphi 0, %s59
      %s77 = sphi 0, %s77
      %s79 = sphi 0, %s77
      %s80 = sphi 0, %s79
      %s94 = sphi 0, %s80
      %s98 = sphi 0, %s98
      %s100 = sphi 0, %s98
      %s101 = sphi 0, %s100
      %s115 = sphi 0, %s101
      %s119 = sphi 0, %s119
      %s121 = sphi 0, %s119
      %s122 = sphi 0, %s121
      %s136 = sphi 0, %s122
      %s140 = sphi 0, %s140
      %s142 = sphi 0, %s140
      %s143 = sphi 0, %s142
      %s157 = sphi 0, %s143
      %s161 = sphi 0, %s161
      %s163 = sphi 0, %s161
      %s164 = sphi 0, %s163
      %s178 = sphi 0, %s164
      %s184 = sphi 0, %s186
      %s187 = sphi 0, %s184
      %s188 = sphi 0, %s187
      %s204 = sphi 0, %s188
    $region4: #{tpu_custom_call.1} parent=1 // loop_header_branch
      %25 = sbr.rel (%p23) target = $region8
    $region5: #{tpu_custom_call.1} parent=1 // loop_body
      %s27 = ssub.s32 %s22, 1
      %s28 = ssub.s32 %s22, 2
      %s29 = sadd.s32 %s22, 1
      %s30 = ssub.s32 %s22, %s29
      %p31 = scmp.eq.s32.totalorder %s30, 0
      %s33 = sadd.s32 %s32, 1
      %s34 = scalar_select %p31, %s32, %s33
      %p37 = pneg %p31
      %p38 = scmp.eq.s32.totalorder %s22, 1
      %p39 = por %p37, %p38
      %p40 = scmp.ne.s32.totalorder %s32, %s35
      %p41 = scmp.eq.s32.totalorder %s22, 0
      %p42 = por %p40, %p41
      %p43 = scmp.ne.s32.totalorder %s32, %s35
      %p44 = scmp.eq.s32.totalorder %s27, 1
      %p45 = por %p43, %p44
      %p46 = scmp.ne.s32.totalorder %s35, %s36
      %p47 = scmp.eq.s32.totalorder %s27, 0
      %p48 = por %p46, %p47
      %p49 = scmp.ne.s32.totalorder %s35, %s36
      %p50 = scmp.eq.s32.totalorder %s28, 1
      %p51 = por %p49, %p50
      %p53 = scmp.ne.s32.totalorder %s36, %s52
      %p54 = scmp.eq.s32.totalorder %s28, 0
      %p55 = por %p53, %p54
      %s57 = sadd.s32 %s56, 1
      %p60 = scmp.eq.s32.totalorder %s22, 1
      %p61 = scmp.ne.s32.totalorder %s56, %s58
      %p62 = scmp.eq.s32.totalorder %s22, 0
      %p63 = por %p61, %p62
      %p64 = scmp.ne.s32.totalorder %s56, %s58
      %p65 = scmp.eq.s32.totalorder %s27, 1
      %p66 = por %p64, %p65
      %p67 = scmp.ne.s32.totalorder %s58, %s59
      %p68 = scmp.eq.s32.totalorder %s27, 0
      %p69 = por %p67, %p68
      %p70 = scmp.ne.s32.totalorder %s58, %s59
      %p71 = scmp.eq.s32.totalorder %s28, 1
      %p72 = por %p70, %p71
      %p74 = scmp.ne.s32.totalorder %s59, %s73
      %p75 = scmp.eq.s32.totalorder %s28, 0
      %p76 = por %p74, %p75
      %s78 = sadd.s32 %s77, 1
      %p81 = scmp.eq.s32.totalorder %s22, 1
      %p82 = scmp.ne.s32.totalorder %s77, %s79
      %p83 = scmp.eq.s32.totalorder %s22, 0
      %p84 = por %p82, %p83
      %p85 = scmp.ne.s32.totalorder %s77, %s79
      %p86 = scmp.eq.s32.totalorder %s27, 1
      %p87 = por %p85, %p86
      %p88 = scmp.ne.s32.totalorder %s79, %s80
      %p89 = scmp.eq.s32.totalorder %s27, 0
      %p90 = por %p88, %p89
      %p91 = scmp.ne.s32.totalorder %s79, %s80
      %p92 = scmp.eq.s32.totalorder %s28, 1
      %p93 = por %p91, %p92
      %p95 = scmp.ne.s32.totalorder %s80, %s94
      %p96 = scmp.eq.s32.totalorder %s28, 0
      %p97 = por %p95, %p96
      %s99 = sadd.s32 %s98, 1
      %p102 = scmp.eq.s32.totalorder %s22, 1
      %p103 = scmp.ne.s32.totalorder %s98, %s100
      %p104 = scmp.eq.s32.totalorder %s22, 0
      %p105 = por %p103, %p104
      %p106 = scmp.ne.s32.totalorder %s98, %s100
      %p107 = scmp.eq.s32.totalorder %s27, 1
      %p108 = por %p106, %p107
      %p109 = scmp.ne.s32.totalorder %s100, %s101
      %p110 = scmp.eq.s32.totalorder %s27, 0
      %p111 = por %p109, %p110
      %p112 = scmp.ne.s32.totalorder %s100, %s101
      %p113 = scmp.eq.s32.totalorder %s28, 1
      %p114 = por %p112, %p113
      %p116 = scmp.ne.s32.totalorder %s101, %s115
      %p117 = scmp.eq.s32.totalorder %s28, 0
      %p118 = por %p116, %p117
      %s120 = sadd.s32 %s119, 1
      %p123 = scmp.eq.s32.totalorder %s22, 1
      %p124 = scmp.ne.s32.totalorder %s119, %s121
      %p125 = scmp.eq.s32.totalorder %s22, 0
      %p126 = por %p124, %p125
      %p127 = scmp.ne.s32.totalorder %s119, %s121
      %p128 = scmp.eq.s32.totalorder %s27, 1
      %p129 = por %p127, %p128
      %p130 = scmp.ne.s32.totalorder %s121, %s122
      %p131 = scmp.eq.s32.totalorder %s27, 0
      %p132 = por %p130, %p131
      %p133 = scmp.ne.s32.totalorder %s121, %s122
      %p134 = scmp.eq.s32.totalorder %s28, 1
      %p135 = por %p133, %p134
      %p137 = scmp.ne.s32.totalorder %s122, %s136
      %p138 = scmp.eq.s32.totalorder %s28, 0
      %p139 = por %p137, %p138
      %s141 = sadd.s32 %s140, 1
      %p144 = scmp.eq.s32.totalorder %s22, 1
      %p145 = scmp.ne.s32.totalorder %s140, %s142
      %p146 = scmp.eq.s32.totalorder %s22, 0
      %p147 = por %p145, %p146
      %p148 = scmp.ne.s32.totalorder %s140, %s142
      %p149 = scmp.eq.s32.totalorder %s27, 1
      %p150 = por %p148, %p149
      %p151 = scmp.ne.s32.totalorder %s142, %s143
      %p152 = scmp.eq.s32.totalorder %s27, 0
      %p153 = por %p151, %p152
      %p154 = scmp.ne.s32.totalorder %s142, %s143
      %p155 = scmp.eq.s32.totalorder %s28, 1
      %p156 = por %p154, %p155
      %p158 = scmp.ne.s32.totalorder %s143, %s157
      %p159 = scmp.eq.s32.totalorder %s28, 0
      %p160 = por %p158, %p159
      %s162 = sadd.s32 %s161, 1
      %p165 = scmp.eq.s32.totalorder %s22, 1
      %p166 = scmp.ne.s32.totalorder %s161, %s163
      %p167 = scmp.eq.s32.totalorder %s22, 0
      %p168 = por %p166, %p167
      %p169 = scmp.ne.s32.totalorder %s161, %s163
      %p170 = scmp.eq.s32.totalorder %s27, 1
      %p171 = por %p169, %p170
      %p172 = scmp.ne.s32.totalorder %s163, %s164
      %p173 = scmp.eq.s32.totalorder %s27, 0
      %p174 = por %p172, %p173
      %p175 = scmp.ne.s32.totalorder %s163, %s164
      %p176 = scmp.eq.s32.totalorder %s28, 1
      %p177 = por %p175, %p176
      %p179 = scmp.ne.s32.totalorder %s164, %s178
      %p180 = scmp.eq.s32.totalorder %s28, 0
      %p181 = por %p179, %p180
      %s182 = ssub.s32 %s22, %s29
      %p183 = scmp.eq.s32.totalorder %s182, 0
      %s185 = sadd.s32 %s184, 1
      %s186 = scalar_select %p183, %s184, %s185
      %p189 = pneg %p183
      %p190 = scmp.eq.s32.totalorder %s22, 1
      %p191 = por %p189, %p190
      %p192 = scmp.ne.s32.totalorder %s184, %s187
      %p193 = scmp.eq.s32.totalorder %s22, 0
      %p194 = por %p192, %p193
      %p195 = scmp.ne.s32.totalorder %s184, %s187
      %p196 = scmp.eq.s32.totalorder %s27, 1
      %p197 = por %p195, %p196
      %p198 = scmp.ne.s32.totalorder %s187, %s188
      %p199 = scmp.eq.s32.totalorder %s27, 0
      %p200 = por %p198, %p199
      %p201 = scmp.ne.s32.totalorder %s187, %s188
      %p202 = scmp.eq.s32.totalorder %s28, 1
      %p203 = por %p201, %p202
      %p205 = scmp.ne.s32.totalorder %s188, %s204
      %p206 = scmp.eq.s32.totalorder %s28, 0
      %p207 = por %p205, %p206
      %p208 = scmp.le.s32.totalorder 1, %s22
      %p209 = scmp.lt.s32.totalorder %s22, 3
      %p210 = pnand %p208, %p209
      %p211 = pneg %p210
      // Predicated region
      $region9: #{tpu_custom_call.1} parent=5 // pred_check
        _
      $region10: #{tpu_custom_call.1} parent=5 // pred_check_branch
        %213 = sbr.rel (%p210) target = $region12
      $region11: #{tpu_custom_call.1} parent=5 // pred_region
        %s214 = ssub.s32 %s22, 1
        // Predicated region
        $region13: #{tpu_custom_call.1} parent=11 // pred_check
          %p215 = pneg %p69
        $region14: #{tpu_custom_call.1} parent=11 // pred_check_branch
          %217 = sbr.rel (%p215) target = $region16
        $region15: #{tpu_custom_call.1} parent=11 // pred_region
          %s219 = ssub.s32 16384, 16384
          %220 = vsyncadd [#allocation6], %s219
          %s221 = sshll.u32 [#allocation5], 4
          %s222 = int_to_ptr.vmem [resolvable:$true] %s221
          %227 = dma.hbm_to_vmem [thread:$0]  %s1, 16384, %s222, [#allocation6], 256, 256, 16
        $region16: #{tpu_custom_call.1} parent=11 // pred_fallthru
          _
        // Predicated region
        $region17: #{tpu_custom_call.1} parent=11 // pred_check
          %p228 = pneg %p90
        $region18: #{tpu_custom_call.1} parent=11 // pred_check_branch
          %230 = sbr.rel (%p228) target = $region20
        $region19: #{tpu_custom_call.1} parent=11 // pred_region
          %s232 = ssub.s32 8192, 8192
          %233 = vsyncadd [#allocation6], %s232
          %s234 = sshll.u32 [#allocation7], 4
          %s235 = int_to_ptr.vmem [resolvable:$true] %s234
          %240 = dma.hbm_to_vmem [thread:$0]  %s2, 8192, %s235, [#allocation6], 128, 128, 8
        $region20: #{tpu_custom_call.1} parent=11 // pred_fallthru
          _
        // Predicated region
        $region21: #{tpu_custom_call.1} parent=11 // pred_check
          %p241 = pneg %p111
        $region22: #{tpu_custom_call.1} parent=11 // pred_check_branch
          %243 = sbr.rel (%p241) target = $region24
        $region23: #{tpu_custom_call.1} parent=11 // pred_region
          %s245 = ssub.s32 8192, 8192
          %246 = vsyncadd [#allocation9], %s245
          %s247 = sshll.u32 [#allocation8], 4
          %s248 = int_to_ptr.vmem [resolvable:$true] %s247
          %253 = dma.hbm_to_vmem [thread:$0]  %s3, 8192, %s248, [#allocation9], 128, 128, 8
        $region24: #{tpu_custom_call.1} parent=11 // pred_fallthru
          _
        // Predicated region
        $region25: #{tpu_custom_call.1} parent=11 // pred_check
          %p254 = pneg %p132
        $region26: #{tpu_custom_call.1} parent=11 // pred_check_branch
          %256 = sbr.rel (%p254) target = $region28
        $region27: #{tpu_custom_call.1} parent=11 // pred_region
          %s258 = ssub.s32 16384, 16384
          %259 = vsyncadd [#allocation9], %s258
          %s260 = sshll.u32 [#allocation10], 4
          %s261 = int_to_ptr.vmem [resolvable:$true] %s260
          %266 = dma.hbm_to_vmem [thread:$0]  %s4, 16384, %s261, [#allocation9], 256, 256, 16
        $region28: #{tpu_custom_call.1} parent=11 // pred_fallthru
          _
        // Predicated region
        $region29: #{tpu_custom_call.1} parent=11 // pred_check
          %p267 = pneg %p153
        $region30: #{tpu_custom_call.1} parent=11 // pred_check_branch
          %269 = sbr.rel (%p267) target = $region32
        $region31: #{tpu_custom_call.1} parent=11 // pred_region
          _
        $region32: #{tpu_custom_call.1} parent=11 // pred_fallthru
          _
        // Predicated region
        $region33: #{tpu_custom_call.1} parent=11 // pred_check
          %p270 = pneg %p174
        $region34: #{tpu_custom_call.1} parent=11 // pred_check_branch
          %272 = sbr.rel (%p270) target = $region36
        $region35: #{tpu_custom_call.1} parent=11 // pred_region
          %s274 = ssub.s32 256, 256
          %275 = vsyncadd [#allocation12], %s274
          %s276 = sshll.u32 [#allocation11], 4
          %s277 = int_to_ptr.vmem [resolvable:$true] %s276
          %282 = dma.hbm_to_vmem [thread:$0]  %s6, 256, %s277, [#allocation12], 128, 128, 8
        $region36: #{tpu_custom_call.1} parent=11 // pred_fallthru
          _
      $region12: #{tpu_custom_call.1} parent=5 // pred_fallthru
        _
      %p283 = scmp.lt.s32.totalorder %s22, 2
      // Predicated region
      $region37: #{tpu_custom_call.1} parent=5 // pred_check
        %p284 = pneg %p283
      $region38: #{tpu_custom_call.1} parent=5 // pred_check_branch
        %286 = sbr.rel (%p284) target = $region40
      $region39: #{tpu_custom_call.1} parent=5 // pred_region
        // Predicated region
        $region41: #{tpu_custom_call.1} parent=39 // pred_check
          %p287 = pneg %p42
        $region42: #{tpu_custom_call.1} parent=39 // pred_check_branch
          %289 = sbr.rel (%p287) target = $region44
        $region43: #{tpu_custom_call.1} parent=39 // pred_region
          %s290 = sand.u32 %s32, 1
          %s291 = scalar_lea.sflag [#allocation3], %s290
          %s292 = sand.u32 %s32, 1
          %s293 = smul.addr %s292, 32
          %s294 = scalar_lea.vmem [#allocation2], %s293
          %s296 = ssub.s32 512, 512
          %297 = vsyncadd %s291, %s296
          %s298 = smul.addr %s22, 8
          %s299 = smul.addr %s298, 64
          %s300 = scalar_lea.hbm %s0, %s299
          %s301 = sshll.u32 %s294, 4
          %s302 = int_to_ptr.vmem [resolvable:$true] %s301
          %307 = dma.hbm_to_vmem [thread:$0]  %s300, 512, %s302, %s291, 256, 256, 16
        $region44: #{tpu_custom_call.1} parent=39 // pred_fallthru
          _
      $region40: #{tpu_custom_call.1} parent=5 // pred_fallthru
        _
      %p308 = scmp.le.s32.totalorder 1, %s22
      %p309 = scmp.lt.s32.totalorder %s22, 3
      %p310 = pnand %p308, %p309
      %p311 = pneg %p310
      // Predicated region
      $region45: #{tpu_custom_call.1} parent=5 // pred_check
        _
      $region46: #{tpu_custom_call.1} parent=5 // pred_check_branch
        %313 = sbr.rel (%p310) target = $region48
      $region47: #{tpu_custom_call.1} parent=5 // pred_region
        %s314 = ssub.s32 %s22, 1
        %s315 = sand.u32 %s35, 1
        %s316 = scalar_lea.sflag [#allocation3], %s315
        %s317 = sand.u32 %s35, 1
        %s318 = smul.addr %s317, 32
        %s319 = scalar_lea.vmem [#allocation2], %s318
        // Predicated region
        $region49: #{tpu_custom_call.1} parent=47 // pred_check
          %p320 = pneg %p48
        $region50: #{tpu_custom_call.1} parent=47 // pred_check_branch
          %322 = sbr.rel (%p320) target = $region52
        $region51: #{tpu_custom_call.1} parent=47 // pred_region
          %323 = dma.done %s316, 512
        $region52: #{tpu_custom_call.1} parent=47 // pred_fallthru
          _
        // Predicated region
        $region53: #{tpu_custom_call.1} parent=47 // pred_check
          %p324 = pneg %p69
        $region54: #{tpu_custom_call.1} parent=47 // pred_check_branch
          %326 = sbr.rel (%p324) target = $region56
        $region55: #{tpu_custom_call.1} parent=47 // pred_region
          %327 = dma.done [#allocation6], 16384
        $region56: #{tpu_custom_call.1} parent=47 // pred_fallthru
          _
        // Predicated region
        $region57: #{tpu_custom_call.1} parent=47 // pred_check
          %p328 = pneg %p90
        $region58: #{tpu_custom_call.1} parent=47 // pred_check_branch
          %330 = sbr.rel (%p328) target = $region60
        $region59: #{tpu_custom_call.1} parent=47 // pred_region
          %331 = dma.done [#allocation6], 8192
        $region60: #{tpu_custom_call.1} parent=47 // pred_fallthru
          _
        // Predicated region
        $region61: #{tpu_custom_call.1} parent=47 // pred_check
          %p332 = pneg %p111
        $region62: #{tpu_custom_call.1} parent=47 // pred_check_branch
          %334 = sbr.rel (%p332) target = $region64
        $region63: #{tpu_custom_call.1} parent=47 // pred_region
          %335 = dma.done [#allocation9], 8192
        $region64: #{tpu_custom_call.1} parent=47 // pred_fallthru
          _
        // Predicated region
        $region65: #{tpu_custom_call.1} parent=47 // pred_check
          %p336 = pneg %p132
        $region66: #{tpu_custom_call.1} parent=47 // pred_check_branch
          %338 = sbr.rel (%p336) target = $region68
        $region67: #{tpu_custom_call.1} parent=47 // pred_region
          %339 = dma.done [#allocation9], 16384
        $region68: #{tpu_custom_call.1} parent=47 // pred_fallthru
          _
        // Predicated region
        $region69: #{tpu_custom_call.1} parent=47 // pred_check
          %p340 = pneg %p174
        $region70: #{tpu_custom_call.1} parent=47 // pred_check_branch
          %342 = sbr.rel (%p340) target = $region72
        $region71: #{tpu_custom_call.1} parent=47 // pred_region
          %343 = dma.done [#allocation12], 256
        $region72: #{tpu_custom_call.1} parent=47 // pred_fallthru
          _
        %s344 = sand.u32 %s35, 1
        %s345 = scalar_lea.sflag [#allocation3], %s344
        %s346 = sand.u32 %s35, 1
        %s347 = smul.addr %s346, 32
        %s348 = scalar_lea.vmem [#allocation2], %s347
        %p349 = pneg %p48
        %p350 = pneg %p45
        %p351 = pneg %p69
        %p352 = pneg %p66
        %p353 = pneg %p90
        %p354 = pneg %p87
        %p355 = pneg %p111
        %p356 = pneg %p108
        %p357 = pneg %p132
        %p358 = pneg %p129
        %p359 = pneg %p153
        %p360 = pneg %p150
        %p361 = pneg %p174
        %p362 = pneg %p171
        %p363 = pneg %p200
        %p364 = pneg %p197
        %s365 = sand.u32 %s187, 1
        %s366 = scalar_lea.sflag [#allocation4], %s365
        %s367 = sand.u32 %s187, 1
        %s368 = smul.addr %s367, 64
        %s369 = scalar_lea.vmem [#allocation13], %s368
        %v371 = vld [vmem:[%s319] sm:$0xff]
        %v372 = vld [vmem:[%s319 + $0x8] sm:$0xff]
        %v373 = vld [vmem:[%s319 + $0x10] sm:$0xff]
        %v374 = vld [vmem:[%s319 + $0x18] sm:$0xff]
        %v375 = vld [vmem:[#allocation5] sm:$0xff]
        %v376 = vld [vmem:[#allocation5 + $0x8] sm:$0xff]
        %v377 = vld [vmem:[#allocation5 + $0x10] sm:$0xff]
        %v378 = vld [vmem:[#allocation5 + $0x18] sm:$0xff]
        %v379 = vld [vmem:[#allocation5 + $0x20] sm:$0xff]
        %v380 = vld [vmem:[#allocation5 + $0x28] sm:$0xff]
        %v381 = vld [vmem:[#allocation5 + $0x30] sm:$0xff]
        %v382 = vld [vmem:[#allocation5 + $0x38] sm:$0xff]
        %v383 = vld [vmem:[#allocation5 + $0x40] sm:$0xff]
        %v384 = vld [vmem:[#allocation5 + $0x48] sm:$0xff]
        %v385 = vld [vmem:[#allocation5 + $0x50] sm:$0xff]
        %v386 = vld [vmem:[#allocation5 + $0x58] sm:$0xff]
        %v387 = vld [vmem:[#allocation5 + $0x60] sm:$0xff]
        %v388 = vld [vmem:[#allocation5 + $0x68] sm:$0xff]
        %v389 = vld [vmem:[#allocation5 + $0x70] sm:$0xff]
        %v390 = vld [vmem:[#allocation5 + $0x78] sm:$0xff]
        %v391 = vld [vmem:[#allocation5 + $0x80] sm:$0xff]
        %v392 = vld [vmem:[#allocation5 + $0x88] sm:$0xff]
        %v393 = vld [vmem:[#allocation5 + $0x90] sm:$0xff]
        %v394 = vld [vmem:[#allocation5 + $0x98] sm:$0xff]
        %v395 = vld [vmem:[#allocation5 + $0xa0] sm:$0xff]
        %v396 = vld [vmem:[#allocation5 + $0xa8] sm:$0xff]
        %v397 = vld [vmem:[#allocation5 + $0xb0] sm:$0xff]
        %v398 = vld [vmem:[#allocation5 + $0xb8] sm:$0xff]
        %v399 = vld [vmem:[#allocation5 + $0xc0] sm:$0xff]
        %v400 = vld [vmem:[#allocation5 + $0xc8] sm:$0xff]
        %v401 = vld [vmem:[#allocation5 + $0xd0] sm:$0xff]
        %v402 = vld [vmem:[#allocation5 + $0xd8] sm:$0xff]
        %v403 = vld [vmem:[#allocation5 + $0xe0] sm:$0xff]
        %v404 = vld [vmem:[#allocation5 + $0xe8] sm:$0xff]
        %v405 = vld [vmem:[#allocation5 + $0xf0] sm:$0xff]
        %v406 = vld [vmem:[#allocation5 + $0xf8] sm:$0xff]
        %v407 = vld [vmem:[#allocation5 + $0x100] sm:$0xff]
        %v408 = vld [vmem:[#allocation5 + $0x108] sm:$0xff]
        %v409 = vld [vmem:[#allocation5 + $0x110] sm:$0xff]
        %v410 = vld [vmem:[#allocation5 + $0x118] sm:$0xff]
        %v411 = vld [vmem:[#allocation5 + $0x120] sm:$0xff]
        %v412 = vld [vmem:[#allocation5 + $0x128] sm:$0xff]
        %v413 = vld [vmem:[#allocation5 + $0x130] sm:$0xff]
        %v414 = vld [vmem:[#allocation5 + $0x138] sm:$0xff]
        %v415 = vld [vmem:[#allocation5 + $0x140] sm:$0xff]
        %v416 = vld [vmem:[#allocation5 + $0x148] sm:$0xff]
        %v417 = vld [vmem:[#allocation5 + $0x150] sm:$0xff]
        %v418 = vld [vmem:[#allocation5 + $0x158] sm:$0xff]
        %v419 = vld [vmem:[#allocation5 + $0x160] sm:$0xff]
        %v420 = vld [vmem:[#allocation5 + $0x168] sm:$0xff]
        %v421 = vld [vmem:[#allocation5 + $0x170] sm:$0xff]
        %v422 = vld [vmem:[#allocation5 + $0x178] sm:$0xff]
        %v423 = vld [vmem:[#allocation5 + $0x180] sm:$0xff]
        %v424 = vld [vmem:[#allocation5 + $0x188] sm:$0xff]
        %v425 = vld [vmem:[#allocation5 + $0x190] sm:$0xff]
        %v426 = vld [vmem:[#allocation5 + $0x198] sm:$0xff]
        %v427 = vld [vmem:[#allocation5 + $0x1a0] sm:$0xff]
        %v428 = vld [vmem:[#allocation5 + $0x1a8] sm:$0xff]
        %v429 = vld [vmem:[#allocation5 + $0x1b0] sm:$0xff]
        %v430 = vld [vmem:[#allocation5 + $0x1b8] sm:$0xff]
        %v431 = vld [vmem:[#allocation5 + $0x1c0] sm:$0xff]
        %v432 = vld [vmem:[#allocation5 + $0x1c8] sm:$0xff]
        %v433 = vld [vmem:[#allocation5 + $0x1d0] sm:$0xff]
        %v434 = vld [vmem:[#allocation5 + $0x1d8] sm:$0xff]
        %v435 = vld [vmem:[#allocation5 + $0x1e0] sm:$0xff]
        %v436 = vld [vmem:[#allocation5 + $0x1e8] sm:$0xff]
        %v437 = vld [vmem:[#allocation5 + $0x1f0] sm:$0xff]
        %v438 = vld [vmem:[#allocation5 + $0x1f8] sm:$0xff]
        %v439 = vld [vmem:[#allocation5 + $0x200] sm:$0xff]
        %v440 = vld [vmem:[#allocation5 + $0x208] sm:$0xff]
        %v441 = vld [vmem:[#allocation5 + $0x210] sm:$0xff]
        %v442 = vld [vmem:[#allocation5 + $0x218] sm:$0xff]
        %v443 = vld [vmem:[#allocation5 + $0x220] sm:$0xff]
        %v444 = vld [vmem:[#allocation5 + $0x228] sm:$0xff]
        %v445 = vld [vmem:[#allocation5 + $0x230] sm:$0xff]
        %v446 = vld [vmem:[#allocation5 + $0x238] sm:$0xff]
        %v447 = vld [vmem:[#allocation5 + $0x240] sm:$0xff]
        %v448 = vld [vmem:[#allocation5 + $0x248] sm:$0xff]
        %v449 = vld [vmem:[#allocation5 + $0x250] sm:$0xff]
        %v450 = vld [vmem:[#allocation5 + $0x258] sm:$0xff]
        %v451 = vld [vmem:[#allocation5 + $0x260] sm:$0xff]
        %v452 = vld [vmem:[#allocation5 + $0x268] sm:$0xff]
        %v453 = vld [vmem:[#allocation5 + $0x270] sm:$0xff]
        %v454 = vld [vmem:[#allocation5 + $0x278] sm:$0xff]
        %v455 = vld [vmem:[#allocation5 + $0x280] sm:$0xff]
        %v456 = vld [vmem:[#allocation5 + $0x288] sm:$0xff]
        %v457 = vld [vmem:[#allocation5 + $0x290] sm:$0xff]
        %v458 = vld [vmem:[#allocation5 + $0x298] sm:$0xff]
        %v459 = vld [vmem:[#allocation5 + $0x2a0] sm:$0xff]
        %v460 = vld [vmem:[#allocation5 + $0x2a8] sm:$0xff]
        %v461 = vld [vmem:[#allocation5 + $0x2b0] sm:$0xff]
        %v462 = vld [vmem:[#allocation5 + $0x2b8] sm:$0xff]
        %v463 = vld [vmem:[#allocation5 + $0x2c0] sm:$0xff]
        %v464 = vld [vmem:[#allocation5 + $0x2c8] sm:$0xff]
        %v465 = vld [vmem:[#allocation5 + $0x2d0] sm:$0xff]
        %v466 = vld [vmem:[#allocation5 + $0x2d8] sm:$0xff]
        %v467 = vld [vmem:[#allocation5 + $0x2e0] sm:$0xff]
        %v468 = vld [vmem:[#allocation5 + $0x2e8] sm:$0xff]
        %v469 = vld [vmem:[#allocation5 + $0x2f0] sm:$0xff]
        %v470 = vld [vmem:[#allocation5 + $0x2f8] sm:$0xff]
        %v471 = vld [vmem:[#allocation5 + $0x300] sm:$0xff]
        %v472 = vld [vmem:[#allocation5 + $0x308] sm:$0xff]
        %v473 = vld [vmem:[#allocation5 + $0x310] sm:$0xff]
        %v474 = vld [vmem:[#allocation5 + $0x318] sm:$0xff]
        %v475 = vld [vmem:[#allocation5 + $0x320] sm:$0xff]
        %v476 = vld [vmem:[#allocation5 + $0x328] sm:$0xff]
        %v477 = vld [vmem:[#allocation5 + $0x330] sm:$0xff]
        %v478 = vld [vmem:[#allocation5 + $0x338] sm:$0xff]
        %v479 = vld [vmem:[#allocation5 + $0x340] sm:$0xff]
        %v480 = vld [vmem:[#allocation5 + $0x348] sm:$0xff]
        %v481 = vld [vmem:[#allocation5 + $0x350] sm:$0xff]
        %v482 = vld [vmem:[#allocation5 + $0x358] sm:$0xff]
        %v483 = vld [vmem:[#allocation5 + $0x360] sm:$0xff]
        %v484 = vld [vmem:[#allocation5 + $0x368] sm:$0xff]
        %v485 = vld [vmem:[#allocation5 + $0x370] sm:$0xff]
        %v486 = vld [vmem:[#allocation5 + $0x378] sm:$0xff]
        %v487 = vld [vmem:[#allocation5 + $0x380] sm:$0xff]
        %v488 = vld [vmem:[#allocation5 + $0x388] sm:$0xff]
        %v489 = vld [vmem:[#allocation5 + $0x390] sm:$0xff]
        %v490 = vld [vmem:[#allocation5 + $0x398] sm:$0xff]
        %v491 = vld [vmem:[#allocation5 + $0x3a0] sm:$0xff]
        %v492 = vld [vmem:[#allocation5 + $0x3a8] sm:$0xff]
        %v493 = vld [vmem:[#allocation5 + $0x3b0] sm:$0xff]
        %v494 = vld [vmem:[#allocation5 + $0x3b8] sm:$0xff]
        %v495 = vld [vmem:[#allocation5 + $0x3c0] sm:$0xff]
        %v496 = vld [vmem:[#allocation5 + $0x3c8] sm:$0xff]
        %v497 = vld [vmem:[#allocation5 + $0x3d0] sm:$0xff]
        %v498 = vld [vmem:[#allocation5 + $0x3d8] sm:$0xff]
        %v499 = vld [vmem:[#allocation5 + $0x3e0] sm:$0xff]
        %v500 = vld [vmem:[#allocation5 + $0x3e8] sm:$0xff]
        %v501 = vld [vmem:[#allocation5 + $0x3f0] sm:$0xff]
        %v502 = vld [vmem:[#allocation5 + $0x3f8] sm:$0xff]
        %v507 = vunpack.c.l.b16 %v371
        %v508 = vunpack.c.h.b16 %v371
        %v509 = vunpack.c.l.b16 %v372
        %v510 = vunpack.c.h.b16 %v372
        %v511 = vunpack.c.l.b16 %v373
        %v512 = vunpack.c.h.b16 %v373
        %v513 = vunpack.c.l.b16 %v374
        %v514 = vunpack.c.h.b16 %v374
        %v515 = vpack.c.b16 %v511, %v507
        %v516 = vpack.c.b16 %v512, %v508
        %v517 = vpack.c.b16 %v513, %v509
        %v518 = vpack.c.b16 %v514, %v510
        %v651 = vunpack.c.l.b16 %v375
        %v652 = vunpack.c.h.b16 %v375
        %v653 = vunpack.c.l.b16 %v376
        %v654 = vunpack.c.h.b16 %v376
        %v655 = vunpack.c.l.b16 %v377
        %v656 = vunpack.c.h.b16 %v377
        %v657 = vunpack.c.l.b16 %v378
        %v658 = vunpack.c.h.b16 %v378
        %v659 = vunpack.c.l.b16 %v379
        %v660 = vunpack.c.h.b16 %v379
        %v661 = vunpack.c.l.b16 %v380
        %v662 = vunpack.c.h.b16 %v380
        %v663 = vunpack.c.l.b16 %v381
        %v664 = vunpack.c.h.b16 %v381
        %v665 = vunpack.c.l.b16 %v382
        %v666 = vunpack.c.h.b16 %v382
        %v667 = vunpack.c.l.b16 %v383
        %v668 = vunpack.c.h.b16 %v383
        %v669 = vunpack.c.l.b16 %v384
        %v670 = vunpack.c.h.b16 %v384
        %v671 = vunpack.c.l.b16 %v385
        %v672 = vunpack.c.h.b16 %v385
        %v673 = vunpack.c.l.b16 %v386
        %v674 = vunpack.c.h.b16 %v386
        %v675 = vunpack.c.l.b16 %v387
        %v676 = vunpack.c.h.b16 %v387
        %v677 = vunpack.c.l.b16 %v388
        %v678 = vunpack.c.h.b16 %v388
        %v679 = vunpack.c.l.b16 %v389
        %v680 = vunpack.c.h.b16 %v389
        %v681 = vunpack.c.l.b16 %v390
        %v682 = vunpack.c.h.b16 %v390
        %v683 = vunpack.c.l.b16 %v391
        %v684 = vunpack.c.h.b16 %v391
        %v685 = vunpack.c.l.b16 %v392
        %v686 = vunpack.c.h.b16 %v392
        %v687 = vunpack.c.l.b16 %v393
        %v688 = vunpack.c.h.b16 %v393
        %v689 = vunpack.c.l.b16 %v394
        %v690 = vunpack.c.h.b16 %v394
        %v691 = vunpack.c.l.b16 %v395
        %v692 = vunpack.c.h.b16 %v395
        %v693 = vunpack.c.l.b16 %v396
        %v694 = vunpack.c.h.b16 %v396
        %v695 = vunpack.c.l.b16 %v397
        %v696 = vunpack.c.h.b16 %v397
        %v697 = vunpack.c.l.b16 %v398
        %v698 = vunpack.c.h.b16 %v398
        %v699 = vunpack.c.l.b16 %v399
        %v700 = vunpack.c.h.b16 %v399
        %v701 = vunpack.c.l.b16 %v400
        %v702 = vunpack.c.h.b16 %v400
        %v703 = vunpack.c.l.b16 %v401
        %v704 = vunpack.c.h.b16 %v401
        %v705 = vunpack.c.l.b16 %v402
        %v706 = vunpack.c.h.b16 %v402
        %v707 = vunpack.c.l.b16 %v403
        %v708 = vunpack.c.h.b16 %v403
        %v709 = vunpack.c.l.b16 %v404
        %v710 = vunpack.c.h.b16 %v404
        %v711 = vunpack.c.l.b16 %v405
        %v712 = vunpack.c.h.b16 %v405
        %v713 = vunpack.c.l.b16 %v406
        %v714 = vunpack.c.h.b16 %v406
        %v715 = vunpack.c.l.b16 %v407
        %v716 = vunpack.c.h.b16 %v407
        %v717 = vunpack.c.l.b16 %v408
        %v718 = vunpack.c.h.b16 %v408
        %v719 = vunpack.c.l.b16 %v409
        %v720 = vunpack.c.h.b16 %v409
        %v721 = vunpack.c.l.b16 %v410
        %v722 = vunpack.c.h.b16 %v410
        %v723 = vunpack.c.l.b16 %v411
        %v724 = vunpack.c.h.b16 %v411
        %v725 = vunpack.c.l.b16 %v412
        %v726 = vunpack.c.h.b16 %v412
        %v727 = vunpack.c.l.b16 %v413
        %v728 = vunpack.c.h.b16 %v413
        %v729 = vunpack.c.l.b16 %v414
        %v730 = vunpack.c.h.b16 %v414
        %v731 = vunpack.c.l.b16 %v415
        %v732 = vunpack.c.h.b16 %v415
        %v733 = vunpack.c.l.b16 %v416
        %v734 = vunpack.c.h.b16 %v416
        %v735 = vunpack.c.l.b16 %v417
        %v736 = vunpack.c.h.b16 %v417
        %v737 = vunpack.c.l.b16 %v418
        %v738 = vunpack.c.h.b16 %v418
        %v739 = vunpack.c.l.b16 %v419
        %v740 = vunpack.c.h.b16 %v419
        %v741 = vunpack.c.l.b16 %v420
        %v742 = vunpack.c.h.b16 %v420
        %v743 = vunpack.c.l.b16 %v421
        %v744 = vunpack.c.h.b16 %v421
        %v745 = vunpack.c.l.b16 %v422
        %v746 = vunpack.c.h.b16 %v422
        %v747 = vunpack.c.l.b16 %v423
        %v748 = vunpack.c.h.b16 %v423
        %v749 = vunpack.c.l.b16 %v424
        %v750 = vunpack.c.h.b16 %v424
        %v751 = vunpack.c.l.b16 %v425
        %v752 = vunpack.c.h.b16 %v425
        %v753 = vunpack.c.l.b16 %v426
        %v754 = vunpack.c.h.b16 %v426
        %v755 = vunpack.c.l.b16 %v427
        %v756 = vunpack.c.h.b16 %v427
        %v757 = vunpack.c.l.b16 %v428
        %v758 = vunpack.c.h.b16 %v428
        %v759 = vunpack.c.l.b16 %v429
        %v760 = vunpack.c.h.b16 %v429
        %v761 = vunpack.c.l.b16 %v430
        %v762 = vunpack.c.h.b16 %v430
        %v763 = vunpack.c.l.b16 %v431
        %v764 = vunpack.c.h.b16 %v431
        %v765 = vunpack.c.l.b16 %v432
        %v766 = vunpack.c.h.b16 %v432
        %v767 = vunpack.c.l.b16 %v433
        %v768 = vunpack.c.h.b16 %v433
        %v769 = vunpack.c.l.b16 %v434
        %v770 = vunpack.c.h.b16 %v434
        %v771 = vunpack.c.l.b16 %v435
        %v772 = vunpack.c.h.b16 %v435
        %v773 = vunpack.c.l.b16 %v436
        %v774 = vunpack.c.h.b16 %v436
        %v775 = vunpack.c.l.b16 %v437
        %v776 = vunpack.c.h.b16 %v437
        %v777 = vunpack.c.l.b16 %v438
        %v778 = vunpack.c.h.b16 %v438
        %v779 = vunpack.c.l.b16 %v439
        %v780 = vunpack.c.h.b16 %v439
        %v781 = vunpack.c.l.b16 %v440
        %v782 = vunpack.c.h.b16 %v440
        %v783 = vunpack.c.l.b16 %v441
        %v784 = vunpack.c.h.b16 %v441
        %v785 = vunpack.c.l.b16 %v442
        %v786 = vunpack.c.h.b16 %v442
        %v787 = vunpack.c.l.b16 %v443
        %v788 = vunpack.c.h.b16 %v443
        %v789 = vunpack.c.l.b16 %v444
        %v790 = vunpack.c.h.b16 %v444
        %v791 = vunpack.c.l.b16 %v445
        %v792 = vunpack.c.h.b16 %v445
        %v793 = vunpack.c.l.b16 %v446
        %v794 = vunpack.c.h.b16 %v446
        %v795 = vunpack.c.l.b16 %v447
        %v796 = vunpack.c.h.b16 %v447
        %v797 = vunpack.c.l.b16 %v448
        %v798 = vunpack.c.h.b16 %v448
        %v799 = vunpack.c.l.b16 %v449
        %v800 = vunpack.c.h.b16 %v449
        %v801 = vunpack.c.l.b16 %v450
        %v802 = vunpack.c.h.b16 %v450
        %v803 = vunpack.c.l.b16 %v451
        %v804 = vunpack.c.h.b16 %v451
        %v805 = vunpack.c.l.b16 %v452
        %v806 = vunpack.c.h.b16 %v452
        %v807 = vunpack.c.l.b16 %v453
        %v808 = vunpack.c.h.b16 %v453
        %v809 = vunpack.c.l.b16 %v454
        %v810 = vunpack.c.h.b16 %v454
        %v811 = vunpack.c.l.b16 %v455
        %v812 = vunpack.c.h.b16 %v455
        %v813 = vunpack.c.l.b16 %v456
        %v814 = vunpack.c.h.b16 %v456
        %v815 = vunpack.c.l.b16 %v457
        %v816 = vunpack.c.h.b16 %v457
        %v817 = vunpack.c.l.b16 %v458
        %v818 = vunpack.c.h.b16 %v458
        %v819 = vunpack.c.l.b16 %v459
        %v820 = vunpack.c.h.b16 %v459
        %v821 = vunpack.c.l.b16 %v460
        %v822 = vunpack.c.h.b16 %v460
        %v823 = vunpack.c.l.b16 %v461
        %v824 = vunpack.c.h.b16 %v461
        %v825 = vunpack.c.l.b16 %v462
        %v826 = vunpack.c.h.b16 %v462
        %v827 = vunpack.c.l.b16 %v463
        %v828 = vunpack.c.h.b16 %v463
        %v829 = vunpack.c.l.b16 %v464
        %v830 = vunpack.c.h.b16 %v464
        %v831 = vunpack.c.l.b16 %v465
        %v832 = vunpack.c.h.b16 %v465
        %v833 = vunpack.c.l.b16 %v466
        %v834 = vunpack.c.h.b16 %v466
        %v835 = vunpack.c.l.b16 %v467
        %v836 = vunpack.c.h.b16 %v467
        %v837 = vunpack.c.l.b16 %v468
        %v838 = vunpack.c.h.b16 %v468
        %v839 = vunpack.c.l.b16 %v469
        %v840 = vunpack.c.h.b16 %v469
        %v841 = vunpack.c.l.b16 %v470
        %v842 = vunpack.c.h.b16 %v470
        %v843 = vunpack.c.l.b16 %v471
        %v844 = vunpack.c.h.b16 %v471
        %v845 = vunpack.c.l.b16 %v472
        %v846 = vunpack.c.h.b16 %v472
        %v847 = vunpack.c.l.b16 %v473
        %v848 = vunpack.c.h.b16 %v473
        %v849 = vunpack.c.l.b16 %v474
        %v850 = vunpack.c.h.b16 %v474
        %v851 = vunpack.c.l.b16 %v475
        %v852 = vunpack.c.h.b16 %v475
        %v853 = vunpack.c.l.b16 %v476
        %v854 = vunpack.c.h.b16 %v476
        %v855 = vunpack.c.l.b16 %v477
        %v856 = vunpack.c.h.b16 %v477
        %v857 = vunpack.c.l.b16 %v478
        %v858 = vunpack.c.h.b16 %v478
        %v859 = vunpack.c.l.b16 %v479
        %v860 = vunpack.c.h.b16 %v479
        %v861 = vunpack.c.l.b16 %v480
        %v862 = vunpack.c.h.b16 %v480
        %v863 = vunpack.c.l.b16 %v481
        %v864 = vunpack.c.h.b16 %v481
        %v865 = vunpack.c.l.b16 %v482
        %v866 = vunpack.c.h.b16 %v482
        %v867 = vunpack.c.l.b16 %v483
        %v868 = vunpack.c.h.b16 %v483
        %v869 = vunpack.c.l.b16 %v484
        %v870 = vunpack.c.h.b16 %v484
        %v871 = vunpack.c.l.b16 %v485
        %v872 = vunpack.c.h.b16 %v485
        %v873 = vunpack.c.l.b16 %v486
        %v874 = vunpack.c.h.b16 %v486
        %v875 = vunpack.c.l.b16 %v487
        %v876 = vunpack.c.h.b16 %v487
        %v877 = vunpack.c.l.b16 %v488
        %v878 = vunpack.c.h.b16 %v488
        %v879 = vunpack.c.l.b16 %v489
        %v880 = vunpack.c.h.b16 %v489
        %v881 = vunpack.c.l.b16 %v490
        %v882 = vunpack.c.h.b16 %v490
        %v883 = vunpack.c.l.b16 %v491
        %v884 = vunpack.c.h.b16 %v491
        %v885 = vunpack.c.l.b16 %v492
        %v886 = vunpack.c.h.b16 %v492
        %v887 = vunpack.c.l.b16 %v493
        %v888 = vunpack.c.h.b16 %v493
        %v889 = vunpack.c.l.b16 %v494
        %v890 = vunpack.c.h.b16 %v494
        %v891 = vunpack.c.l.b16 %v495
        %v892 = vunpack.c.h.b16 %v495
        %v893 = vunpack.c.l.b16 %v496
        %v894 = vunpack.c.h.b16 %v496
        %v895 = vunpack.c.l.b16 %v497
        %v896 = vunpack.c.h.b16 %v497
        %v897 = vunpack.c.l.b16 %v498
        %v898 = vunpack.c.h.b16 %v498
        %v899 = vunpack.c.l.b16 %v499
        %v900 = vunpack.c.h.b16 %v499
        %v901 = vunpack.c.l.b16 %v500
        %v902 = vunpack.c.h.b16 %v500
        %v903 = vunpack.c.l.b16 %v501
        %v904 = vunpack.c.h.b16 %v501
        %v905 = vunpack.c.l.b16 %v502
        %v906 = vunpack.c.h.b16 %v502
        %v907 = vpack.c.b16 %v655, %v651
        %v908 = vpack.c.b16 %v656, %v652
        %v909 = vpack.c.b16 %v657, %v653
        %v910 = vpack.c.b16 %v658, %v654
        %v911 = vpack.c.b16 %v663, %v659
        %v912 = vpack.c.b16 %v664, %v660
        %v913 = vpack.c.b16 %v665, %v661
        %v914 = vpack.c.b16 %v666, %v662
        %v915 = vpack.c.b16 %v671, %v667
        %v916 = vpack.c.b16 %v672, %v668
        %v917 = vpack.c.b16 %v673, %v669
        %v918 = vpack.c.b16 %v674, %v670
        %v919 = vpack.c.b16 %v679, %v675
        %v920 = vpack.c.b16 %v680, %v676
        %v921 = vpack.c.b16 %v681, %v677
        %v922 = vpack.c.b16 %v682, %v678
        %v923 = vpack.c.b16 %v687, %v683
        %v924 = vpack.c.b16 %v688, %v684
        %v925 = vpack.c.b16 %v689, %v685
        %v926 = vpack.c.b16 %v690, %v686
        %v927 = vpack.c.b16 %v695, %v691
        %v928 = vpack.c.b16 %v696, %v692
        %v929 = vpack.c.b16 %v697, %v693
        %v930 = vpack.c.b16 %v698, %v694
        %v931 = vpack.c.b16 %v703, %v699
        %v932 = vpack.c.b16 %v704, %v700
        %v933 = vpack.c.b16 %v705, %v701
        %v934 = vpack.c.b16 %v706, %v702
        %v935 = vpack.c.b16 %v711, %v707
        %v936 = vpack.c.b16 %v712, %v708
        %v937 = vpack.c.b16 %v713, %v709
        %v938 = vpack.c.b16 %v714, %v710
        %v939 = vpack.c.b16 %v719, %v715
        %v940 = vpack.c.b16 %v720, %v716
        %v941 = vpack.c.b16 %v721, %v717
        %v942 = vpack.c.b16 %v722, %v718
        %v943 = vpack.c.b16 %v727, %v723
        %v944 = vpack.c.b16 %v728, %v724
        %v945 = vpack.c.b16 %v729, %v725
        %v946 = vpack.c.b16 %v730, %v726
        %v947 = vpack.c.b16 %v735, %v731
        %v948 = vpack.c.b16 %v736, %v732
        %v949 = vpack.c.b16 %v737, %v733
        %v950 = vpack.c.b16 %v738, %v734
        %v951 = vpack.c.b16 %v743, %v739
        %v952 = vpack.c.b16 %v744, %v740
        %v953 = vpack.c.b16 %v745, %v741
        %v954 = vpack.c.b16 %v746, %v742
        %v955 = vpack.c.b16 %v751, %v747
        %v956 = vpack.c.b16 %v752, %v748
        %v957 = vpack.c.b16 %v753, %v749
        %v958 = vpack.c.b16 %v754, %v750
        %v959 = vpack.c.b16 %v759, %v755
        %v960 = vpack.c.b16 %v760, %v756
        %v961 = vpack.c.b16 %v761, %v757
        %v962 = vpack.c.b16 %v762, %v758
        %v963 = vpack.c.b16 %v767, %v763
        %v964 = vpack.c.b16 %v768, %v764
        %v965 = vpack.c.b16 %v769, %v765
        %v966 = vpack.c.b16 %v770, %v766
        %v967 = vpack.c.b16 %v775, %v771
        %v968 = vpack.c.b16 %v776, %v772
        %v969 = vpack.c.b16 %v777, %v773
        %v970 = vpack.c.b16 %v778, %v774
        %v971 = vpack.c.b16 %v783, %v779
        %v972 = vpack.c.b16 %v784, %v780
        %v973 = vpack.c.b16 %v785, %v781
        %v974 = vpack.c.b16 %v786, %v782
        %v975 = vpack.c.b16 %v791, %v787
        %v976 = vpack.c.b16 %v792, %v788
        %v977 = vpack.c.b16 %v793, %v789
        %v978 = vpack.c.b16 %v794, %v790
        %v979 = vpack.c.b16 %v799, %v795
        %v980 = vpack.c.b16 %v800, %v796
        %v981 = vpack.c.b16 %v801, %v797
        %v982 = vpack.c.b16 %v802, %v798
        %v983 = vpack.c.b16 %v807, %v803
        %v984 = vpack.c.b16 %v808, %v804
        %v985 = vpack.c.b16 %v809, %v805
        %v986 = vpack.c.b16 %v810, %v806
        %v987 = vpack.c.b16 %v815, %v811
        %v988 = vpack.c.b16 %v816, %v812
        %v989 = vpack.c.b16 %v817, %v813
        %v990 = vpack.c.b16 %v818, %v814
        %v991 = vpack.c.b16 %v823, %v819
        %v992 = vpack.c.b16 %v824, %v820
        %v993 = vpack.c.b16 %v825, %v821
        %v994 = vpack.c.b16 %v826, %v822
        %v995 = vpack.c.b16 %v831, %v827
        %v996 = vpack.c.b16 %v832, %v828
        %v997 = vpack.c.b16 %v833, %v829
        %v998 = vpack.c.b16 %v834, %v830
        %v999 = vpack.c.b16 %v839, %v835
        %v1000 = vpack.c.b16 %v840, %v836
        %v1001 = vpack.c.b16 %v841, %v837
        %v1002 = vpack.c.b16 %v842, %v838
        %v1003 = vpack.c.b16 %v847, %v843
        %v1004 = vpack.c.b16 %v848, %v844
        %v1005 = vpack.c.b16 %v849, %v845
        %v1006 = vpack.c.b16 %v850, %v846
        %v1007 = vpack.c.b16 %v855, %v851
        %v1008 = vpack.c.b16 %v856, %v852
        %v1009 = vpack.c.b16 %v857, %v853
        %v1010 = vpack.c.b16 %v858, %v854
        %v1011 = vpack.c.b16 %v863, %v859
        %v1012 = vpack.c.b16 %v864, %v860
        %v1013 = vpack.c.b16 %v865, %v861
        %v1014 = vpack.c.b16 %v866, %v862
        %v1015 = vpack.c.b16 %v871, %v867
        %v1016 = vpack.c.b16 %v872, %v868
        %v1017 = vpack.c.b16 %v873, %v869
        %v1018 = vpack.c.b16 %v874, %v870
        %v1019 = vpack.c.b16 %v879, %v875
        %v1020 = vpack.c.b16 %v880, %v876
        %v1021 = vpack.c.b16 %v881, %v877
        %v1022 = vpack.c.b16 %v882, %v878
        %v1023 = vpack.c.b16 %v887, %v883
        %v1024 = vpack.c.b16 %v888, %v884
        %v1025 = vpack.c.b16 %v889, %v885
        %v1026 = vpack.c.b16 %v890, %v886
        %v1027 = vpack.c.b16 %v895, %v891
        %v1028 = vpack.c.b16 %v896, %v892
        %v1029 = vpack.c.b16 %v897, %v893
        %v1030 = vpack.c.b16 %v898, %v894
        %v1031 = vpack.c.b16 %v903, %v899
        %v1032 = vpack.c.b16 %v904, %v900
        %v1033 = vpack.c.b16 %v905, %v901
        %v1034 = vpack.c.b16 %v906, %v902
        %1163 = vmatprep.subr.bf16.mxu0 %v908
        %1164 = vmatpush1.bf16.msra.mxu0 %v907
        %1165 = vmatprep.subr.bf16.mxu0 %v912
        %1166 = vmatpush1.bf16.msra.mxu0 %v911
        %1167 = vmatprep.subr.bf16.mxu0 %v916
        %1168 = vmatpush1.bf16.msra.mxu0 %v915
        %1169 = vmatprep.subr.bf16.mxu0 %v920
        %1170 = vmatpush1.bf16.msra.mxu0 %v919
        %1171 = vmatprep.subr.bf16.mxu0 %v924
        %1172 = vmatpush1.bf16.msra.mxu0 %v923
        %1173 = vmatprep.subr.bf16.mxu0 %v928
        %1174 = vmatpush1.bf16.msra.mxu0 %v927
        %1175 = vmatprep.subr.bf16.mxu0 %v932
        %1176 = vmatpush1.bf16.msra.mxu0 %v931
        %1177 = vmatprep.subr.bf16.mxu0 %v936
        %1178 = vmatpush1.bf16.msra.mxu0 %v935
        %1179 = vmatprep.subr.bf16.mxu0 %v940
        %1180 = vmatpush1.bf16.msra.mxu0 %v939
        %1181 = vmatprep.subr.bf16.mxu0 %v944
        %1182 = vmatpush1.bf16.msra.mxu0 %v943
        %1183 = vmatprep.subr.bf16.mxu0 %v948
        %1184 = vmatpush1.bf16.msra.mxu0 %v947
        %1185 = vmatprep.subr.bf16.mxu0 %v952
        %1186 = vmatpush1.bf16.msra.mxu0 %v951
        %1187 = vmatprep.subr.bf16.mxu0 %v956
        %1188 = vmatpush1.bf16.msra.mxu0 %v955
        %1189 = vmatprep.subr.bf16.mxu0 %v960
        %1190 = vmatpush1.bf16.msra.mxu0 %v959
        %1191 = vmatprep.subr.bf16.mxu0 %v964
        %1192 = vmatpush1.bf16.msra.mxu0 %v963
        %1193 = vmatprep.subr.bf16.mxu0 %v968
        %1194 = vmatpush1.bf16.msra.mxu0 %v967
        %1195 = vmatprep.mubr.bf16.mxu0 %v516
        %1196 = vmatmul.mubr.bf16.gmra.mrb[0].mxu0 %v515
        %v1197 = vpop.f32.mrb[0].mxu0
        %v1198 = vadd.f32 0.0, %v1197
        %v1199 = vpop.f32.mrb[0].mxu0
        %v1200 = vadd.f32 0.0, %v1199
        %v1201 = vpop.f32.mrb[0].mxu0
        %v1202 = vadd.f32 0.0, %v1201
        %v1203 = vpop.f32.mrb[0].mxu0
        %v1204 = vadd.f32 0.0, %v1203
        %1205 = vdwg.mxu0
        %1206 = vmatprep.subr.bf16.mxu0 %v972
        %1207 = vmatpush1.bf16.msra.mxu0 %v971
        %1208 = vmatprep.subr.bf16.mxu0 %v976
        %1209 = vmatpush1.bf16.msra.mxu0 %v975
        %1210 = vmatprep.subr.bf16.mxu0 %v980
        %1211 = vmatpush1.bf16.msra.mxu0 %v979
        %1212 = vmatprep.subr.bf16.mxu0 %v984
        %1213 = vmatpush1.bf16.msra.mxu0 %v983
        %1214 = vmatprep.subr.bf16.mxu0 %v988
        %1215 = vmatpush1.bf16.msra.mxu0 %v987
        %1216 = vmatprep.subr.bf16.mxu0 %v992
        %1217 = vmatpush1.bf16.msra.mxu0 %v991
        %1218 = vmatprep.subr.bf16.mxu0 %v996
        %1219 = vmatpush1.bf16.msra.mxu0 %v995
        %1220 = vmatprep.subr.bf16.mxu0 %v1000
        %1221 = vmatpush1.bf16.msra.mxu0 %v999
        %1222 = vmatprep.subr.bf16.mxu0 %v1004
        %1223 = vmatpush1.bf16.msra.mxu0 %v1003
        %1224 = vmatprep.subr.bf16.mxu0 %v1008
        %1225 = vmatpush1.bf16.msra.mxu0 %v1007
        %1226 = vmatprep.subr.bf16.mxu0 %v1012
        %1227 = vmatpush1.bf16.msra.mxu0 %v1011
        %1228 = vmatprep.subr.bf16.mxu0 %v1016
        %1229 = vmatpush1.bf16.msra.mxu0 %v1015
        %1230 = vmatprep.subr.bf16.mxu0 %v1020
        %1231 = vmatpush1.bf16.msra.mxu0 %v1019
        %1232 = vmatprep.subr.bf16.mxu0 %v1024
        %1233 = vmatpush1.bf16.msra.mxu0 %v1023
        %1234 = vmatprep.subr.bf16.mxu0 %v1028
        %1235 = vmatpush1.bf16.msra.mxu0 %v1027
        %1236 = vmatprep.subr.bf16.mxu0 %v1032
        %1237 = vmatpush1.bf16.msra.mxu0 %v1031
        %1238 = vmatprep.mubr.bf16.mxu0 %v518
        %1239 = vmatmul.mubr.bf16.gmra.mrb[0].mxu0 %v517
        %v1240 = vpop.f32.mrb[0].mxu0
        %v1241 = vadd.f32 %v1198, %v1240
        %v1242 = vpop.f32.mrb[0].mxu0
        %v1243 = vadd.f32 %v1200, %v1242
        %v1244 = vpop.f32.mrb[0].mxu0
        %v1245 = vadd.f32 %v1202, %v1244
        %v1246 = vpop.f32.mrb[0].mxu0
        %v1247 = vadd.f32 %v1204, %v1246
        %1248 = vdwg.mxu0
        %1249 = vmatprep.subr.bf16.mxu0 %v910
        %1250 = vmatpush1.bf16.msra.mxu0 %v909
        %1251 = vmatprep.subr.bf16.mxu0 %v914
        %1252 = vmatpush1.bf16.msra.mxu0 %v913
        %1253 = vmatprep.subr.bf16.mxu0 %v918
        %1254 = vmatpush1.bf16.msra.mxu0 %v917
        %1255 = vmatprep.subr.bf16.mxu0 %v922
        %1256 = vmatpush1.bf16.msra.mxu0 %v921
        %1257 = vmatprep.subr.bf16.mxu0 %v926
        %1258 = vmatpush1.bf16.msra.mxu0 %v925
        %1259 = vmatprep.subr.bf16.mxu0 %v930
        %1260 = vmatpush1.bf16.msra.mxu0 %v929
        %1261 = vmatprep.subr.bf16.mxu0 %v934
        %1262 = vmatpush1.bf16.msra.mxu0 %v933
        %1263 = vmatprep.subr.bf16.mxu0 %v938
        %1264 = vmatpush1.bf16.msra.mxu0 %v937
        %1265 = vmatprep.subr.bf16.mxu0 %v942
        %1266 = vmatpush1.bf16.msra.mxu0 %v941
        %1267 = vmatprep.subr.bf16.mxu0 %v946
        %1268 = vmatpush1.bf16.msra.mxu0 %v945
        %1269 = vmatprep.subr.bf16.mxu0 %v950
        %1270 = vmatpush1.bf16.msra.mxu0 %v949
        %1271 = vmatprep.subr.bf16.mxu0 %v954
        %1272 = vmatpush1.bf16.msra.mxu0 %v953
        %1273 = vmatprep.subr.bf16.mxu0 %v958
        %1274 = vmatpush1.bf16.msra.mxu0 %v957
        %1275 = vmatprep.subr.bf16.mxu0 %v962
        %1276 = vmatpush1.bf16.msra.mxu0 %v961
        %1277 = vmatprep.subr.bf16.mxu0 %v966
        %1278 = vmatpush1.bf16.msra.mxu0 %v965
        %1279 = vmatprep.subr.bf16.mxu0 %v970
        %1280 = vmatpush1.bf16.msra.mxu0 %v969
        %1281 = vmatprep.mubr.bf16.mxu0 %v516
        %1282 = vmatmul.mubr.bf16.gmra.mrb[0].mxu0 %v515
        %v1283 = vpop.f32.mrb[0].mxu0
        %v1284 = vadd.f32 0.0, %v1283
        %v1285 = vpop.f32.mrb[0].mxu0
        %v1286 = vadd.f32 0.0, %v1285
        %v1287 = vpop.f32.mrb[0].mxu0
        %v1288 = vadd.f32 0.0, %v1287
        %v1289 = vpop.f32.mrb[0].mxu0
        %v1290 = vadd.f32 0.0, %v1289
        %1291 = vdwg.mxu0
        %1292 = vmatprep.subr.bf16.mxu0 %v974
        %1293 = vmatpush1.bf16.msra.mxu0 %v973
        %1294 = vmatprep.subr.bf16.mxu0 %v978
        %1295 = vmatpush1.bf16.msra.mxu0 %v977
        %1296 = vmatprep.subr.bf16.mxu0 %v982
        %1297 = vmatpush1.bf16.msra.mxu0 %v981
        %1298 = vmatprep.subr.bf16.mxu0 %v986
        %1299 = vmatpush1.bf16.msra.mxu0 %v985
        %1300 = vmatprep.subr.bf16.mxu0 %v990
        %1301 = vmatpush1.bf16.msra.mxu0 %v989
        %1302 = vmatprep.subr.bf16.mxu0 %v994
        %1303 = vmatpush1.bf16.msra.mxu0 %v993
        %1304 = vmatprep.subr.bf16.mxu0 %v998
        %1305 = vmatpush1.bf16.msra.mxu0 %v997
        %1306 = vmatprep.subr.bf16.mxu0 %v1002
        %1307 = vmatpush1.bf16.msra.mxu0 %v1001
        %1308 = vmatprep.subr.bf16.mxu0 %v1006
        %1309 = vmatpush1.bf16.msra.mxu0 %v1005
        %1310 = vmatprep.subr.bf16.mxu0 %v1010
        %1311 = vmatpush1.bf16.msra.mxu0 %v1009
        %1312 = vmatprep.subr.bf16.mxu0 %v1014
        %1313 = vmatpush1.bf16.msra.mxu0 %v1013
        %1314 = vmatprep.subr.bf16.mxu0 %v1018
        %1315 = vmatpush1.bf16.msra.mxu0 %v1017
        %1316 = vmatprep.subr.bf16.mxu0 %v1022
        %1317 = vmatpush1.bf16.msra.mxu0 %v1021
        %1318 = vmatprep.subr.bf16.mxu0 %v1026
        %1319 = vmatpush1.bf16.msra.mxu0 %v1025
        %1320 = vmatprep.subr.bf16.mxu0 %v1030
        %1321 = vmatpush1.bf16.msra.mxu0 %v1029
        %1322 = vmatprep.subr.bf16.mxu0 %v1034
        %1323 = vmatpush1.bf16.msra.mxu0 %v1033
        %1324 = vmatprep.mubr.bf16.mxu0 %v518
        %1325 = vmatmul.mubr.bf16.gmra.mrb[0].mxu0 %v517
        %v1326 = vpop.f32.mrb[0].mxu0
        %v1327 = vadd.f32 %v1284, %v1326
        %v1328 = vpop.f32.mrb[0].mxu0
        %v1329 = vadd.f32 %v1286, %v1328
        %v1330 = vpop.f32.mrb[0].mxu0
        %v1331 = vadd.f32 %v1288, %v1330
        %v1332 = vpop.f32.mrb[0].mxu0
        %v1333 = vadd.f32 %v1290, %v1332
        %1334 = vdwg.mxu0
        %v1335 = vld [vmem:[#allocation7] sm:$0xff]
        %v1336 = vld [vmem:[#allocation7 + $0x8] sm:$0xff]
        %v1337 = vld [vmem:[#allocation7 + $0x10] sm:$0xff]
        %v1338 = vld [vmem:[#allocation7 + $0x18] sm:$0xff]
        %v1339 = vld [vmem:[#allocation7 + $0x20] sm:$0xff]
        %v1340 = vld [vmem:[#allocation7 + $0x28] sm:$0xff]
        %v1341 = vld [vmem:[#allocation7 + $0x30] sm:$0xff]
        %v1342 = vld [vmem:[#allocation7 + $0x38] sm:$0xff]
        %v1343 = vld [vmem:[#allocation7 + $0x40] sm:$0xff]
        %v1344 = vld [vmem:[#allocation7 + $0x48] sm:$0xff]
        %v1345 = vld [vmem:[#allocation7 + $0x50] sm:$0xff]
        %v1346 = vld [vmem:[#allocation7 + $0x58] sm:$0xff]
        %v1347 = vld [vmem:[#allocation7 + $0x60] sm:$0xff]
        %v1348 = vld [vmem:[#allocation7 + $0x68] sm:$0xff]
        %v1349 = vld [vmem:[#allocation7 + $0x70] sm:$0xff]
        %v1350 = vld [vmem:[#allocation7 + $0x78] sm:$0xff]
        %v1351 = vld [vmem:[#allocation7 + $0x80] sm:$0xff]
        %v1352 = vld [vmem:[#allocation7 + $0x88] sm:$0xff]
        %v1353 = vld [vmem:[#allocation7 + $0x90] sm:$0xff]
        %v1354 = vld [vmem:[#allocation7 + $0x98] sm:$0xff]
        %v1355 = vld [vmem:[#allocation7 + $0xa0] sm:$0xff]
        %v1356 = vld [vmem:[#allocation7 + $0xa8] sm:$0xff]
        %v1357 = vld [vmem:[#allocation7 + $0xb0] sm:$0xff]
        %v1358 = vld [vmem:[#allocation7 + $0xb8] sm:$0xff]
        %v1359 = vld [vmem:[#allocation7 + $0xc0] sm:$0xff]
        %v1360 = vld [vmem:[#allocation7 + $0xc8] sm:$0xff]
        %v1361 = vld [vmem:[#allocation7 + $0xd0] sm:$0xff]
        %v1362 = vld [vmem:[#allocation7 + $0xd8] sm:$0xff]
        %v1363 = vld [vmem:[#allocation7 + $0xe0] sm:$0xff]
        %v1364 = vld [vmem:[#allocation7 + $0xe8] sm:$0xff]
        %v1365 = vld [vmem:[#allocation7 + $0xf0] sm:$0xff]
        %v1366 = vld [vmem:[#allocation7 + $0xf8] sm:$0xff]
        %v1367 = vld [vmem:[#allocation7 + $0x100] sm:$0xff]
        %v1368 = vld [vmem:[#allocation7 + $0x108] sm:$0xff]
        %v1369 = vld [vmem:[#allocation7 + $0x110] sm:$0xff]
        %v1370 = vld [vmem:[#allocation7 + $0x118] sm:$0xff]
        %v1371 = vld [vmem:[#allocation7 + $0x120] sm:$0xff]
        %v1372 = vld [vmem:[#allocation7 + $0x128] sm:$0xff]
        %v1373 = vld [vmem:[#allocation7 + $0x130] sm:$0xff]
        %v1374 = vld [vmem:[#allocation7 + $0x138] sm:$0xff]
        %v1375 = vld [vmem:[#allocation7 + $0x140] sm:$0xff]
        %v1376 = vld [vmem:[#allocation7 + $0x148] sm:$0xff]
        %v1377 = vld [vmem:[#allocation7 + $0x150] sm:$0xff]
        %v1378 = vld [vmem:[#allocation7 + $0x158] sm:$0xff]
        %v1379 = vld [vmem:[#allocation7 + $0x160] sm:$0xff]
        %v1380 = vld [vmem:[#allocation7 + $0x168] sm:$0xff]
        %v1381 = vld [vmem:[#allocation7 + $0x170] sm:$0xff]
        %v1382 = vld [vmem:[#allocation7 + $0x178] sm:$0xff]
        %v1383 = vld [vmem:[#allocation7 + $0x180] sm:$0xff]
        %v1384 = vld [vmem:[#allocation7 + $0x188] sm:$0xff]
        %v1385 = vld [vmem:[#allocation7 + $0x190] sm:$0xff]
        %v1386 = vld [vmem:[#allocation7 + $0x198] sm:$0xff]
        %v1387 = vld [vmem:[#allocation7 + $0x1a0] sm:$0xff]
        %v1388 = vld [vmem:[#allocation7 + $0x1a8] sm:$0xff]
        %v1389 = vld [vmem:[#allocation7 + $0x1b0] sm:$0xff]
        %v1390 = vld [vmem:[#allocation7 + $0x1b8] sm:$0xff]
        %v1391 = vld [vmem:[#allocation7 + $0x1c0] sm:$0xff]
        %v1392 = vld [vmem:[#allocation7 + $0x1c8] sm:$0xff]
        %v1393 = vld [vmem:[#allocation7 + $0x1d0] sm:$0xff]
        %v1394 = vld [vmem:[#allocation7 + $0x1d8] sm:$0xff]
        %v1395 = vld [vmem:[#allocation7 + $0x1e0] sm:$0xff]
        %v1396 = vld [vmem:[#allocation7 + $0x1e8] sm:$0xff]
        %v1397 = vld [vmem:[#allocation7 + $0x1f0] sm:$0xff]
        %v1398 = vld [vmem:[#allocation7 + $0x1f8] sm:$0xff]
        %v1463 = vunpack.c.l.b16 %v1335
        %v1464 = vunpack.c.h.b16 %v1335
        %v1465 = vunpack.c.l.b16 %v1336
        %v1466 = vunpack.c.h.b16 %v1336
        %v1467 = vunpack.c.l.b16 %v1337
        %v1468 = vunpack.c.h.b16 %v1337
        %v1469 = vunpack.c.l.b16 %v1338
        %v1470 = vunpack.c.h.b16 %v1338
        %v1471 = vunpack.c.l.b16 %v1339
        %v1472 = vunpack.c.h.b16 %v1339
        %v1473 = vunpack.c.l.b16 %v1340
        %v1474 = vunpack.c.h.b16 %v1340
        %v1475 = vunpack.c.l.b16 %v1341
        %v1476 = vunpack.c.h.b16 %v1341
        %v1477 = vunpack.c.l.b16 %v1342
        %v1478 = vunpack.c.h.b16 %v1342
        %v1479 = vunpack.c.l.b16 %v1343
        %v1480 = vunpack.c.h.b16 %v1343
        %v1481 = vunpack.c.l.b16 %v1344
        %v1482 = vunpack.c.h.b16 %v1344
        %v1483 = vunpack.c.l.b16 %v1345
        %v1484 = vunpack.c.h.b16 %v1345
        %v1485 = vunpack.c.l.b16 %v1346
        %v1486 = vunpack.c.h.b16 %v1346
        %v1487 = vunpack.c.l.b16 %v1347
        %v1488 = vunpack.c.h.b16 %v1347
        %v1489 = vunpack.c.l.b16 %v1348
        %v1490 = vunpack.c.h.b16 %v1348
        %v1491 = vunpack.c.l.b16 %v1349
        %v1492 = vunpack.c.h.b16 %v1349
        %v1493 = vunpack.c.l.b16 %v1350
        %v1494 = vunpack.c.h.b16 %v1350
        %v1495 = vunpack.c.l.b16 %v1351
        %v1496 = vunpack.c.h.b16 %v1351
        %v1497 = vunpack.c.l.b16 %v1352
        %v1498 = vunpack.c.h.b16 %v1352
        %v1499 = vunpack.c.l.b16 %v1353
        %v1500 = vunpack.c.h.b16 %v1353
        %v1501 = vunpack.c.l.b16 %v1354
        %v1502 = vunpack.c.h.b16 %v1354
        %v1503 = vunpack.c.l.b16 %v1355
        %v1504 = vunpack.c.h.b16 %v1355
        %v1505 = vunpack.c.l.b16 %v1356
        %v1506 = vunpack.c.h.b16 %v1356
        %v1507 = vunpack.c.l.b16 %v1357
        %v1508 = vunpack.c.h.b16 %v1357
        %v1509 = vunpack.c.l.b16 %v1358
        %v1510 = vunpack.c.h.b16 %v1358
        %v1511 = vunpack.c.l.b16 %v1359
        %v1512 = vunpack.c.h.b16 %v1359
        %v1513 = vunpack.c.l.b16 %v1360
        %v1514 = vunpack.c.h.b16 %v1360
        %v1515 = vunpack.c.l.b16 %v1361
        %v1516 = vunpack.c.h.b16 %v1361
        %v1517 = vunpack.c.l.b16 %v1362
        %v1518 = vunpack.c.h.b16 %v1362
        %v1519 = vunpack.c.l.b16 %v1363
        %v1520 = vunpack.c.h.b16 %v1363
        %v1521 = vunpack.c.l.b16 %v1364
        %v1522 = vunpack.c.h.b16 %v1364
        %v1523 = vunpack.c.l.b16 %v1365
        %v1524 = vunpack.c.h.b16 %v1365
        %v1525 = vunpack.c.l.b16 %v1366
        %v1526 = vunpack.c.h.b16 %v1366
        %v1527 = vunpack.c.l.b16 %v1367
        %v1528 = vunpack.c.h.b16 %v1367
        %v1529 = vunpack.c.l.b16 %v1368
        %v1530 = vunpack.c.h.b16 %v1368
        %v1531 = vunpack.c.l.b16 %v1369
        %v1532 = vunpack.c.h.b16 %v1369
        %v1533 = vunpack.c.l.b16 %v1370
        %v1534 = vunpack.c.h.b16 %v1370
        %v1535 = vunpack.c.l.b16 %v1371
        %v1536 = vunpack.c.h.b16 %v1371
        %v1537 = vunpack.c.l.b16 %v1372
        %v1538 = vunpack.c.h.b16 %v1372
        %v1539 = vunpack.c.l.b16 %v1373
        %v1540 = vunpack.c.h.b16 %v1373
        %v1541 = vunpack.c.l.b16 %v1374
        %v1542 = vunpack.c.h.b16 %v1374
        %v1543 = vunpack.c.l.b16 %v1375
        %v1544 = vunpack.c.h.b16 %v1375
        %v1545 = vunpack.c.l.b16 %v1376
        %v1546 = vunpack.c.h.b16 %v1376
        %v1547 = vunpack.c.l.b16 %v1377
        %v1548 = vunpack.c.h.b16 %v1377
        %v1549 = vunpack.c.l.b16 %v1378
        %v1550 = vunpack.c.h.b16 %v1378
        %v1551 = vunpack.c.l.b16 %v1379
        %v1552 = vunpack.c.h.b16 %v1379
        %v1553 = vunpack.c.l.b16 %v1380
        %v1554 = vunpack.c.h.b16 %v1380
        %v1555 = vunpack.c.l.b16 %v1381
        %v1556 = vunpack.c.h.b16 %v1381
        %v1557 = vunpack.c.l.b16 %v1382
        %v1558 = vunpack.c.h.b16 %v1382
        %v1559 = vunpack.c.l.b16 %v1383
        %v1560 = vunpack.c.h.b16 %v1383
        %v1561 = vunpack.c.l.b16 %v1384
        %v1562 = vunpack.c.h.b16 %v1384
        %v1563 = vunpack.c.l.b16 %v1385
        %v1564 = vunpack.c.h.b16 %v1385
        %v1565 = vunpack.c.l.b16 %v1386
        %v1566 = vunpack.c.h.b16 %v1386
        %v1567 = vunpack.c.l.b16 %v1387
        %v1568 = vunpack.c.h.b16 %v1387
        %v1569 = vunpack.c.l.b16 %v1388
        %v1570 = vunpack.c.h.b16 %v1388
        %v1571 = vunpack.c.l.b16 %v1389
        %v1572 = vunpack.c.h.b16 %v1389
        %v1573 = vunpack.c.l.b16 %v1390
        %v1574 = vunpack.c.h.b16 %v1390
        %v1575 = vunpack.c.l.b16 %v1391
        %v1576 = vunpack.c.h.b16 %v1391
        %v1577 = vunpack.c.l.b16 %v1392
        %v1578 = vunpack.c.h.b16 %v1392
        %v1579 = vunpack.c.l.b16 %v1393
        %v1580 = vunpack.c.h.b16 %v1393
        %v1581 = vunpack.c.l.b16 %v1394
        %v1582 = vunpack.c.h.b16 %v1394
        %v1583 = vunpack.c.l.b16 %v1395
        %v1584 = vunpack.c.h.b16 %v1395
        %v1585 = vunpack.c.l.b16 %v1396
        %v1586 = vunpack.c.h.b16 %v1396
        %v1587 = vunpack.c.l.b16 %v1397
        %v1588 = vunpack.c.h.b16 %v1397
        %v1589 = vunpack.c.l.b16 %v1398
        %v1590 = vunpack.c.h.b16 %v1398
        %v1591 = vpack.c.b16 %v1465, %v1463
        %v1592 = vpack.c.b16 %v1466, %v1464
        %v1593 = vpack.c.b16 %v1469, %v1467
        %v1594 = vpack.c.b16 %v1470, %v1468
        %v1595 = vpack.c.b16 %v1473, %v1471
        %v1596 = vpack.c.b16 %v1474, %v1472
        %v1597 = vpack.c.b16 %v1477, %v1475
        %v1598 = vpack.c.b16 %v1478, %v1476
        %v1599 = vpack.c.b16 %v1481, %v1479
        %v1600 = vpack.c.b16 %v1482, %v1480
        %v1601 = vpack.c.b16 %v1485, %v1483
        %v1602 = vpack.c.b16 %v1486, %v1484
        %v1603 = vpack.c.b16 %v1489, %v1487
        %v1604 = vpack.c.b16 %v1490, %v1488
        %v1605 = vpack.c.b16 %v1493, %v1491
        %v1606 = vpack.c.b16 %v1494, %v1492
        %v1607 = vpack.c.b16 %v1497, %v1495
        %v1608 = vpack.c.b16 %v1498, %v1496
        %v1609 = vpack.c.b16 %v1501, %v1499
        %v1610 = vpack.c.b16 %v1502, %v1500
        %v1611 = vpack.c.b16 %v1505, %v1503
        %v1612 = vpack.c.b16 %v1506, %v1504
        %v1613 = vpack.c.b16 %v1509, %v1507
        %v1614 = vpack.c.b16 %v1510, %v1508
        %v1615 = vpack.c.b16 %v1513, %v1511
        %v1616 = vpack.c.b16 %v1514, %v1512
        %v1617 = vpack.c.b16 %v1517, %v1515
        %v1618 = vpack.c.b16 %v1518, %v1516
        %v1619 = vpack.c.b16 %v1521, %v1519
        %v1620 = vpack.c.b16 %v1522, %v1520
        %v1621 = vpack.c.b16 %v1525, %v1523
        %v1622 = vpack.c.b16 %v1526, %v1524
        %v1623 = vpack.c.b16 %v1529, %v1527
        %v1624 = vpack.c.b16 %v1530, %v1528
        %v1625 = vpack.c.b16 %v1533, %v1531
        %v1626 = vpack.c.b16 %v1534, %v1532
        %v1627 = vpack.c.b16 %v1537, %v1535
        %v1628 = vpack.c.b16 %v1538, %v1536
        %v1629 = vpack.c.b16 %v1541, %v1539
        %v1630 = vpack.c.b16 %v1542, %v1540
        %v1631 = vpack.c.b16 %v1545, %v1543
        %v1632 = vpack.c.b16 %v1546, %v1544
        %v1633 = vpack.c.b16 %v1549, %v1547
        %v1634 = vpack.c.b16 %v1550, %v1548
        %v1635 = vpack.c.b16 %v1553, %v1551
        %v1636 = vpack.c.b16 %v1554, %v1552
        %v1637 = vpack.c.b16 %v1557, %v1555
        %v1638 = vpack.c.b16 %v1558, %v1556
        %v1639 = vpack.c.b16 %v1561, %v1559
        %v1640 = vpack.c.b16 %v1562, %v1560
        %v1641 = vpack.c.b16 %v1565, %v1563
        %v1642 = vpack.c.b16 %v1566, %v1564
        %v1643 = vpack.c.b16 %v1569, %v1567
        %v1644 = vpack.c.b16 %v1570, %v1568
        %v1645 = vpack.c.b16 %v1573, %v1571
        %v1646 = vpack.c.b16 %v1574, %v1572
        %v1647 = vpack.c.b16 %v1577, %v1575
        %v1648 = vpack.c.b16 %v1578, %v1576
        %v1649 = vpack.c.b16 %v1581, %v1579
        %v1650 = vpack.c.b16 %v1582, %v1580
        %v1651 = vpack.c.b16 %v1585, %v1583
        %v1652 = vpack.c.b16 %v1586, %v1584
        %v1653 = vpack.c.b16 %v1589, %v1587
        %v1654 = vpack.c.b16 %v1590, %v1588
        %1719 = vmatprep.subr.bf16.mxu0 %v1592
        %1720 = vmatpush1.bf16.msra.mxu0 %v1591
        %1721 = vmatprep.subr.bf16.mxu0 %v1594
        %1722 = vmatpush1.bf16.msra.mxu0 %v1593
        %1723 = vmatprep.subr.bf16.mxu0 %v1596
        %1724 = vmatpush1.bf16.msra.mxu0 %v1595
        %1725 = vmatprep.subr.bf16.mxu0 %v1598
        %1726 = vmatpush1.bf16.msra.mxu0 %v1597
        %1727 = vmatprep.subr.bf16.mxu0 %v1600
        %1728 = vmatpush1.bf16.msra.mxu0 %v1599
        %1729 = vmatprep.subr.bf16.mxu0 %v1602
        %1730 = vmatpush1.bf16.msra.mxu0 %v1601
        %1731 = vmatprep.subr.bf16.mxu0 %v1604
        %1732 = vmatpush1.bf16.msra.mxu0 %v1603
        %1733 = vmatprep.subr.bf16.mxu0 %v1606
        %1734 = vmatpush1.bf16.msra.mxu0 %v1605
        %1735 = vmatprep.subr.bf16.mxu0 %v1608
        %1736 = vmatpush1.bf16.msra.mxu0 %v1607
        %1737 = vmatprep.subr.bf16.mxu0 %v1610
        %1738 = vmatpush1.bf16.msra.mxu0 %v1609
        %1739 = vmatprep.subr.bf16.mxu0 %v1612
        %1740 = vmatpush1.bf16.msra.mxu0 %v1611
        %1741 = vmatprep.subr.bf16.mxu0 %v1614
        %1742 = vmatpush1.bf16.msra.mxu0 %v1613
        %1743 = vmatprep.subr.bf16.mxu0 %v1616
        %1744 = vmatpush1.bf16.msra.mxu0 %v1615
        %1745 = vmatprep.subr.bf16.mxu0 %v1618
        %1746 = vmatpush1.bf16.msra.mxu0 %v1617
        %1747 = vmatprep.subr.bf16.mxu0 %v1620
        %1748 = vmatpush1.bf16.msra.mxu0 %v1619
        %1749 = vmatprep.subr.bf16.mxu0 %v1622
        %1750 = vmatpush1.bf16.msra.mxu0 %v1621
        %1751 = vmatprep.mubr.bf16.mxu0 %v516
        %1752 = vmatmul.mubr.bf16.gmra.mrb[0].mxu0 %v515
        %v1753 = vpop.f32.mrb[0].mxu0
        %v1754 = vadd.f32 0.0, %v1753
        %v1755 = vpop.f32.mrb[0].mxu0
        %v1756 = vadd.f32 0.0, %v1755
        %v1757 = vpop.f32.mrb[0].mxu0
        %v1758 = vadd.f32 0.0, %v1757
        %v1759 = vpop.f32.mrb[0].mxu0
        %v1760 = vadd.f32 0.0, %v1759
        %1761 = vdwg.mxu0
        %1762 = vmatprep.subr.bf16.mxu0 %v1624
        %1763 = vmatpush1.bf16.msra.mxu0 %v1623
        %1764 = vmatprep.subr.bf16.mxu0 %v1626
        %1765 = vmatpush1.bf16.msra.mxu0 %v1625
        %1766 = vmatprep.subr.bf16.mxu0 %v1628
        %1767 = vmatpush1.bf16.msra.mxu0 %v1627
        %1768 = vmatprep.subr.bf16.mxu0 %v1630
        %1769 = vmatpush1.bf16.msra.mxu0 %v1629
        %1770 = vmatprep.subr.bf16.mxu0 %v1632
        %1771 = vmatpush1.bf16.msra.mxu0 %v1631
        %1772 = vmatprep.subr.bf16.mxu0 %v1634
        %1773 = vmatpush1.bf16.msra.mxu0 %v1633
        %1774 = vmatprep.subr.bf16.mxu0 %v1636
        %1775 = vmatpush1.bf16.msra.mxu0 %v1635
        %1776 = vmatprep.subr.bf16.mxu0 %v1638
        %1777 = vmatpush1.bf16.msra.mxu0 %v1637
        %1778 = vmatprep.subr.bf16.mxu0 %v1640
        %1779 = vmatpush1.bf16.msra.mxu0 %v1639
        %1780 = vmatprep.subr.bf16.mxu0 %v1642
        %1781 = vmatpush1.bf16.msra.mxu0 %v1641
        %1782 = vmatprep.subr.bf16.mxu0 %v1644
        %1783 = vmatpush1.bf16.msra.mxu0 %v1643
        %1784 = vmatprep.subr.bf16.mxu0 %v1646
        %1785 = vmatpush1.bf16.msra.mxu0 %v1645
        %1786 = vmatprep.subr.bf16.mxu0 %v1648
        %1787 = vmatpush1.bf16.msra.mxu0 %v1647
        %1788 = vmatprep.subr.bf16.mxu0 %v1650
        %1789 = vmatpush1.bf16.msra.mxu0 %v1649
        %1790 = vmatprep.subr.bf16.mxu0 %v1652
        %1791 = vmatpush1.bf16.msra.mxu0 %v1651
        %1792 = vmatprep.subr.bf16.mxu0 %v1654
        %1793 = vmatpush1.bf16.msra.mxu0 %v1653
        %1794 = vmatprep.mubr.bf16.mxu0 %v518
        %1795 = vmatmul.mubr.bf16.gmra.mrb[0].mxu0 %v517
        %v1796 = vpop.f32.mrb[0].mxu0
        %v1797 = vadd.f32 %v1754, %v1796
        %v1798 = vpop.f32.mrb[0].mxu0
        %v1799 = vadd.f32 %v1756, %v1798
        %v1800 = vpop.f32.mrb[0].mxu0
        %v1801 = vadd.f32 %v1758, %v1800
        %v1802 = vpop.f32.mrb[0].mxu0
        %v1803 = vadd.f32 %v1760, %v1802
        %1804 = vdwg.mxu0
        %v1805 = vld [vmem:[#allocation8] sm:$0xff]
        %v1806 = vld [vmem:[#allocation8 + $0x8] sm:$0xff]
        %v1807 = vld [vmem:[#allocation8 + $0x10] sm:$0xff]
        %v1808 = vld [vmem:[#allocation8 + $0x18] sm:$0xff]
        %v1809 = vld [vmem:[#allocation8 + $0x20] sm:$0xff]
        %v1810 = vld [vmem:[#allocation8 + $0x28] sm:$0xff]
        %v1811 = vld [vmem:[#allocation8 + $0x30] sm:$0xff]
        %v1812 = vld [vmem:[#allocation8 + $0x38] sm:$0xff]
        %v1813 = vld [vmem:[#allocation8 + $0x40] sm:$0xff]
        %v1814 = vld [vmem:[#allocation8 + $0x48] sm:$0xff]
        %v1815 = vld [vmem:[#allocation8 + $0x50] sm:$0xff]
        %v1816 = vld [vmem:[#allocation8 + $0x58] sm:$0xff]
        %v1817 = vld [vmem:[#allocation8 + $0x60] sm:$0xff]
        %v1818 = vld [vmem:[#allocation8 + $0x68] sm:$0xff]
        %v1819 = vld [vmem:[#allocation8 + $0x70] sm:$0xff]
        %v1820 = vld [vmem:[#allocation8 + $0x78] sm:$0xff]
        %v1821 = vld [vmem:[#allocation8 + $0x80] sm:$0xff]
        %v1822 = vld [vmem:[#allocation8 + $0x88] sm:$0xff]
        %v1823 = vld [vmem:[#allocation8 + $0x90] sm:$0xff]
        %v1824 = vld [vmem:[#allocation8 + $0x98] sm:$0xff]
        %v1825 = vld [vmem:[#allocation8 + $0xa0] sm:$0xff]
        %v1826 = vld [vmem:[#allocation8 + $0xa8] sm:$0xff]
        %v1827 = vld [vmem:[#allocation8 + $0xb0] sm:$0xff]
        %v1828 = vld [vmem:[#allocation8 + $0xb8] sm:$0xff]
        %v1829 = vld [vmem:[#allocation8 + $0xc0] sm:$0xff]
        %v1830 = vld [vmem:[#allocation8 + $0xc8] sm:$0xff]
        %v1831 = vld [vmem:[#allocation8 + $0xd0] sm:$0xff]
        %v1832 = vld [vmem:[#allocation8 + $0xd8] sm:$0xff]
        %v1833 = vld [vmem:[#allocation8 + $0xe0] sm:$0xff]
        %v1834 = vld [vmem:[#allocation8 + $0xe8] sm:$0xff]
        %v1835 = vld [vmem:[#allocation8 + $0xf0] sm:$0xff]
        %v1836 = vld [vmem:[#allocation8 + $0xf8] sm:$0xff]
        %v1837 = vld [vmem:[#allocation8 + $0x100] sm:$0xff]
        %v1838 = vld [vmem:[#allocation8 + $0x108] sm:$0xff]
        %v1839 = vld [vmem:[#allocation8 + $0x110] sm:$0xff]
        %v1840 = vld [vmem:[#allocation8 + $0x118] sm:$0xff]
        %v1841 = vld [vmem:[#allocation8 + $0x120] sm:$0xff]
        %v1842 = vld [vmem:[#allocation8 + $0x128] sm:$0xff]
        %v1843 = vld [vmem:[#allocation8 + $0x130] sm:$0xff]
        %v1844 = vld [vmem:[#allocation8 + $0x138] sm:$0xff]
        %v1845 = vld [vmem:[#allocation8 + $0x140] sm:$0xff]
        %v1846 = vld [vmem:[#allocation8 + $0x148] sm:$0xff]
        %v1847 = vld [vmem:[#allocation8 + $0x150] sm:$0xff]
        %v1848 = vld [vmem:[#allocation8 + $0x158] sm:$0xff]
        %v1849 = vld [vmem:[#allocation8 + $0x160] sm:$0xff]
        %v1850 = vld [vmem:[#allocation8 + $0x168] sm:$0xff]
        %v1851 = vld [vmem:[#allocation8 + $0x170] sm:$0xff]
        %v1852 = vld [vmem:[#allocation8 + $0x178] sm:$0xff]
        %v1853 = vld [vmem:[#allocation8 + $0x180] sm:$0xff]
        %v1854 = vld [vmem:[#allocation8 + $0x188] sm:$0xff]
        %v1855 = vld [vmem:[#allocation8 + $0x190] sm:$0xff]
        %v1856 = vld [vmem:[#allocation8 + $0x198] sm:$0xff]
        %v1857 = vld [vmem:[#allocation8 + $0x1a0] sm:$0xff]
        %v1858 = vld [vmem:[#allocation8 + $0x1a8] sm:$0xff]
        %v1859 = vld [vmem:[#allocation8 + $0x1b0] sm:$0xff]
        %v1860 = vld [vmem:[#allocation8 + $0x1b8] sm:$0xff]
        %v1861 = vld [vmem:[#allocation8 + $0x1c0] sm:$0xff]
        %v1862 = vld [vmem:[#allocation8 + $0x1c8] sm:$0xff]
        %v1863 = vld [vmem:[#allocation8 + $0x1d0] sm:$0xff]
        %v1864 = vld [vmem:[#allocation8 + $0x1d8] sm:$0xff]
        %v1865 = vld [vmem:[#allocation8 + $0x1e0] sm:$0xff]
        %v1866 = vld [vmem:[#allocation8 + $0x1e8] sm:$0xff]
        %v1867 = vld [vmem:[#allocation8 + $0x1f0] sm:$0xff]
        %v1868 = vld [vmem:[#allocation8 + $0x1f8] sm:$0xff]
        %v1933 = vunpack.c.l.b16 %v1805
        %v1934 = vunpack.c.h.b16 %v1805
        %v1935 = vunpack.c.l.b16 %v1806
        %v1936 = vunpack.c.h.b16 %v1806
        %v1937 = vunpack.c.l.b16 %v1807
        %v1938 = vunpack.c.h.b16 %v1807
        %v1939 = vunpack.c.l.b16 %v1808
        %v1940 = vunpack.c.h.b16 %v1808
        %v1941 = vunpack.c.l.b16 %v1809
        %v1942 = vunpack.c.h.b16 %v1809
        %v1943 = vunpack.c.l.b16 %v1810
        %v1944 = vunpack.c.h.b16 %v1810
        %v1945 = vunpack.c.l.b16 %v1811
        %v1946 = vunpack.c.h.b16 %v1811
        %v1947 = vunpack.c.l.b16 %v1812
        %v1948 = vunpack.c.h.b16 %v1812
        %v1949 = vunpack.c.l.b16 %v1813
        %v1950 = vunpack.c.h.b16 %v1813
        %v1951 = vunpack.c.l.b16 %v1814
        %v1952 = vunpack.c.h.b16 %v1814
        %v1953 = vunpack.c.l.b16 %v1815
        %v1954 = vunpack.c.h.b16 %v1815
        %v1955 = vunpack.c.l.b16 %v1816
        %v1956 = vunpack.c.h.b16 %v1816
        %v1957 = vunpack.c.l.b16 %v1817
        %v1958 = vunpack.c.h.b16 %v1817
        %v1959 = vunpack.c.l.b16 %v1818
        %v1960 = vunpack.c.h.b16 %v1818
        %v1961 = vunpack.c.l.b16 %v1819
        %v1962 = vunpack.c.h.b16 %v1819
        %v1963 = vunpack.c.l.b16 %v1820
        %v1964 = vunpack.c.h.b16 %v1820
        %v1965 = vunpack.c.l.b16 %v1821
        %v1966 = vunpack.c.h.b16 %v1821
        %v1967 = vunpack.c.l.b16 %v1822
        %v1968 = vunpack.c.h.b16 %v1822
        %v1969 = vunpack.c.l.b16 %v1823
        %v1970 = vunpack.c.h.b16 %v1823
        %v1971 = vunpack.c.l.b16 %v1824
        %v1972 = vunpack.c.h.b16 %v1824
        %v1973 = vunpack.c.l.b16 %v1825
        %v1974 = vunpack.c.h.b16 %v1825
        %v1975 = vunpack.c.l.b16 %v1826
        %v1976 = vunpack.c.h.b16 %v1826
        %v1977 = vunpack.c.l.b16 %v1827
        %v1978 = vunpack.c.h.b16 %v1827
        %v1979 = vunpack.c.l.b16 %v1828
        %v1980 = vunpack.c.h.b16 %v1828
        %v1981 = vunpack.c.l.b16 %v1829
        %v1982 = vunpack.c.h.b16 %v1829
        %v1983 = vunpack.c.l.b16 %v1830
        %v1984 = vunpack.c.h.b16 %v1830
        %v1985 = vunpack.c.l.b16 %v1831
        %v1986 = vunpack.c.h.b16 %v1831
        %v1987 = vunpack.c.l.b16 %v1832
        %v1988 = vunpack.c.h.b16 %v1832
        %v1989 = vunpack.c.l.b16 %v1833
        %v1990 = vunpack.c.h.b16 %v1833
        %v1991 = vunpack.c.l.b16 %v1834
        %v1992 = vunpack.c.h.b16 %v1834
        %v1993 = vunpack.c.l.b16 %v1835
        %v1994 = vunpack.c.h.b16 %v1835
        %v1995 = vunpack.c.l.b16 %v1836
        %v1996 = vunpack.c.h.b16 %v1836
        %v1997 = vunpack.c.l.b16 %v1837
        %v1998 = vunpack.c.h.b16 %v1837
        %v1999 = vunpack.c.l.b16 %v1838
        %v2000 = vunpack.c.h.b16 %v1838
        %v2001 = vunpack.c.l.b16 %v1839
        %v2002 = vunpack.c.h.b16 %v1839
        %v2003 = vunpack.c.l.b16 %v1840
        %v2004 = vunpack.c.h.b16 %v1840
        %v2005 = vunpack.c.l.b16 %v1841
        %v2006 = vunpack.c.h.b16 %v1841
        %v2007 = vunpack.c.l.b16 %v1842
        %v2008 = vunpack.c.h.b16 %v1842
        %v2009 = vunpack.c.l.b16 %v1843
        %v2010 = vunpack.c.h.b16 %v1843
        %v2011 = vunpack.c.l.b16 %v1844
        %v2012 = vunpack.c.h.b16 %v1844
        %v2013 = vunpack.c.l.b16 %v1845
        %v2014 = vunpack.c.h.b16 %v1845
        %v2015 = vunpack.c.l.b16 %v1846
        %v2016 = vunpack.c.h.b16 %v1846
        %v2017 = vunpack.c.l.b16 %v1847
        %v2018 = vunpack.c.h.b16 %v1847
        %v2019 = vunpack.c.l.b16 %v1848
        %v2020 = vunpack.c.h.b16 %v1848
        %v2021 = vunpack.c.l.b16 %v1849
        %v2022 = vunpack.c.h.b16 %v1849
        %v2023 = vunpack.c.l.b16 %v1850
        %v2024 = vunpack.c.h.b16 %v1850
        %v2025 = vunpack.c.l.b16 %v1851
        %v2026 = vunpack.c.h.b16 %v1851
        %v2027 = vunpack.c.l.b16 %v1852
        %v2028 = vunpack.c.h.b16 %v1852
        %v2029 = vunpack.c.l.b16 %v1853
        %v2030 = vunpack.c.h.b16 %v1853
        %v2031 = vunpack.c.l.b16 %v1854
        %v2032 = vunpack.c.h.b16 %v1854
        %v2033 = vunpack.c.l.b16 %v1855
        %v2034 = vunpack.c.h.b16 %v1855
        %v2035 = vunpack.c.l.b16 %v1856
        %v2036 = vunpack.c.h.b16 %v1856
        %v2037 = vunpack.c.l.b16 %v1857
        %v2038 = vunpack.c.h.b16 %v1857
        %v2039 = vunpack.c.l.b16 %v1858
        %v2040 = vunpack.c.h.b16 %v1858
        %v2041 = vunpack.c.l.b16 %v1859
        %v2042 = vunpack.c.h.b16 %v1859
        %v2043 = vunpack.c.l.b16 %v1860
        %v2044 = vunpack.c.h.b16 %v1860
        %v2045 = vunpack.c.l.b16 %v1861
        %v2046 = vunpack.c.h.b16 %v1861
        %v2047 = vunpack.c.l.b16 %v1862
        %v2048 = vunpack.c.h.b16 %v1862
        %v2049 = vunpack.c.l.b16 %v1863
        %v2050 = vunpack.c.h.b16 %v1863
        %v2051 = vunpack.c.l.b16 %v1864
        %v2052 = vunpack.c.h.b16 %v1864
        %v2053 = vunpack.c.l.b16 %v1865
        %v2054 = vunpack.c.h.b16 %v1865
        %v2055 = vunpack.c.l.b16 %v1866
        %v2056 = vunpack.c.h.b16 %v1866
        %v2057 = vunpack.c.l.b16 %v1867
        %v2058 = vunpack.c.h.b16 %v1867
        %v2059 = vunpack.c.l.b16 %v1868
        %v2060 = vunpack.c.h.b16 %v1868
        %v2061 = vpack.c.b16 %v1935, %v1933
        %v2062 = vpack.c.b16 %v1936, %v1934
        %v2063 = vpack.c.b16 %v1939, %v1937
        %v2064 = vpack.c.b16 %v1940, %v1938
        %v2065 = vpack.c.b16 %v1943, %v1941
        %v2066 = vpack.c.b16 %v1944, %v1942
        %v2067 = vpack.c.b16 %v1947, %v1945
        %v2068 = vpack.c.b16 %v1948, %v1946
        %v2069 = vpack.c.b16 %v1951, %v1949
        %v2070 = vpack.c.b16 %v1952, %v1950
        %v2071 = vpack.c.b16 %v1955, %v1953
        %v2072 = vpack.c.b16 %v1956, %v1954
        %v2073 = vpack.c.b16 %v1959, %v1957
        %v2074 = vpack.c.b16 %v1960, %v1958
        %v2075 = vpack.c.b16 %v1963, %v1961
        %v2076 = vpack.c.b16 %v1964, %v1962
        %v2077 = vpack.c.b16 %v1967, %v1965
        %v2078 = vpack.c.b16 %v1968, %v1966
        %v2079 = vpack.c.b16 %v1971, %v1969
        %v2080 = vpack.c.b16 %v1972, %v1970
        %v2081 = vpack.c.b16 %v1975, %v1973
        %v2082 = vpack.c.b16 %v1976, %v1974
        %v2083 = vpack.c.b16 %v1979, %v1977
        %v2084 = vpack.c.b16 %v1980, %v1978
        %v2085 = vpack.c.b16 %v1983, %v1981
        %v2086 = vpack.c.b16 %v1984, %v1982
        %v2087 = vpack.c.b16 %v1987, %v1985
        %v2088 = vpack.c.b16 %v1988, %v1986
        %v2089 = vpack.c.b16 %v1991, %v1989
        %v2090 = vpack.c.b16 %v1992, %v1990
        %v2091 = vpack.c.b16 %v1995, %v1993
        %v2092 = vpack.c.b16 %v1996, %v1994
        %v2093 = vpack.c.b16 %v1999, %v1997
        %v2094 = vpack.c.b16 %v2000, %v1998
        %v2095 = vpack.c.b16 %v2003, %v2001
        %v2096 = vpack.c.b16 %v2004, %v2002
        %v2097 = vpack.c.b16 %v2007, %v2005
        %v2098 = vpack.c.b16 %v2008, %v2006
        %v2099 = vpack.c.b16 %v2011, %v2009
        %v2100 = vpack.c.b16 %v2012, %v2010
        %v2101 = vpack.c.b16 %v2015, %v2013
        %v2102 = vpack.c.b16 %v2016, %v2014
        %v2103 = vpack.c.b16 %v2019, %v2017
        %v2104 = vpack.c.b16 %v2020, %v2018
        %v2105 = vpack.c.b16 %v2023, %v2021
        %v2106 = vpack.c.b16 %v2024, %v2022
        %v2107 = vpack.c.b16 %v2027, %v2025
        %v2108 = vpack.c.b16 %v2028, %v2026
        %v2109 = vpack.c.b16 %v2031, %v2029
        %v2110 = vpack.c.b16 %v2032, %v2030
        %v2111 = vpack.c.b16 %v2035, %v2033
        %v2112 = vpack.c.b16 %v2036, %v2034
        %v2113 = vpack.c.b16 %v2039, %v2037
        %v2114 = vpack.c.b16 %v2040, %v2038
        %v2115 = vpack.c.b16 %v2043, %v2041
        %v2116 = vpack.c.b16 %v2044, %v2042
        %v2117 = vpack.c.b16 %v2047, %v2045
        %v2118 = vpack.c.b16 %v2048, %v2046
        %v2119 = vpack.c.b16 %v2051, %v2049
        %v2120 = vpack.c.b16 %v2052, %v2050
        %v2121 = vpack.c.b16 %v2055, %v2053
        %v2122 = vpack.c.b16 %v2056, %v2054
        %v2123 = vpack.c.b16 %v2059, %v2057
        %v2124 = vpack.c.b16 %v2060, %v2058
        %2189 = vmatprep.subr.bf16.mxu0 %v2062
        %2190 = vmatpush1.bf16.msra.mxu0 %v2061
        %2191 = vmatprep.subr.bf16.mxu0 %v2064
        %2192 = vmatpush1.bf16.msra.mxu0 %v2063
        %2193 = vmatprep.subr.bf16.mxu0 %v2066
        %2194 = vmatpush1.bf16.msra.mxu0 %v2065
        %2195 = vmatprep.subr.bf16.mxu0 %v2068
        %2196 = vmatpush1.bf16.msra.mxu0 %v2067
        %2197 = vmatprep.subr.bf16.mxu0 %v2070
        %2198 = vmatpush1.bf16.msra.mxu0 %v2069
        %2199 = vmatprep.subr.bf16.mxu0 %v2072
        %2200 = vmatpush1.bf16.msra.mxu0 %v2071
        %2201 = vmatprep.subr.bf16.mxu0 %v2074
        %2202 = vmatpush1.bf16.msra.mxu0 %v2073
        %2203 = vmatprep.subr.bf16.mxu0 %v2076
        %2204 = vmatpush1.bf16.msra.mxu0 %v2075
        %2205 = vmatprep.subr.bf16.mxu0 %v2078
        %2206 = vmatpush1.bf16.msra.mxu0 %v2077
        %2207 = vmatprep.subr.bf16.mxu0 %v2080
        %2208 = vmatpush1.bf16.msra.mxu0 %v2079
        %2209 = vmatprep.subr.bf16.mxu0 %v2082
        %2210 = vmatpush1.bf16.msra.mxu0 %v2081
        %2211 = vmatprep.subr.bf16.mxu0 %v2084
        %2212 = vmatpush1.bf16.msra.mxu0 %v2083
        %2213 = vmatprep.subr.bf16.mxu0 %v2086
        %2214 = vmatpush1.bf16.msra.mxu0 %v2085
        %2215 = vmatprep.subr.bf16.mxu0 %v2088
        %2216 = vmatpush1.bf16.msra.mxu0 %v2087
        %2217 = vmatprep.subr.bf16.mxu0 %v2090
        %2218 = vmatpush1.bf16.msra.mxu0 %v2089
        %2219 = vmatprep.subr.bf16.mxu0 %v2092
        %2220 = vmatpush1.bf16.msra.mxu0 %v2091
        %2221 = vmatprep.mubr.bf16.mxu0 %v516
        %2222 = vmatmul.mubr.bf16.gmra.mrb[0].mxu0 %v515
        %v2223 = vpop.f32.mrb[0].mxu0
        %v2224 = vadd.f32 0.0, %v2223
        %v2225 = vpop.f32.mrb[0].mxu0
        %v2226 = vadd.f32 0.0, %v2225
        %v2227 = vpop.f32.mrb[0].mxu0
        %v2228 = vadd.f32 0.0, %v2227
        %v2229 = vpop.f32.mrb[0].mxu0
        %v2230 = vadd.f32 0.0, %v2229
        %2231 = vdwg.mxu0
        %2232 = vmatprep.subr.bf16.mxu0 %v2094
        %2233 = vmatpush1.bf16.msra.mxu0 %v2093
        %2234 = vmatprep.subr.bf16.mxu0 %v2096
        %2235 = vmatpush1.bf16.msra.mxu0 %v2095
        %2236 = vmatprep.subr.bf16.mxu0 %v2098
        %2237 = vmatpush1.bf16.msra.mxu0 %v2097
        %2238 = vmatprep.subr.bf16.mxu0 %v2100
        %2239 = vmatpush1.bf16.msra.mxu0 %v2099
        %2240 = vmatprep.subr.bf16.mxu0 %v2102
        %2241 = vmatpush1.bf16.msra.mxu0 %v2101
        %2242 = vmatprep.subr.bf16.mxu0 %v2104
        %2243 = vmatpush1.bf16.msra.mxu0 %v2103
        %2244 = vmatprep.subr.bf16.mxu0 %v2106
        %2245 = vmatpush1.bf16.msra.mxu0 %v2105
        %2246 = vmatprep.subr.bf16.mxu0 %v2108
        %2247 = vmatpush1.bf16.msra.mxu0 %v2107
        %2248 = vmatprep.subr.bf16.mxu0 %v2110
        %2249 = vmatpush1.bf16.msra.mxu0 %v2109
        %2250 = vmatprep.subr.bf16.mxu0 %v2112
        %2251 = vmatpush1.bf16.msra.mxu0 %v2111
        %2252 = vmatprep.subr.bf16.mxu0 %v2114
        %2253 = vmatpush1.bf16.msra.mxu0 %v2113
        %2254 = vmatprep.subr.bf16.mxu0 %v2116
        %2255 = vmatpush1.bf16.msra.mxu0 %v2115
        %2256 = vmatprep.subr.bf16.mxu0 %v2118
        %2257 = vmatpush1.bf16.msra.mxu0 %v2117
        %2258 = vmatprep.subr.bf16.mxu0 %v2120
        %2259 = vmatpush1.bf16.msra.mxu0 %v2119
        %2260 = vmatprep.subr.bf16.mxu0 %v2122
        %2261 = vmatpush1.bf16.msra.mxu0 %v2121
        %2262 = vmatprep.subr.bf16.mxu0 %v2124
        %2263 = vmatpush1.bf16.msra.mxu0 %v2123
        %2264 = vmatprep.mubr.bf16.mxu0 %v518
        %2265 = vmatmul.mubr.bf16.gmra.mrb[0].mxu0 %v517
        %v2266 = vpop.f32.mrb[0].mxu0
        %v2267 = vadd.f32 %v2224, %v2266
        %v2268 = vpop.f32.mrb[0].mxu0
        %v2269 = vadd.f32 %v2226, %v2268
        %v2270 = vpop.f32.mrb[0].mxu0
        %v2271 = vadd.f32 %v2228, %v2270
        %v2272 = vpop.f32.mrb[0].mxu0
        %v2273 = vadd.f32 %v2230, %v2272
        %2274 = vdwg.mxu0
        %v2275 = vld [vmem:[%s5] sm:$0xff]
        %v2276 = vld [vmem:[%s5 + $0x8] sm:$0xff]
        %v2277 = vld [vmem:[#allocation11] sm:$0xff]
        %v2278 = vld [vmem:[#allocation11 + $0x8] sm:$0xff]
        %v2279 = vmul.f32 %v1797, %v2275
        %v2280 = vmul.f32 %v1801, %v2276
        %2281 = vrot.lane.b32.xlu0 %v1797, 64
        %v2282 = vpop.permute.xlu0 %2281
        %2283 = vrot.lane.b32.xlu0 %v1801, 64
        %v2284 = vpop.permute.xlu0 %2283
        %v2285 = vmul.f32 %v2282, %v2277
        %v2286 = vmul.f32 %v2284, %v2278
        %v2287 = vadd.f32 %v2279, %v2285
        %v2288 = vadd.f32 %v2280, %v2286
        %v2289 = vpack.c.bf16 %v2288, %v2287
        %v2290 = vpack.c.bf16 %v2271, %v2267
        %v2291 = vmul.f32 %v1241, %v2275
        %v2292 = vmul.f32 %v1245, %v2276
        %2293 = vrot.lane.b32.xlu0 %v1241, 64
        %v2294 = vpop.permute.xlu0 %2293
        %2295 = vrot.lane.b32.xlu0 %v1245, 64
        %v2296 = vpop.permute.xlu0 %2295
        %v2297 = vmul.f32 %v2294, %v2277
        %v2298 = vmul.f32 %v2296, %v2278
        %v2299 = vadd.f32 %v2291, %v2297
        %v2300 = vadd.f32 %v2292, %v2298
        %v2301 = vmul.f32 %v2299, 0.088388346
        %v2302 = vmul.f32 %v2300, 0.088388346
        %v2303 = vpack.c.bf16 %v2302, %v2301
        %2304 = vmatprep.subr.bf16.mxu0 0
        %2305 = vmatpush1.bf16.xpose.msra.mxu0 %v2289
        %2306 = vmatprep.subr.bf16.mxu0 0
        %2307 = vmatpush1.bf16.xpose.msra.mxu0 0
        %2308 = vmatprep.subr.bf16.mxu0 0
        %2309 = vmatpush1.bf16.xpose.msra.mxu0 0
        %2310 = vmatprep.subr.bf16.mxu0 0
        %2311 = vmatpush1.bf16.xpose.msra.mxu0 0
        %2312 = vmatprep.subr.bf16.mxu0 0
        %2313 = vmatpush1.bf16.xpose.msra.mxu0 0
        %2314 = vmatprep.subr.bf16.mxu0 0
        %2315 = vmatpush1.bf16.xpose.msra.mxu0 0
        %2316 = vmatprep.subr.bf16.mxu0 0
        %2317 = vmatpush1.bf16.xpose.msra.mxu0 0
        %2318 = vmatprep.subr.bf16.mxu0 0
        %2319 = vmatpush1.bf16.xpose.msra.mxu0 0
        %2320 = vmatprep.subr.bf16.mxu0 0
        %2321 = vmatpush1.bf16.xpose.msra.mxu0 0
        %2322 = vmatprep.subr.bf16.mxu0 0
        %2323 = vmatpush1.bf16.xpose.msra.mxu0 0
        %2324 = vmatprep.subr.bf16.mxu0 0
        %2325 = vmatpush1.bf16.xpose.msra.mxu0 0
        %2326 = vmatprep.subr.bf16.mxu0 0
        %2327 = vmatpush1.bf16.xpose.msra.mxu0 0
        %2328 = vmatprep.subr.bf16.mxu0 0
        %2329 = vmatpush1.bf16.xpose.msra.mxu0 0
        %2330 = vmatprep.subr.bf16.mxu0 0
        %2331 = vmatpush1.bf16.xpose.msra.mxu0 0
        %2332 = vmatprep.subr.bf16.mxu0 0
        %2333 = vmatpush1.bf16.xpose.msra.mxu0 0
        %2334 = vmatprep.subr.bf16.mxu0 0
        %2335 = vmatpush1.bf16.xpose.msra.mxu0 0
        %2336 = vmatprep.mubr.bf16.mxu0 0
        %2337 = vmatmul.mubr.bf16.gmra.mrb[0].mxu0 %v2303
        %v2338 = vpop.f32.mrb[0].mxu0
        %v2339 = vadd.f32 0.0, %v2338
        %v2340 = vpop.f32.mrb[0].mxu0
        %v2341 = vpop.f32.mrb[0].mxu0
        %v2342 = vadd.f32 0.0, %v2341
        %v2343 = vpop.f32.mrb[0].mxu0
        %2344 = vdwg.mxu0
        %vm2345 = vcmask 130048
        %v2346 = vsel %vm2345, %v2339, -inf
        %2347 = vmax.xlane.f32.xlu0 %v2346
        %v2348 = vpop.xlane.xlu0 %2347
        %v2349 = vsel %vm2345, %v2342, -inf
        %2350 = vmax.xlane.f32.xlu0 %v2349
        %v2351 = vpop.xlane.xlu0 %2350
        %v2352 = vsub.f32 %v2339, %v2348
        %v2353 = vsub.f32 %v2342, %v2351
        %v2354 = vmul.f32 %v2352, 1.442695
        %v2355 = vpow.pop %v2354
        %v2356 = vmul.f32 %v2353, 1.442695
        %v2357 = vpow.pop %v2356
        %v2358 = vsel %vm2345, %v2355, 0.0
        %2359 = vadd.xlane.f32.xlu0 %v2358
        %v2360 = vpop.xlane.xlu0 %2359
        %v2361 = vsel %vm2345, %v2357, 0.0
        %2362 = vadd.xlane.f32.xlu0 %v2361
        %v2363 = vpop.xlane.xlu0 %2362
        %v2364 = vrcp.pop %v2360
        %v2365 = vrcp.pop %v2363
        %v2366 = vmul.f32 %v2355, %v2364
        %v2367 = vmul.f32 %v2357, %v2365
        %v2368 = vpack.c.bf16 %v2367, %v2366
        %v2370 = vsel %vm2345, %v2368, 0
        %2372 = vmatprep.subr.bf16.mxu0 0
        %2373 = vmatpush1.bf16.msra.mxu0 %v2290
        %2374 = vmatprep.subr.bf16.mxu0 0
        %2375 = vmatpush1.bf16.msra.mxu0 0
        %2376 = vmatprep.subr.bf16.mxu0 0
        %2377 = vmatpush1.bf16.msra.mxu0 0
        %2378 = vmatprep.subr.bf16.mxu0 0
        %2379 = vmatpush1.bf16.msra.mxu0 0
        %2380 = vmatprep.subr.bf16.mxu0 0
        %2381 = vmatpush1.bf16.msra.mxu0 0
        %2382 = vmatprep.subr.bf16.mxu0 0
        %2383 = vmatpush1.bf16.msra.mxu0 0
        %2384 = vmatprep.subr.bf16.mxu0 0
        %2385 = vmatpush1.bf16.msra.mxu0 0
        %2386 = vmatprep.subr.bf16.mxu0 0
        %2387 = vmatpush1.bf16.msra.mxu0 0
        %2388 = vmatprep.subr.bf16.mxu0 0
        %2389 = vmatpush1.bf16.msra.mxu0 0
        %2390 = vmatprep.subr.bf16.mxu0 0
        %2391 = vmatpush1.bf16.msra.mxu0 0
        %2392 = vmatprep.subr.bf16.mxu0 0
        %2393 = vmatpush1.bf16.msra.mxu0 0
        %2394 = vmatprep.subr.bf16.mxu0 0
        %2395 = vmatpush1.bf16.msra.mxu0 0
        %2396 = vmatprep.subr.bf16.mxu0 0
        %2397 = vmatpush1.bf16.msra.mxu0 0
        %2398 = vmatprep.subr.bf16.mxu0 0
        %2399 = vmatpush1.bf16.msra.mxu0 0
        %2400 = vmatprep.subr.bf16.mxu0 0
        %2401 = vmatpush1.bf16.msra.mxu0 0
        %2402 = vmatprep.subr.bf16.mxu0 0
        %2403 = vmatpush1.bf16.msra.mxu0 0
        %2404 = vmatprep.mubr.bf16.mxu0 0
        %2405 = vmatmul.mubr.bf16.gmra.mrb[0].mxu0 %v2370
        %v2406 = vpop.f32.mrb[0].mxu0
        %v2407 = vadd.f32 0.0, %v2406
        %v2408 = vpop.f32.mrb[0].mxu0
        %v2409 = vpop.f32.mrb[0].mxu0
        %v2410 = vadd.f32 0.0, %v2409
        %v2411 = vpop.f32.mrb[0].mxu0
        %2412 = vdwg.mxu0
        %v2413 = vmul.f32 %v1243, %v2275
        %v2414 = vmul.f32 %v1247, %v2276
        %2415 = vrot.lane.b32.xlu0 %v1243, 64
        %v2416 = vpop.permute.xlu0 %2415
        %2417 = vrot.lane.b32.xlu0 %v1247, 64
        %v2418 = vpop.permute.xlu0 %2417
        %v2419 = vmul.f32 %v2416, %v2277
        %v2420 = vmul.f32 %v2418, %v2278
        %v2421 = vadd.f32 %v2413, %v2419
        %v2422 = vadd.f32 %v2414, %v2420
        %v2423 = vmul.f32 %v2421, 0.088388346
        %v2424 = vmul.f32 %v2422, 0.088388346
        %v2425 = vpack.c.bf16 %v2424, %v2423
        %2426 = vmatprep.subr.bf16.mxu0 0
        %2427 = vmatpush1.bf16.xpose.msra.mxu0 %v2289
        %2428 = vmatprep.subr.bf16.mxu0 0
        %2429 = vmatpush1.bf16.xpose.msra.mxu0 0
        %2430 = vmatprep.subr.bf16.mxu0 0
        %2431 = vmatpush1.bf16.xpose.msra.mxu0 0
        %2432 = vmatprep.subr.bf16.mxu0 0
        %2433 = vmatpush1.bf16.xpose.msra.mxu0 0
        %2434 = vmatprep.subr.bf16.mxu0 0
        %2435 = vmatpush1.bf16.xpose.msra.mxu0 0
        %2436 = vmatprep.subr.bf16.mxu0 0
        %2437 = vmatpush1.bf16.xpose.msra.mxu0 0
        %2438 = vmatprep.subr.bf16.mxu0 0
        %2439 = vmatpush1.bf16.xpose.msra.mxu0 0
        %2440 = vmatprep.subr.bf16.mxu0 0
        %2441 = vmatpush1.bf16.xpose.msra.mxu0 0
        %2442 = vmatprep.subr.bf16.mxu0 0
        %2443 = vmatpush1.bf16.xpose.msra.mxu0 0
        %2444 = vmatprep.subr.bf16.mxu0 0
        %2445 = vmatpush1.bf16.xpose.msra.mxu0 0
        %2446 = vmatprep.subr.bf16.mxu0 0
        %2447 = vmatpush1.bf16.xpose.msra.mxu0 0
        %2448 = vmatprep.subr.bf16.mxu0 0
        %2449 = vmatpush1.bf16.xpose.msra.mxu0 0
        %2450 = vmatprep.subr.bf16.mxu0 0
        %2451 = vmatpush1.bf16.xpose.msra.mxu0 0
        %2452 = vmatprep.subr.bf16.mxu0 0
        %2453 = vmatpush1.bf16.xpose.msra.mxu0 0
        %2454 = vmatprep.subr.bf16.mxu0 0
        %2455 = vmatpush1.bf16.xpose.msra.mxu0 0
        %2456 = vmatprep.subr.bf16.mxu0 0
        %2457 = vmatpush1.bf16.xpose.msra.mxu0 0
        %2458 = vmatprep.mubr.bf16.mxu0 0
        %2459 = vmatmul.mubr.bf16.gmra.mrb[0].mxu0 %v2425
        %v2460 = vpop.f32.mrb[0].mxu0
        %v2461 = vadd.f32 0.0, %v2460
        %v2462 = vpop.f32.mrb[0].mxu0
        %v2463 = vpop.f32.mrb[0].mxu0
        %v2464 = vadd.f32 0.0, %v2463
        %v2465 = vpop.f32.mrb[0].mxu0
        %2466 = vdwg.mxu0
        %v2467 = vsel %vm2345, %v2461, -inf
        %2468 = vmax.xlane.f32.xlu0 %v2467
        %v2469 = vpop.xlane.xlu0 %2468
        %v2470 = vsel %vm2345, %v2464, -inf
        %2471 = vmax.xlane.f32.xlu0 %v2470
        %v2472 = vpop.xlane.xlu0 %2471
        %v2473 = vsub.f32 %v2461, %v2469
        %v2474 = vsub.f32 %v2464, %v2472
        %v2475 = vmul.f32 %v2473, 1.442695
        %v2476 = vpow.pop %v2475
        %v2477 = vmul.f32 %v2474, 1.442695
        %v2478 = vpow.pop %v2477
        %v2479 = vsel %vm2345, %v2476, 0.0
        %2480 = vadd.xlane.f32.xlu0 %v2479
        %v2481 = vpop.xlane.xlu0 %2480
        %v2482 = vsel %vm2345, %v2478, 0.0
        %2483 = vadd.xlane.f32.xlu0 %v2482
        %v2484 = vpop.xlane.xlu0 %2483
        %v2485 = vrcp.pop %v2481
        %v2486 = vrcp.pop %v2484
        %v2487 = vmul.f32 %v2476, %v2485
        %v2488 = vmul.f32 %v2478, %v2486
        %v2489 = vpack.c.bf16 %v2488, %v2487
        %v2491 = vsel %vm2345, %v2489, 0
        %2493 = vmatprep.subr.bf16.mxu0 0
        %2494 = vmatpush1.bf16.msra.mxu0 %v2290
        %2495 = vmatprep.subr.bf16.mxu0 0
        %2496 = vmatpush1.bf16.msra.mxu0 0
        %2497 = vmatprep.subr.bf16.mxu0 0
        %2498 = vmatpush1.bf16.msra.mxu0 0
        %2499 = vmatprep.subr.bf16.mxu0 0
        %2500 = vmatpush1.bf16.msra.mxu0 0
        %2501 = vmatprep.subr.bf16.mxu0 0
        %2502 = vmatpush1.bf16.msra.mxu0 0
        %2503 = vmatprep.subr.bf16.mxu0 0
        %2504 = vmatpush1.bf16.msra.mxu0 0
        %2505 = vmatprep.subr.bf16.mxu0 0
        %2506 = vmatpush1.bf16.msra.mxu0 0
        %2507 = vmatprep.subr.bf16.mxu0 0
        %2508 = vmatpush1.bf16.msra.mxu0 0
        %2509 = vmatprep.subr.bf16.mxu0 0
        %2510 = vmatpush1.bf16.msra.mxu0 0
        %2511 = vmatprep.subr.bf16.mxu0 0
        %2512 = vmatpush1.bf16.msra.mxu0 0
        %2513 = vmatprep.subr.bf16.mxu0 0
        %2514 = vmatpush1.bf16.msra.mxu0 0
        %2515 = vmatprep.subr.bf16.mxu0 0
        %2516 = vmatpush1.bf16.msra.mxu0 0
        %2517 = vmatprep.subr.bf16.mxu0 0
        %2518 = vmatpush1.bf16.msra.mxu0 0
        %2519 = vmatprep.subr.bf16.mxu0 0
        %2520 = vmatpush1.bf16.msra.mxu0 0
        %2521 = vmatprep.subr.bf16.mxu0 0
        %2522 = vmatpush1.bf16.msra.mxu0 0
        %2523 = vmatprep.subr.bf16.mxu0 0
        %2524 = vmatpush1.bf16.msra.mxu0 0
        %2525 = vmatprep.mubr.bf16.mxu0 0
        %2526 = vmatmul.mubr.bf16.gmra.mrb[0].mxu0 %v2491
        %v2527 = vpop.f32.mrb[0].mxu0
        %v2528 = vadd.f32 0.0, %v2527
        %v2529 = vpop.f32.mrb[0].mxu0
        %v2530 = vpop.f32.mrb[0].mxu0
        %v2531 = vadd.f32 0.0, %v2530
        %v2532 = vpop.f32.mrb[0].mxu0
        %2533 = vdwg.mxu0
        %v2534 = vmul.f32 %v1799, %v2275
        %v2535 = vmul.f32 %v1803, %v2276
        %2536 = vrot.lane.b32.xlu0 %v1799, 64
        %v2537 = vpop.permute.xlu0 %2536
        %2538 = vrot.lane.b32.xlu0 %v1803, 64
        %v2539 = vpop.permute.xlu0 %2538
        %v2540 = vmul.f32 %v2537, %v2277
        %v2541 = vmul.f32 %v2539, %v2278
        %v2542 = vadd.f32 %v2534, %v2540
        %v2543 = vadd.f32 %v2535, %v2541
        %v2544 = vpack.c.bf16 %v2543, %v2542
        %v2545 = vpack.c.bf16 %v2273, %v2269
        %v2546 = vmul.f32 %v1327, %v2275
        %v2547 = vmul.f32 %v1331, %v2276
        %2548 = vrot.lane.b32.xlu0 %v1327, 64
        %v2549 = vpop.permute.xlu0 %2548
        %2550 = vrot.lane.b32.xlu0 %v1331, 64
        %v2551 = vpop.permute.xlu0 %2550
        %v2552 = vmul.f32 %v2549, %v2277
        %v2553 = vmul.f32 %v2551, %v2278
        %v2554 = vadd.f32 %v2546, %v2552
        %v2555 = vadd.f32 %v2547, %v2553
        %v2556 = vmul.f32 %v2554, 0.088388346
        %v2557 = vmul.f32 %v2555, 0.088388346
        %v2558 = vpack.c.bf16 %v2557, %v2556
        %2559 = vmatprep.subr.bf16.mxu0 0
        %2560 = vmatpush1.bf16.xpose.msra.mxu0 %v2544
        %2561 = vmatprep.subr.bf16.mxu0 0
        %2562 = vmatpush1.bf16.xpose.msra.mxu0 0
        %2563 = vmatprep.subr.bf16.mxu0 0
        %2564 = vmatpush1.bf16.xpose.msra.mxu0 0
        %2565 = vmatprep.subr.bf16.mxu0 0
        %2566 = vmatpush1.bf16.xpose.msra.mxu0 0
        %2567 = vmatprep.subr.bf16.mxu0 0
        %2568 = vmatpush1.bf16.xpose.msra.mxu0 0
        %2569 = vmatprep.subr.bf16.mxu0 0
        %2570 = vmatpush1.bf16.xpose.msra.mxu0 0
        %2571 = vmatprep.subr.bf16.mxu0 0
        %2572 = vmatpush1.bf16.xpose.msra.mxu0 0
        %2573 = vmatprep.subr.bf16.mxu0 0
        %2574 = vmatpush1.bf16.xpose.msra.mxu0 0
        %2575 = vmatprep.subr.bf16.mxu0 0
        %2576 = vmatpush1.bf16.xpose.msra.mxu0 0
        %2577 = vmatprep.subr.bf16.mxu0 0
        %2578 = vmatpush1.bf16.xpose.msra.mxu0 0
        %2579 = vmatprep.subr.bf16.mxu0 0
        %2580 = vmatpush1.bf16.xpose.msra.mxu0 0
        %2581 = vmatprep.subr.bf16.mxu0 0
        %2582 = vmatpush1.bf16.xpose.msra.mxu0 0
        %2583 = vmatprep.subr.bf16.mxu0 0
        %2584 = vmatpush1.bf16.xpose.msra.mxu0 0
        %2585 = vmatprep.subr.bf16.mxu0 0
        %2586 = vmatpush1.bf16.xpose.msra.mxu0 0
        %2587 = vmatprep.subr.bf16.mxu0 0
        %2588 = vmatpush1.bf16.xpose.msra.mxu0 0
        %2589 = vmatprep.subr.bf16.mxu0 0
        %2590 = vmatpush1.bf16.xpose.msra.mxu0 0
        %2591 = vmatprep.mubr.bf16.mxu0 0
        %2592 = vmatmul.mubr.bf16.gmra.mrb[0].mxu0 %v2558
        %v2593 = vpop.f32.mrb[0].mxu0
        %v2594 = vadd.f32 0.0, %v2593
        %v2595 = vpop.f32.mrb[0].mxu0
        %v2596 = vpop.f32.mrb[0].mxu0
        %v2597 = vadd.f32 0.0, %v2596
        %v2598 = vpop.f32.mrb[0].mxu0
        %2599 = vdwg.mxu0
        %v2600 = vsel %vm2345, %v2594, -inf
        %2601 = vmax.xlane.f32.xlu0 %v2600
        %v2602 = vpop.xlane.xlu0 %2601
        %v2603 = vsel %vm2345, %v2597, -inf
        %2604 = vmax.xlane.f32.xlu0 %v2603
        %v2605 = vpop.xlane.xlu0 %2604
        %v2606 = vsub.f32 %v2594, %v2602
        %v2607 = vsub.f32 %v2597, %v2605
        %v2608 = vmul.f32 %v2606, 1.442695
        %v2609 = vpow.pop %v2608
        %v2610 = vmul.f32 %v2607, 1.442695
        %v2611 = vpow.pop %v2610
        %v2612 = vsel %vm2345, %v2609, 0.0
        %2613 = vadd.xlane.f32.xlu0 %v2612
        %v2614 = vpop.xlane.xlu0 %2613
        %v2615 = vsel %vm2345, %v2611, 0.0
        %2616 = vadd.xlane.f32.xlu0 %v2615
        %v2617 = vpop.xlane.xlu0 %2616
        %v2618 = vrcp.pop %v2614
        %v2619 = vrcp.pop %v2617
        %v2620 = vmul.f32 %v2609, %v2618
        %v2621 = vmul.f32 %v2611, %v2619
        %v2622 = vpack.c.bf16 %v2621, %v2620
        %v2624 = vsel %vm2345, %v2622, 0
        %2626 = vmatprep.subr.bf16.mxu0 0
        %2627 = vmatpush1.bf16.msra.mxu0 %v2545
        %2628 = vmatprep.subr.bf16.mxu0 0
        %2629 = vmatpush1.bf16.msra.mxu0 0
        %2630 = vmatprep.subr.bf16.mxu0 0
        %2631 = vmatpush1.bf16.msra.mxu0 0
        %2632 = vmatprep.subr.bf16.mxu0 0
        %2633 = vmatpush1.bf16.msra.mxu0 0
        %2634 = vmatprep.subr.bf16.mxu0 0
        %2635 = vmatpush1.bf16.msra.mxu0 0
        %2636 = vmatprep.subr.bf16.mxu0 0
        %2637 = vmatpush1.bf16.msra.mxu0 0
        %2638 = vmatprep.subr.bf16.mxu0 0
        %2639 = vmatpush1.bf16.msra.mxu0 0
        %2640 = vmatprep.subr.bf16.mxu0 0
        %2641 = vmatpush1.bf16.msra.mxu0 0
        %2642 = vmatprep.subr.bf16.mxu0 0
        %2643 = vmatpush1.bf16.msra.mxu0 0
        %2644 = vmatprep.subr.bf16.mxu0 0
        %2645 = vmatpush1.bf16.msra.mxu0 0
        %2646 = vmatprep.subr.bf16.mxu0 0
        %2647 = vmatpush1.bf16.msra.mxu0 0
        %2648 = vmatprep.subr.bf16.mxu0 0
        %2649 = vmatpush1.bf16.msra.mxu0 0
        %2650 = vmatprep.subr.bf16.mxu0 0
        %2651 = vmatpush1.bf16.msra.mxu0 0
        %2652 = vmatprep.subr.bf16.mxu0 0
        %2653 = vmatpush1.bf16.msra.mxu0 0
        %2654 = vmatprep.subr.bf16.mxu0 0
        %2655 = vmatpush1.bf16.msra.mxu0 0
        %2656 = vmatprep.subr.bf16.mxu0 0
        %2657 = vmatpush1.bf16.msra.mxu0 0
        %2658 = vmatprep.mubr.bf16.mxu0 0
        %2659 = vmatmul.mubr.bf16.gmra.mrb[0].mxu0 %v2624
        %v2660 = vpop.f32.mrb[0].mxu0
        %v2661 = vadd.f32 0.0, %v2660
        %v2662 = vpop.f32.mrb[0].mxu0
        %v2663 = vpop.f32.mrb[0].mxu0
        %v2664 = vadd.f32 0.0, %v2663
        %v2665 = vpop.f32.mrb[0].mxu0
        %2666 = vdwg.mxu0
        %v2667 = vmul.f32 %v1329, %v2275
        %v2668 = vmul.f32 %v1333, %v2276
        %2669 = vrot.lane.b32.xlu0 %v1329, 64
        %v2670 = vpop.permute.xlu0 %2669
        %2671 = vrot.lane.b32.xlu0 %v1333, 64
        %v2672 = vpop.permute.xlu0 %2671
        %v2673 = vmul.f32 %v2670, %v2277
        %v2674 = vmul.f32 %v2672, %v2278
        %v2675 = vadd.f32 %v2667, %v2673
        %v2676 = vadd.f32 %v2668, %v2674
        %v2677 = vmul.f32 %v2675, 0.088388346
        %v2678 = vmul.f32 %v2676, 0.088388346
        %v2679 = vpack.c.bf16 %v2678, %v2677
        %2680 = vmatprep.subr.bf16.mxu0 0
        %2681 = vmatpush1.bf16.xpose.msra.mxu0 %v2544
        %2682 = vmatprep.subr.bf16.mxu0 0
        %2683 = vmatpush1.bf16.xpose.msra.mxu0 0
        %2684 = vmatprep.subr.bf16.mxu0 0
        %2685 = vmatpush1.bf16.xpose.msra.mxu0 0
        %2686 = vmatprep.subr.bf16.mxu0 0
        %2687 = vmatpush1.bf16.xpose.msra.mxu0 0
        %2688 = vmatprep.subr.bf16.mxu0 0
        %2689 = vmatpush1.bf16.xpose.msra.mxu0 0
        %2690 = vmatprep.subr.bf16.mxu0 0
        %2691 = vmatpush1.bf16.xpose.msra.mxu0 0
        %2692 = vmatprep.subr.bf16.mxu0 0
        %2693 = vmatpush1.bf16.xpose.msra.mxu0 0
        %2694 = vmatprep.subr.bf16.mxu0 0
        %2695 = vmatpush1.bf16.xpose.msra.mxu0 0
        %2696 = vmatprep.subr.bf16.mxu0 0
        %2697 = vmatpush1.bf16.xpose.msra.mxu0 0
        %2698 = vmatprep.subr.bf16.mxu0 0
        %2699 = vmatpush1.bf16.xpose.msra.mxu0 0
        %2700 = vmatprep.subr.bf16.mxu0 0
        %2701 = vmatpush1.bf16.xpose.msra.mxu0 0
        %2702 = vmatprep.subr.bf16.mxu0 0
        %2703 = vmatpush1.bf16.xpose.msra.mxu0 0
        %2704 = vmatprep.subr.bf16.mxu0 0
        %2705 = vmatpush1.bf16.xpose.msra.mxu0 0
        %2706 = vmatprep.subr.bf16.mxu0 0
        %2707 = vmatpush1.bf16.xpose.msra.mxu0 0
        %2708 = vmatprep.subr.bf16.mxu0 0
        %2709 = vmatpush1.bf16.xpose.msra.mxu0 0
        %2710 = vmatprep.subr.bf16.mxu0 0
        %2711 = vmatpush1.bf16.xpose.msra.mxu0 0
        %2712 = vmatprep.mubr.bf16.mxu0 0
        %2713 = vmatmul.mubr.bf16.gmra.mrb[0].mxu0 %v2679
        %v2714 = vpop.f32.mrb[0].mxu0
        %v2715 = vadd.f32 0.0, %v2714
        %v2716 = vpop.f32.mrb[0].mxu0
        %v2717 = vpop.f32.mrb[0].mxu0
        %v2718 = vadd.f32 0.0, %v2717
        %v2719 = vpop.f32.mrb[0].mxu0
        %2720 = vdwg.mxu0
        %v2721 = vsel %vm2345, %v2715, -inf
        %2722 = vmax.xlane.f32.xlu0 %v2721
        %v2723 = vpop.xlane.xlu0 %2722
        %v2724 = vsel %vm2345, %v2718, -inf
        %2725 = vmax.xlane.f32.xlu0 %v2724
        %v2726 = vpop.xlane.xlu0 %2725
        %v2727 = vsub.f32 %v2715, %v2723
        %v2728 = vsub.f32 %v2718, %v2726
        %v2729 = vmul.f32 %v2727, 1.442695
        %v2730 = vpow.pop %v2729
        %v2731 = vmul.f32 %v2728, 1.442695
        %v2732 = vpow.pop %v2731
        %v2733 = vsel %vm2345, %v2730, 0.0
        %2734 = vadd.xlane.f32.xlu0 %v2733
        %v2735 = vpop.xlane.xlu0 %2734
        %v2736 = vsel %vm2345, %v2732, 0.0
        %2737 = vadd.xlane.f32.xlu0 %v2736
        %v2738 = vpop.xlane.xlu0 %2737
        %v2739 = vrcp.pop %v2735
        %v2740 = vrcp.pop %v2738
        %v2741 = vmul.f32 %v2730, %v2739
        %v2742 = vmul.f32 %v2732, %v2740
        %v2743 = vpack.c.bf16 %v2742, %v2741
        %v2745 = vsel %vm2345, %v2743, 0
        %2747 = vmatprep.subr.bf16.mxu0 0
        %2748 = vmatpush1.bf16.msra.mxu0 %v2545
        %2749 = vmatprep.subr.bf16.mxu0 0
        %2750 = vmatpush1.bf16.msra.mxu0 0
        %2751 = vmatprep.subr.bf16.mxu0 0
        %2752 = vmatpush1.bf16.msra.mxu0 0
        %2753 = vmatprep.subr.bf16.mxu0 0
        %2754 = vmatpush1.bf16.msra.mxu0 0
        %2755 = vmatprep.subr.bf16.mxu0 0
        %2756 = vmatpush1.bf16.msra.mxu0 0
        %2757 = vmatprep.subr.bf16.mxu0 0
        %2758 = vmatpush1.bf16.msra.mxu0 0
        %2759 = vmatprep.subr.bf16.mxu0 0
        %2760 = vmatpush1.bf16.msra.mxu0 0
        %2761 = vmatprep.subr.bf16.mxu0 0
        %2762 = vmatpush1.bf16.msra.mxu0 0
        %2763 = vmatprep.subr.bf16.mxu0 0
        %2764 = vmatpush1.bf16.msra.mxu0 0
        %2765 = vmatprep.subr.bf16.mxu0 0
        %2766 = vmatpush1.bf16.msra.mxu0 0
        %2767 = vmatprep.subr.bf16.mxu0 0
        %2768 = vmatpush1.bf16.msra.mxu0 0
        %2769 = vmatprep.subr.bf16.mxu0 0
        %2770 = vmatpush1.bf16.msra.mxu0 0
        %2771 = vmatprep.subr.bf16.mxu0 0
        %2772 = vmatpush1.bf16.msra.mxu0 0
        %2773 = vmatprep.subr.bf16.mxu0 0
        %2774 = vmatpush1.bf16.msra.mxu0 0
        %2775 = vmatprep.subr.bf16.mxu0 0
        %2776 = vmatpush1.bf16.msra.mxu0 0
        %2777 = vmatprep.subr.bf16.mxu0 0
        %2778 = vmatpush1.bf16.msra.mxu0 0
        %2779 = vmatprep.mubr.bf16.mxu0 0
        %2780 = vmatmul.mubr.bf16.gmra.mrb[0].mxu0 %v2745
        %v2781 = vpop.f32.mrb[0].mxu0
        %v2782 = vadd.f32 0.0, %v2781
        %v2783 = vpop.f32.mrb[0].mxu0
        %v2784 = vpop.f32.mrb[0].mxu0
        %v2785 = vadd.f32 0.0, %v2784
        %v2786 = vpop.f32.mrb[0].mxu0
        %2787 = vdwg.mxu0
        %v2788 = vpack.c.bf16 %v2410, %v2407
        %v2789 = vpack.c.bf16 %v2531, %v2528
        %v2790 = vpack.c.bf16 %v2664, %v2661
        %v2791 = vpack.c.bf16 %v2785, %v2782
        %v2792 = vld [vmem:[#allocation10] sm:$0xff]
        %v2793 = vld [vmem:[#allocation10 + $0x8] sm:$0xff]
        %v2794 = vld [vmem:[#allocation10 + $0x10] sm:$0xff]
        %v2795 = vld [vmem:[#allocation10 + $0x18] sm:$0xff]
        %v2796 = vld [vmem:[#allocation10 + $0x20] sm:$0xff]
        %v2797 = vld [vmem:[#allocation10 + $0x28] sm:$0xff]
        %v2798 = vld [vmem:[#allocation10 + $0x30] sm:$0xff]
        %v2799 = vld [vmem:[#allocation10 + $0x38] sm:$0xff]
        %v2800 = vld [vmem:[#allocation10 + $0x40] sm:$0xff]
        %v2801 = vld [vmem:[#allocation10 + $0x48] sm:$0xff]
        %v2802 = vld [vmem:[#allocation10 + $0x50] sm:$0xff]
        %v2803 = vld [vmem:[#allocation10 + $0x58] sm:$0xff]
        %v2804 = vld [vmem:[#allocation10 + $0x60] sm:$0xff]
        %v2805 = vld [vmem:[#allocation10 + $0x68] sm:$0xff]
        %v2806 = vld [vmem:[#allocation10 + $0x70] sm:$0xff]
        %v2807 = vld [vmem:[#allocation10 + $0x78] sm:$0xff]
        %v2808 = vld [vmem:[#allocation10 + $0x80] sm:$0xff]
        %v2809 = vld [vmem:[#allocation10 + $0x88] sm:$0xff]
        %v2810 = vld [vmem:[#allocation10 + $0x90] sm:$0xff]
        %v2811 = vld [vmem:[#allocation10 + $0x98] sm:$0xff]
        %v2812 = vld [vmem:[#allocation10 + $0xa0] sm:$0xff]
        %v2813 = vld [vmem:[#allocation10 + $0xa8] sm:$0xff]
        %v2814 = vld [vmem:[#allocation10 + $0xb0] sm:$0xff]
        %v2815 = vld [vmem:[#allocation10 + $0xb8] sm:$0xff]
        %v2816 = vld [vmem:[#allocation10 + $0xc0] sm:$0xff]
        %v2817 = vld [vmem:[#allocation10 + $0xc8] sm:$0xff]
        %v2818 = vld [vmem:[#allocation10 + $0xd0] sm:$0xff]
        %v2819 = vld [vmem:[#allocation10 + $0xd8] sm:$0xff]
        %v2820 = vld [vmem:[#allocation10 + $0xe0] sm:$0xff]
        %v2821 = vld [vmem:[#allocation10 + $0xe8] sm:$0xff]
        %v2822 = vld [vmem:[#allocation10 + $0xf0] sm:$0xff]
        %v2823 = vld [vmem:[#allocation10 + $0xf8] sm:$0xff]
        %v2824 = vld [vmem:[#allocation10 + $0x100] sm:$0xff]
        %v2825 = vld [vmem:[#allocation10 + $0x108] sm:$0xff]
        %v2826 = vld [vmem:[#allocation10 + $0x110] sm:$0xff]
        %v2827 = vld [vmem:[#allocation10 + $0x118] sm:$0xff]
        %v2828 = vld [vmem:[#allocation10 + $0x120] sm:$0xff]
        %v2829 = vld [vmem:[#allocation10 + $0x128] sm:$0xff]
        %v2830 = vld [vmem:[#allocation10 + $0x130] sm:$0xff]
        %v2831 = vld [vmem:[#allocation10 + $0x138] sm:$0xff]
        %v2832 = vld [vmem:[#allocation10 + $0x140] sm:$0xff]
        %v2833 = vld [vmem:[#allocation10 + $0x148] sm:$0xff]
        %v2834 = vld [vmem:[#allocation10 + $0x150] sm:$0xff]
        %v2835 = vld [vmem:[#allocation10 + $0x158] sm:$0xff]
        %v2836 = vld [vmem:[#allocation10 + $0x160] sm:$0xff]
        %v2837 = vld [vmem:[#allocation10 + $0x168] sm:$0xff]
        %v2838 = vld [vmem:[#allocation10 + $0x170] sm:$0xff]
        %v2839 = vld [vmem:[#allocation10 + $0x178] sm:$0xff]
        %v2840 = vld [vmem:[#allocation10 + $0x180] sm:$0xff]
        %v2841 = vld [vmem:[#allocation10 + $0x188] sm:$0xff]
        %v2842 = vld [vmem:[#allocation10 + $0x190] sm:$0xff]
        %v2843 = vld [vmem:[#allocation10 + $0x198] sm:$0xff]
        %v2844 = vld [vmem:[#allocation10 + $0x1a0] sm:$0xff]
        %v2845 = vld [vmem:[#allocation10 + $0x1a8] sm:$0xff]
        %v2846 = vld [vmem:[#allocation10 + $0x1b0] sm:$0xff]
        %v2847 = vld [vmem:[#allocation10 + $0x1b8] sm:$0xff]
        %v2848 = vld [vmem:[#allocation10 + $0x1c0] sm:$0xff]
        %v2849 = vld [vmem:[#allocation10 + $0x1c8] sm:$0xff]
        %v2850 = vld [vmem:[#allocation10 + $0x1d0] sm:$0xff]
        %v2851 = vld [vmem:[#allocation10 + $0x1d8] sm:$0xff]
        %v2852 = vld [vmem:[#allocation10 + $0x1e0] sm:$0xff]
        %v2853 = vld [vmem:[#allocation10 + $0x1e8] sm:$0xff]
        %v2854 = vld [vmem:[#allocation10 + $0x1f0] sm:$0xff]
        %v2855 = vld [vmem:[#allocation10 + $0x1f8] sm:$0xff]
        %v2856 = vld [vmem:[#allocation10 + $0x200] sm:$0xff]
        %v2857 = vld [vmem:[#allocation10 + $0x208] sm:$0xff]
        %v2858 = vld [vmem:[#allocation10 + $0x210] sm:$0xff]
        %v2859 = vld [vmem:[#allocation10 + $0x218] sm:$0xff]
        %v2860 = vld [vmem:[#allocation10 + $0x220] sm:$0xff]
        %v2861 = vld [vmem:[#allocation10 + $0x228] sm:$0xff]
        %v2862 = vld [vmem:[#allocation10 + $0x230] sm:$0xff]
        %v2863 = vld [vmem:[#allocation10 + $0x238] sm:$0xff]
        %v2864 = vld [vmem:[#allocation10 + $0x240] sm:$0xff]
        %v2865 = vld [vmem:[#allocation10 + $0x248] sm:$0xff]
        %v2866 = vld [vmem:[#allocation10 + $0x250] sm:$0xff]
        %v2867 = vld [vmem:[#allocation10 + $0x258] sm:$0xff]
        %v2868 = vld [vmem:[#allocation10 + $0x260] sm:$0xff]
        %v2869 = vld [vmem:[#allocation10 + $0x268] sm:$0xff]
        %v2870 = vld [vmem:[#allocation10 + $0x270] sm:$0xff]
        %v2871 = vld [vmem:[#allocation10 + $0x278] sm:$0xff]
        %v2872 = vld [vmem:[#allocation10 + $0x280] sm:$0xff]
        %v2873 = vld [vmem:[#allocation10 + $0x288] sm:$0xff]
        %v2874 = vld [vmem:[#allocation10 + $0x290] sm:$0xff]
        %v2875 = vld [vmem:[#allocation10 + $0x298] sm:$0xff]
        %v2876 = vld [vmem:[#allocation10 + $0x2a0] sm:$0xff]
        %v2877 = vld [vmem:[#allocation10 + $0x2a8] sm:$0xff]
        %v2878 = vld [vmem:[#allocation10 + $0x2b0] sm:$0xff]
        %v2879 = vld [vmem:[#allocation10 + $0x2b8] sm:$0xff]
        %v2880 = vld [vmem:[#allocation10 + $0x2c0] sm:$0xff]
        %v2881 = vld [vmem:[#allocation10 + $0x2c8] sm:$0xff]
        %v2882 = vld [vmem:[#allocation10 + $0x2d0] sm:$0xff]
        %v2883 = vld [vmem:[#allocation10 + $0x2d8] sm:$0xff]
        %v2884 = vld [vmem:[#allocation10 + $0x2e0] sm:$0xff]
        %v2885 = vld [vmem:[#allocation10 + $0x2e8] sm:$0xff]
        %v2886 = vld [vmem:[#allocation10 + $0x2f0] sm:$0xff]
        %v2887 = vld [vmem:[#allocation10 + $0x2f8] sm:$0xff]
        %v2888 = vld [vmem:[#allocation10 + $0x300] sm:$0xff]
        %v2889 = vld [vmem:[#allocation10 + $0x308] sm:$0xff]
        %v2890 = vld [vmem:[#allocation10 + $0x310] sm:$0xff]
        %v2891 = vld [vmem:[#allocation10 + $0x318] sm:$0xff]
        %v2892 = vld [vmem:[#allocation10 + $0x320] sm:$0xff]
        %v2893 = vld [vmem:[#allocation10 + $0x328] sm:$0xff]
        %v2894 = vld [vmem:[#allocation10 + $0x330] sm:$0xff]
        %v2895 = vld [vmem:[#allocation10 + $0x338] sm:$0xff]
        %v2896 = vld [vmem:[#allocation10 + $0x340] sm:$0xff]
        %v2897 = vld [vmem:[#allocation10 + $0x348] sm:$0xff]
        %v2898 = vld [vmem:[#allocation10 + $0x350] sm:$0xff]
        %v2899 = vld [vmem:[#allocation10 + $0x358] sm:$0xff]
        %v2900 = vld [vmem:[#allocation10 + $0x360] sm:$0xff]
        %v2901 = vld [vmem:[#allocation10 + $0x368] sm:$0xff]
        %v2902 = vld [vmem:[#allocation10 + $0x370] sm:$0xff]
        %v2903 = vld [vmem:[#allocation10 + $0x378] sm:$0xff]
        %v2904 = vld [vmem:[#allocation10 + $0x380] sm:$0xff]
        %v2905 = vld [vmem:[#allocation10 + $0x388] sm:$0xff]
        %v2906 = vld [vmem:[#allocation10 + $0x390] sm:$0xff]
        %v2907 = vld [vmem:[#allocation10 + $0x398] sm:$0xff]
        %v2908 = vld [vmem:[#allocation10 + $0x3a0] sm:$0xff]
        %v2909 = vld [vmem:[#allocation10 + $0x3a8] sm:$0xff]
        %v2910 = vld [vmem:[#allocation10 + $0x3b0] sm:$0xff]
        %v2911 = vld [vmem:[#allocation10 + $0x3b8] sm:$0xff]
        %v2912 = vld [vmem:[#allocation10 + $0x3c0] sm:$0xff]
        %v2913 = vld [vmem:[#allocation10 + $0x3c8] sm:$0xff]
        %v2914 = vld [vmem:[#allocation10 + $0x3d0] sm:$0xff]
        %v2915 = vld [vmem:[#allocation10 + $0x3d8] sm:$0xff]
        %v2916 = vld [vmem:[#allocation10 + $0x3e0] sm:$0xff]
        %v2917 = vld [vmem:[#allocation10 + $0x3e8] sm:$0xff]
        %v2918 = vld [vmem:[#allocation10 + $0x3f0] sm:$0xff]
        %v2919 = vld [vmem:[#allocation10 + $0x3f8] sm:$0xff]
        %v3048 = vunpack.c.l.b16 %v2792
        %v3049 = vunpack.c.h.b16 %v2792
        %v3050 = vunpack.c.l.b16 %v2793
        %v3051 = vunpack.c.h.b16 %v2793
        %v3052 = vunpack.c.l.b16 %v2794
        %v3053 = vunpack.c.h.b16 %v2794
        %v3054 = vunpack.c.l.b16 %v2795
        %v3055 = vunpack.c.h.b16 %v2795
        %v3056 = vunpack.c.l.b16 %v2796
        %v3057 = vunpack.c.h.b16 %v2796
        %v3058 = vunpack.c.l.b16 %v2797
        %v3059 = vunpack.c.h.b16 %v2797
        %v3060 = vunpack.c.l.b16 %v2798
        %v3061 = vunpack.c.h.b16 %v2798
        %v3062 = vunpack.c.l.b16 %v2799
        %v3063 = vunpack.c.h.b16 %v2799
        %v3064 = vunpack.c.l.b16 %v2800
        %v3065 = vunpack.c.h.b16 %v2800
        %v3066 = vunpack.c.l.b16 %v2801
        %v3067 = vunpack.c.h.b16 %v2801
        %v3068 = vunpack.c.l.b16 %v2802
        %v3069 = vunpack.c.h.b16 %v2802
        %v3070 = vunpack.c.l.b16 %v2803
        %v3071 = vunpack.c.h.b16 %v2803
        %v3072 = vunpack.c.l.b16 %v2804
        %v3073 = vunpack.c.h.b16 %v2804
        %v3074 = vunpack.c.l.b16 %v2805
        %v3075 = vunpack.c.h.b16 %v2805
        %v3076 = vunpack.c.l.b16 %v2806
        %v3077 = vunpack.c.h.b16 %v2806
        %v3078 = vunpack.c.l.b16 %v2807
        %v3079 = vunpack.c.h.b16 %v2807
        %v3080 = vunpack.c.l.b16 %v2808
        %v3081 = vunpack.c.h.b16 %v2808
        %v3082 = vunpack.c.l.b16 %v2809
        %v3083 = vunpack.c.h.b16 %v2809
        %v3084 = vunpack.c.l.b16 %v2810
        %v3085 = vunpack.c.h.b16 %v2810
        %v3086 = vunpack.c.l.b16 %v2811
        %v3087 = vunpack.c.h.b16 %v2811
        %v3088 = vunpack.c.l.b16 %v2812
        %v3089 = vunpack.c.h.b16 %v2812
        %v3090 = vunpack.c.l.b16 %v2813
        %v3091 = vunpack.c.h.b16 %v2813
        %v3092 = vunpack.c.l.b16 %v2814
        %v3093 = vunpack.c.h.b16 %v2814
        %v3094 = vunpack.c.l.b16 %v2815
        %v3095 = vunpack.c.h.b16 %v2815
        %v3096 = vunpack.c.l.b16 %v2816
        %v3097 = vunpack.c.h.b16 %v2816
        %v3098 = vunpack.c.l.b16 %v2817
        %v3099 = vunpack.c.h.b16 %v2817
        %v3100 = vunpack.c.l.b16 %v2818
        %v3101 = vunpack.c.h.b16 %v2818
        %v3102 = vunpack.c.l.b16 %v2819
        %v3103 = vunpack.c.h.b16 %v2819
        %v3104 = vunpack.c.l.b16 %v2820
        %v3105 = vunpack.c.h.b16 %v2820
        %v3106 = vunpack.c.l.b16 %v2821
        %v3107 = vunpack.c.h.b16 %v2821
        %v3108 = vunpack.c.l.b16 %v2822
        %v3109 = vunpack.c.h.b16 %v2822
        %v3110 = vunpack.c.l.b16 %v2823
        %v3111 = vunpack.c.h.b16 %v2823
        %v3112 = vunpack.c.l.b16 %v2824
        %v3113 = vunpack.c.h.b16 %v2824
        %v3114 = vunpack.c.l.b16 %v2825
        %v3115 = vunpack.c.h.b16 %v2825
        %v3116 = vunpack.c.l.b16 %v2826
        %v3117 = vunpack.c.h.b16 %v2826
        %v3118 = vunpack.c.l.b16 %v2827
        %v3119 = vunpack.c.h.b16 %v2827
        %v3120 = vunpack.c.l.b16 %v2828
        %v3121 = vunpack.c.h.b16 %v2828
        %v3122 = vunpack.c.l.b16 %v2829
        %v3123 = vunpack.c.h.b16 %v2829
        %v3124 = vunpack.c.l.b16 %v2830
        %v3125 = vunpack.c.h.b16 %v2830
        %v3126 = vunpack.c.l.b16 %v2831
        %v3127 = vunpack.c.h.b16 %v2831
        %v3128 = vunpack.c.l.b16 %v2832
        %v3129 = vunpack.c.h.b16 %v2832
        %v3130 = vunpack.c.l.b16 %v2833
        %v3131 = vunpack.c.h.b16 %v2833
        %v3132 = vunpack.c.l.b16 %v2834
        %v3133 = vunpack.c.h.b16 %v2834
        %v3134 = vunpack.c.l.b16 %v2835
        %v3135 = vunpack.c.h.b16 %v2835
        %v3136 = vunpack.c.l.b16 %v2836
        %v3137 = vunpack.c.h.b16 %v2836
        %v3138 = vunpack.c.l.b16 %v2837
        %v3139 = vunpack.c.h.b16 %v2837
        %v3140 = vunpack.c.l.b16 %v2838
        %v3141 = vunpack.c.h.b16 %v2838
        %v3142 = vunpack.c.l.b16 %v2839
        %v3143 = vunpack.c.h.b16 %v2839
        %v3144 = vunpack.c.l.b16 %v2840
        %v3145 = vunpack.c.h.b16 %v2840
        %v3146 = vunpack.c.l.b16 %v2841
        %v3147 = vunpack.c.h.b16 %v2841
        %v3148 = vunpack.c.l.b16 %v2842
        %v3149 = vunpack.c.h.b16 %v2842
        %v3150 = vunpack.c.l.b16 %v2843
        %v3151 = vunpack.c.h.b16 %v2843
        %v3152 = vunpack.c.l.b16 %v2844
        %v3153 = vunpack.c.h.b16 %v2844
        %v3154 = vunpack.c.l.b16 %v2845
        %v3155 = vunpack.c.h.b16 %v2845
        %v3156 = vunpack.c.l.b16 %v2846
        %v3157 = vunpack.c.h.b16 %v2846
        %v3158 = vunpack.c.l.b16 %v2847
        %v3159 = vunpack.c.h.b16 %v2847
        %v3160 = vunpack.c.l.b16 %v2848
        %v3161 = vunpack.c.h.b16 %v2848
        %v3162 = vunpack.c.l.b16 %v2849
        %v3163 = vunpack.c.h.b16 %v2849
        %v3164 = vunpack.c.l.b16 %v2850
        %v3165 = vunpack.c.h.b16 %v2850
        %v3166 = vunpack.c.l.b16 %v2851
        %v3167 = vunpack.c.h.b16 %v2851
        %v3168 = vunpack.c.l.b16 %v2852
        %v3169 = vunpack.c.h.b16 %v2852
        %v3170 = vunpack.c.l.b16 %v2853
        %v3171 = vunpack.c.h.b16 %v2853
        %v3172 = vunpack.c.l.b16 %v2854
        %v3173 = vunpack.c.h.b16 %v2854
        %v3174 = vunpack.c.l.b16 %v2855
        %v3175 = vunpack.c.h.b16 %v2855
        %v3176 = vunpack.c.l.b16 %v2856
        %v3177 = vunpack.c.h.b16 %v2856
        %v3178 = vunpack.c.l.b16 %v2857
        %v3179 = vunpack.c.h.b16 %v2857
        %v3180 = vunpack.c.l.b16 %v2858
        %v3181 = vunpack.c.h.b16 %v2858
        %v3182 = vunpack.c.l.b16 %v2859
        %v3183 = vunpack.c.h.b16 %v2859
        %v3184 = vunpack.c.l.b16 %v2860
        %v3185 = vunpack.c.h.b16 %v2860
        %v3186 = vunpack.c.l.b16 %v2861
        %v3187 = vunpack.c.h.b16 %v2861
        %v3188 = vunpack.c.l.b16 %v2862
        %v3189 = vunpack.c.h.b16 %v2862
        %v3190 = vunpack.c.l.b16 %v2863
        %v3191 = vunpack.c.h.b16 %v2863
        %v3192 = vunpack.c.l.b16 %v2864
        %v3193 = vunpack.c.h.b16 %v2864
        %v3194 = vunpack.c.l.b16 %v2865
        %v3195 = vunpack.c.h.b16 %v2865
        %v3196 = vunpack.c.l.b16 %v2866
        %v3197 = vunpack.c.h.b16 %v2866
        %v3198 = vunpack.c.l.b16 %v2867
        %v3199 = vunpack.c.h.b16 %v2867
        %v3200 = vunpack.c.l.b16 %v2868
        %v3201 = vunpack.c.h.b16 %v2868
        %v3202 = vunpack.c.l.b16 %v2869
        %v3203 = vunpack.c.h.b16 %v2869
        %v3204 = vunpack.c.l.b16 %v2870
        %v3205 = vunpack.c.h.b16 %v2870
        %v3206 = vunpack.c.l.b16 %v2871
        %v3207 = vunpack.c.h.b16 %v2871
        %v3208 = vunpack.c.l.b16 %v2872
        %v3209 = vunpack.c.h.b16 %v2872
        %v3210 = vunpack.c.l.b16 %v2873
        %v3211 = vunpack.c.h.b16 %v2873
        %v3212 = vunpack.c.l.b16 %v2874
        %v3213 = vunpack.c.h.b16 %v2874
        %v3214 = vunpack.c.l.b16 %v2875
        %v3215 = vunpack.c.h.b16 %v2875
        %v3216 = vunpack.c.l.b16 %v2876
        %v3217 = vunpack.c.h.b16 %v2876
        %v3218 = vunpack.c.l.b16 %v2877
        %v3219 = vunpack.c.h.b16 %v2877
        %v3220 = vunpack.c.l.b16 %v2878
        %v3221 = vunpack.c.h.b16 %v2878
        %v3222 = vunpack.c.l.b16 %v2879
        %v3223 = vunpack.c.h.b16 %v2879
        %v3224 = vunpack.c.l.b16 %v2880
        %v3225 = vunpack.c.h.b16 %v2880
        %v3226 = vunpack.c.l.b16 %v2881
        %v3227 = vunpack.c.h.b16 %v2881
        %v3228 = vunpack.c.l.b16 %v2882
        %v3229 = vunpack.c.h.b16 %v2882
        %v3230 = vunpack.c.l.b16 %v2883
        %v3231 = vunpack.c.h.b16 %v2883
        %v3232 = vunpack.c.l.b16 %v2884
        %v3233 = vunpack.c.h.b16 %v2884
        %v3234 = vunpack.c.l.b16 %v2885
        %v3235 = vunpack.c.h.b16 %v2885
        %v3236 = vunpack.c.l.b16 %v2886
        %v3237 = vunpack.c.h.b16 %v2886
        %v3238 = vunpack.c.l.b16 %v2887
        %v3239 = vunpack.c.h.b16 %v2887
        %v3240 = vunpack.c.l.b16 %v2888
        %v3241 = vunpack.c.h.b16 %v2888
        %v3242 = vunpack.c.l.b16 %v2889
        %v3243 = vunpack.c.h.b16 %v2889
        %v3244 = vunpack.c.l.b16 %v2890
        %v3245 = vunpack.c.h.b16 %v2890
        %v3246 = vunpack.c.l.b16 %v2891
        %v3247 = vunpack.c.h.b16 %v2891
        %v3248 = vunpack.c.l.b16 %v2892
        %v3249 = vunpack.c.h.b16 %v2892
        %v3250 = vunpack.c.l.b16 %v2893
        %v3251 = vunpack.c.h.b16 %v2893
        %v3252 = vunpack.c.l.b16 %v2894
        %v3253 = vunpack.c.h.b16 %v2894
        %v3254 = vunpack.c.l.b16 %v2895
        %v3255 = vunpack.c.h.b16 %v2895
        %v3256 = vunpack.c.l.b16 %v2896
        %v3257 = vunpack.c.h.b16 %v2896
        %v3258 = vunpack.c.l.b16 %v2897
        %v3259 = vunpack.c.h.b16 %v2897
        %v3260 = vunpack.c.l.b16 %v2898
        %v3261 = vunpack.c.h.b16 %v2898
        %v3262 = vunpack.c.l.b16 %v2899
        %v3263 = vunpack.c.h.b16 %v2899
        %v3264 = vunpack.c.l.b16 %v2900
        %v3265 = vunpack.c.h.b16 %v2900
        %v3266 = vunpack.c.l.b16 %v2901
        %v3267 = vunpack.c.h.b16 %v2901
        %v3268 = vunpack.c.l.b16 %v2902
        %v3269 = vunpack.c.h.b16 %v2902
        %v3270 = vunpack.c.l.b16 %v2903
        %v3271 = vunpack.c.h.b16 %v2903
        %v3272 = vunpack.c.l.b16 %v2904
        %v3273 = vunpack.c.h.b16 %v2904
        %v3274 = vunpack.c.l.b16 %v2905
        %v3275 = vunpack.c.h.b16 %v2905
        %v3276 = vunpack.c.l.b16 %v2906
        %v3277 = vunpack.c.h.b16 %v2906
        %v3278 = vunpack.c.l.b16 %v2907
        %v3279 = vunpack.c.h.b16 %v2907
        %v3280 = vunpack.c.l.b16 %v2908
        %v3281 = vunpack.c.h.b16 %v2908
        %v3282 = vunpack.c.l.b16 %v2909
        %v3283 = vunpack.c.h.b16 %v2909
        %v3284 = vunpack.c.l.b16 %v2910
        %v3285 = vunpack.c.h.b16 %v2910
        %v3286 = vunpack.c.l.b16 %v2911
        %v3287 = vunpack.c.h.b16 %v2911
        %v3288 = vunpack.c.l.b16 %v2912
        %v3289 = vunpack.c.h.b16 %v2912
        %v3290 = vunpack.c.l.b16 %v2913
        %v3291 = vunpack.c.h.b16 %v2913
        %v3292 = vunpack.c.l.b16 %v2914
        %v3293 = vunpack.c.h.b16 %v2914
        %v3294 = vunpack.c.l.b16 %v2915
        %v3295 = vunpack.c.h.b16 %v2915
        %v3296 = vunpack.c.l.b16 %v2916
        %v3297 = vunpack.c.h.b16 %v2916
        %v3298 = vunpack.c.l.b16 %v2917
        %v3299 = vunpack.c.h.b16 %v2917
        %v3300 = vunpack.c.l.b16 %v2918
        %v3301 = vunpack.c.h.b16 %v2918
        %v3302 = vunpack.c.l.b16 %v2919
        %v3303 = vunpack.c.h.b16 %v2919
        %v3304 = vpack.c.b16 %v3052, %v3048
        %v3305 = vpack.c.b16 %v3053, %v3049
        %v3306 = vpack.c.b16 %v3054, %v3050
        %v3307 = vpack.c.b16 %v3055, %v3051
        %v3308 = vpack.c.b16 %v3060, %v3056
        %v3309 = vpack.c.b16 %v3061, %v3057
        %v3310 = vpack.c.b16 %v3062, %v3058
        %v3311 = vpack.c.b16 %v3063, %v3059
        %v3312 = vpack.c.b16 %v3068, %v3064
        %v3313 = vpack.c.b16 %v3069, %v3065
        %v3314 = vpack.c.b16 %v3070, %v3066
        %v3315 = vpack.c.b16 %v3071, %v3067
        %v3316 = vpack.c.b16 %v3076, %v3072
        %v3317 = vpack.c.b16 %v3077, %v3073
        %v3318 = vpack.c.b16 %v3078, %v3074
        %v3319 = vpack.c.b16 %v3079, %v3075
        %v3320 = vpack.c.b16 %v3084, %v3080
        %v3321 = vpack.c.b16 %v3085, %v3081
        %v3322 = vpack.c.b16 %v3086, %v3082
        %v3323 = vpack.c.b16 %v3087, %v3083
        %v3324 = vpack.c.b16 %v3092, %v3088
        %v3325 = vpack.c.b16 %v3093, %v3089
        %v3326 = vpack.c.b16 %v3094, %v3090
        %v3327 = vpack.c.b16 %v3095, %v3091
        %v3328 = vpack.c.b16 %v3100, %v3096
        %v3329 = vpack.c.b16 %v3101, %v3097
        %v3330 = vpack.c.b16 %v3102, %v3098
        %v3331 = vpack.c.b16 %v3103, %v3099
        %v3332 = vpack.c.b16 %v3108, %v3104
        %v3333 = vpack.c.b16 %v3109, %v3105
        %v3334 = vpack.c.b16 %v3110, %v3106
        %v3335 = vpack.c.b16 %v3111, %v3107
        %v3336 = vpack.c.b16 %v3116, %v3112
        %v3337 = vpack.c.b16 %v3117, %v3113
        %v3338 = vpack.c.b16 %v3118, %v3114
        %v3339 = vpack.c.b16 %v3119, %v3115
        %v3340 = vpack.c.b16 %v3124, %v3120
        %v3341 = vpack.c.b16 %v3125, %v3121
        %v3342 = vpack.c.b16 %v3126, %v3122
        %v3343 = vpack.c.b16 %v3127, %v3123
        %v3344 = vpack.c.b16 %v3132, %v3128
        %v3345 = vpack.c.b16 %v3133, %v3129
        %v3346 = vpack.c.b16 %v3134, %v3130
        %v3347 = vpack.c.b16 %v3135, %v3131
        %v3348 = vpack.c.b16 %v3140, %v3136
        %v3349 = vpack.c.b16 %v3141, %v3137
        %v3350 = vpack.c.b16 %v3142, %v3138
        %v3351 = vpack.c.b16 %v3143, %v3139
        %v3352 = vpack.c.b16 %v3148, %v3144
        %v3353 = vpack.c.b16 %v3149, %v3145
        %v3354 = vpack.c.b16 %v3150, %v3146
        %v3355 = vpack.c.b16 %v3151, %v3147
        %v3356 = vpack.c.b16 %v3156, %v3152
        %v3357 = vpack.c.b16 %v3157, %v3153
        %v3358 = vpack.c.b16 %v3158, %v3154
        %v3359 = vpack.c.b16 %v3159, %v3155
        %v3360 = vpack.c.b16 %v3164, %v3160
        %v3361 = vpack.c.b16 %v3165, %v3161
        %v3362 = vpack.c.b16 %v3166, %v3162
        %v3363 = vpack.c.b16 %v3167, %v3163
        %v3364 = vpack.c.b16 %v3172, %v3168
        %v3365 = vpack.c.b16 %v3173, %v3169
        %v3366 = vpack.c.b16 %v3174, %v3170
        %v3367 = vpack.c.b16 %v3175, %v3171
        %v3368 = vpack.c.b16 %v3180, %v3176
        %v3369 = vpack.c.b16 %v3181, %v3177
        %v3370 = vpack.c.b16 %v3182, %v3178
        %v3371 = vpack.c.b16 %v3183, %v3179
        %v3372 = vpack.c.b16 %v3188, %v3184
        %v3373 = vpack.c.b16 %v3189, %v3185
        %v3374 = vpack.c.b16 %v3190, %v3186
        %v3375 = vpack.c.b16 %v3191, %v3187
        %v3376 = vpack.c.b16 %v3196, %v3192
        %v3377 = vpack.c.b16 %v3197, %v3193
        %v3378 = vpack.c.b16 %v3198, %v3194
        %v3379 = vpack.c.b16 %v3199, %v3195
        %v3380 = vpack.c.b16 %v3204, %v3200
        %v3381 = vpack.c.b16 %v3205, %v3201
        %v3382 = vpack.c.b16 %v3206, %v3202
        %v3383 = vpack.c.b16 %v3207, %v3203
        %v3384 = vpack.c.b16 %v3212, %v3208
        %v3385 = vpack.c.b16 %v3213, %v3209
        %v3386 = vpack.c.b16 %v3214, %v3210
        %v3387 = vpack.c.b16 %v3215, %v3211
        %v3388 = vpack.c.b16 %v3220, %v3216
        %v3389 = vpack.c.b16 %v3221, %v3217
        %v3390 = vpack.c.b16 %v3222, %v3218
        %v3391 = vpack.c.b16 %v3223, %v3219
        %v3392 = vpack.c.b16 %v3228, %v3224
        %v3393 = vpack.c.b16 %v3229, %v3225
        %v3394 = vpack.c.b16 %v3230, %v3226
        %v3395 = vpack.c.b16 %v3231, %v3227
        %v3396 = vpack.c.b16 %v3236, %v3232
        %v3397 = vpack.c.b16 %v3237, %v3233
        %v3398 = vpack.c.b16 %v3238, %v3234
        %v3399 = vpack.c.b16 %v3239, %v3235
        %v3400 = vpack.c.b16 %v3244, %v3240
        %v3401 = vpack.c.b16 %v3245, %v3241
        %v3402 = vpack.c.b16 %v3246, %v3242
        %v3403 = vpack.c.b16 %v3247, %v3243
        %v3404 = vpack.c.b16 %v3252, %v3248
        %v3405 = vpack.c.b16 %v3253, %v3249
        %v3406 = vpack.c.b16 %v3254, %v3250
        %v3407 = vpack.c.b16 %v3255, %v3251
        %v3408 = vpack.c.b16 %v3260, %v3256
        %v3409 = vpack.c.b16 %v3261, %v3257
        %v3410 = vpack.c.b16 %v3262, %v3258
        %v3411 = vpack.c.b16 %v3263, %v3259
        %v3412 = vpack.c.b16 %v3268, %v3264
        %v3413 = vpack.c.b16 %v3269, %v3265
        %v3414 = vpack.c.b16 %v3270, %v3266
        %v3415 = vpack.c.b16 %v3271, %v3267
        %v3416 = vpack.c.b16 %v3276, %v3272
        %v3417 = vpack.c.b16 %v3277, %v3273
        %v3418 = vpack.c.b16 %v3278, %v3274
        %v3419 = vpack.c.b16 %v3279, %v3275
        %v3420 = vpack.c.b16 %v3284, %v3280
        %v3421 = vpack.c.b16 %v3285, %v3281
        %v3422 = vpack.c.b16 %v3286, %v3282
        %v3423 = vpack.c.b16 %v3287, %v3283
        %v3424 = vpack.c.b16 %v3292, %v3288
        %v3425 = vpack.c.b16 %v3293, %v3289
        %v3426 = vpack.c.b16 %v3294, %v3290
        %v3427 = vpack.c.b16 %v3295, %v3291
        %v3428 = vpack.c.b16 %v3300, %v3296
        %v3429 = vpack.c.b16 %v3301, %v3297
        %v3430 = vpack.c.b16 %v3302, %v3298
        %v3431 = vpack.c.b16 %v3303, %v3299
        %3560 = vmatprep.subr.bf16.mxu0 %v3305
        %3561 = vmatpush1.bf16.msra.mxu0 %v3304
        %3562 = vmatprep.subr.bf16.mxu0 %v3309
        %3563 = vmatpush1.bf16.msra.mxu0 %v3308
        %3564 = vmatprep.subr.bf16.mxu0 %v3313
        %3565 = vmatpush1.bf16.msra.mxu0 %v3312
        %3566 = vmatprep.subr.bf16.mxu0 %v3317
        %3567 = vmatpush1.bf16.msra.mxu0 %v3316
        %3568 = vmatprep.subr.bf16.mxu0 %v3321
        %3569 = vmatpush1.bf16.msra.mxu0 %v3320
        %3570 = vmatprep.subr.bf16.mxu0 %v3325
        %3571 = vmatpush1.bf16.msra.mxu0 %v3324
        %3572 = vmatprep.subr.bf16.mxu0 %v3329
        %3573 = vmatpush1.bf16.msra.mxu0 %v3328
        %3574 = vmatprep.subr.bf16.mxu0 %v3333
        %3575 = vmatpush1.bf16.msra.mxu0 %v3332
        %3576 = vmatprep.subr.bf16.mxu0 %v3337
        %3577 = vmatpush1.bf16.msra.mxu0 %v3336
        %3578 = vmatprep.subr.bf16.mxu0 %v3341
        %3579 = vmatpush1.bf16.msra.mxu0 %v3340
        %3580 = vmatprep.subr.bf16.mxu0 %v3345
        %3581 = vmatpush1.bf16.msra.mxu0 %v3344
        %3582 = vmatprep.subr.bf16.mxu0 %v3349
        %3583 = vmatpush1.bf16.msra.mxu0 %v3348
        %3584 = vmatprep.subr.bf16.mxu0 %v3353
        %3585 = vmatpush1.bf16.msra.mxu0 %v3352
        %3586 = vmatprep.subr.bf16.mxu0 %v3357
        %3587 = vmatpush1.bf16.msra.mxu0 %v3356
        %3588 = vmatprep.subr.bf16.mxu0 %v3361
        %3589 = vmatpush1.bf16.msra.mxu0 %v3360
        %3590 = vmatprep.subr.bf16.mxu0 %v3365
        %3591 = vmatpush1.bf16.msra.mxu0 %v3364
        %3592 = vmatprep.mubr.bf16.mxu0 %v2789
        %3593 = vmatmul.mubr.bf16.gmra.mrb[0].mxu0 %v2788
        %v3594 = vpop.f32.mrb[0].mxu0
        %v3595 = vadd.f32 0.0, %v3594
        %v3596 = vpop.f32.mrb[0].mxu0
        %v3597 = vadd.f32 0.0, %v3596
        %v3598 = vpop.f32.mrb[0].mxu0
        %v3599 = vadd.f32 0.0, %v3598
        %v3600 = vpop.f32.mrb[0].mxu0
        %v3601 = vadd.f32 0.0, %v3600
        %3602 = vdwg.mxu0
        %3603 = vmatprep.subr.bf16.mxu0 %v3369
        %3604 = vmatpush1.bf16.msra.mxu0 %v3368
        %3605 = vmatprep.subr.bf16.mxu0 %v3373
        %3606 = vmatpush1.bf16.msra.mxu0 %v3372
        %3607 = vmatprep.subr.bf16.mxu0 %v3377
        %3608 = vmatpush1.bf16.msra.mxu0 %v3376
        %3609 = vmatprep.subr.bf16.mxu0 %v3381
        %3610 = vmatpush1.bf16.msra.mxu0 %v3380
        %3611 = vmatprep.subr.bf16.mxu0 %v3385
        %3612 = vmatpush1.bf16.msra.mxu0 %v3384
        %3613 = vmatprep.subr.bf16.mxu0 %v3389
        %3614 = vmatpush1.bf16.msra.mxu0 %v3388
        %3615 = vmatprep.subr.bf16.mxu0 %v3393
        %3616 = vmatpush1.bf16.msra.mxu0 %v3392
        %3617 = vmatprep.subr.bf16.mxu0 %v3397
        %3618 = vmatpush1.bf16.msra.mxu0 %v3396
        %3619 = vmatprep.subr.bf16.mxu0 %v3401
        %3620 = vmatpush1.bf16.msra.mxu0 %v3400
        %3621 = vmatprep.subr.bf16.mxu0 %v3405
        %3622 = vmatpush1.bf16.msra.mxu0 %v3404
        %3623 = vmatprep.subr.bf16.mxu0 %v3409
        %3624 = vmatpush1.bf16.msra.mxu0 %v3408
        %3625 = vmatprep.subr.bf16.mxu0 %v3413
        %3626 = vmatpush1.bf16.msra.mxu0 %v3412
        %3627 = vmatprep.subr.bf16.mxu0 %v3417
        %3628 = vmatpush1.bf16.msra.mxu0 %v3416
        %3629 = vmatprep.subr.bf16.mxu0 %v3421
        %3630 = vmatpush1.bf16.msra.mxu0 %v3420
        %3631 = vmatprep.subr.bf16.mxu0 %v3425
        %3632 = vmatpush1.bf16.msra.mxu0 %v3424
        %3633 = vmatprep.subr.bf16.mxu0 %v3429
        %3634 = vmatpush1.bf16.msra.mxu0 %v3428
        %3635 = vmatprep.mubr.bf16.mxu0 %v2791
        %3636 = vmatmul.mubr.bf16.gmra.mrb[0].mxu0 %v2790
        %v3637 = vpop.f32.mrb[0].mxu0
        %v3638 = vadd.f32 %v3595, %v3637
        %v3639 = vpop.f32.mrb[0].mxu0
        %v3640 = vadd.f32 %v3597, %v3639
        %v3641 = vpop.f32.mrb[0].mxu0
        %v3642 = vadd.f32 %v3599, %v3641
        %v3643 = vpop.f32.mrb[0].mxu0
        %v3644 = vadd.f32 %v3601, %v3643
        %3645 = vdwg.mxu0
        %3646 = vmatprep.subr.bf16.mxu0 %v3307
        %3647 = vmatpush1.bf16.msra.mxu0 %v3306
        %3648 = vmatprep.subr.bf16.mxu0 %v3311
        %3649 = vmatpush1.bf16.msra.mxu0 %v3310
        %3650 = vmatprep.subr.bf16.mxu0 %v3315
        %3651 = vmatpush1.bf16.msra.mxu0 %v3314
        %3652 = vmatprep.subr.bf16.mxu0 %v3319
        %3653 = vmatpush1.bf16.msra.mxu0 %v3318
        %3654 = vmatprep.subr.bf16.mxu0 %v3323
        %3655 = vmatpush1.bf16.msra.mxu0 %v3322
        %3656 = vmatprep.subr.bf16.mxu0 %v3327
        %3657 = vmatpush1.bf16.msra.mxu0 %v3326
        %3658 = vmatprep.subr.bf16.mxu0 %v3331
        %3659 = vmatpush1.bf16.msra.mxu0 %v3330
        %3660 = vmatprep.subr.bf16.mxu0 %v3335
        %3661 = vmatpush1.bf16.msra.mxu0 %v3334
        %3662 = vmatprep.subr.bf16.mxu0 %v3339
        %3663 = vmatpush1.bf16.msra.mxu0 %v3338
        %3664 = vmatprep.subr.bf16.mxu0 %v3343
        %3665 = vmatpush1.bf16.msra.mxu0 %v3342
        %3666 = vmatprep.subr.bf16.mxu0 %v3347
        %3667 = vmatpush1.bf16.msra.mxu0 %v3346
        %3668 = vmatprep.subr.bf16.mxu0 %v3351
        %3669 = vmatpush1.bf16.msra.mxu0 %v3350
        %3670 = vmatprep.subr.bf16.mxu0 %v3355
        %3671 = vmatpush1.bf16.msra.mxu0 %v3354
        %3672 = vmatprep.subr.bf16.mxu0 %v3359
        %3673 = vmatpush1.bf16.msra.mxu0 %v3358
        %3674 = vmatprep.subr.bf16.mxu0 %v3363
        %3675 = vmatpush1.bf16.msra.mxu0 %v3362
        %3676 = vmatprep.subr.bf16.mxu0 %v3367
        %3677 = vmatpush1.bf16.msra.mxu0 %v3366
        %3678 = vmatprep.mubr.bf16.mxu0 %v2789
        %3679 = vmatmul.mubr.bf16.gmra.mrb[0].mxu0 %v2788
        %v3680 = vpop.f32.mrb[0].mxu0
        %v3681 = vadd.f32 0.0, %v3680
        %v3682 = vpop.f32.mrb[0].mxu0
        %v3683 = vadd.f32 0.0, %v3682
        %v3684 = vpop.f32.mrb[0].mxu0
        %v3685 = vadd.f32 0.0, %v3684
        %v3686 = vpop.f32.mrb[0].mxu0
        %v3687 = vadd.f32 0.0, %v3686
        %3688 = vdwg.mxu0
        %3689 = vmatprep.subr.bf16.mxu0 %v3371
        %3690 = vmatpush1.bf16.msra.mxu0 %v3370
        %3691 = vmatprep.subr.bf16.mxu0 %v3375
        %3692 = vmatpush1.bf16.msra.mxu0 %v3374
        %3693 = vmatprep.subr.bf16.mxu0 %v3379
        %3694 = vmatpush1.bf16.msra.mxu0 %v3378
        %3695 = vmatprep.subr.bf16.mxu0 %v3383
        %3696 = vmatpush1.bf16.msra.mxu0 %v3382
        %3697 = vmatprep.subr.bf16.mxu0 %v3387
        %3698 = vmatpush1.bf16.msra.mxu0 %v3386
        %3699 = vmatprep.subr.bf16.mxu0 %v3391
        %3700 = vmatpush1.bf16.msra.mxu0 %v3390
        %3701 = vmatprep.subr.bf16.mxu0 %v3395
        %3702 = vmatpush1.bf16.msra.mxu0 %v3394
        %3703 = vmatprep.subr.bf16.mxu0 %v3399
        %3704 = vmatpush1.bf16.msra.mxu0 %v3398
        %3705 = vmatprep.subr.bf16.mxu0 %v3403
        %3706 = vmatpush1.bf16.msra.mxu0 %v3402
        %3707 = vmatprep.subr.bf16.mxu0 %v3407
        %3708 = vmatpush1.bf16.msra.mxu0 %v3406
        %3709 = vmatprep.subr.bf16.mxu0 %v3411
        %3710 = vmatpush1.bf16.msra.mxu0 %v3410
        %3711 = vmatprep.subr.bf16.mxu0 %v3415
        %3712 = vmatpush1.bf16.msra.mxu0 %v3414
        %3713 = vmatprep.subr.bf16.mxu0 %v3419
        %3714 = vmatpush1.bf16.msra.mxu0 %v3418
        %3715 = vmatprep.subr.bf16.mxu0 %v3423
        %3716 = vmatpush1.bf16.msra.mxu0 %v3422
        %3717 = vmatprep.subr.bf16.mxu0 %v3427
        %3718 = vmatpush1.bf16.msra.mxu0 %v3426
        %3719 = vmatprep.subr.bf16.mxu0 %v3431
        %3720 = vmatpush1.bf16.msra.mxu0 %v3430
        %3721 = vmatprep.mubr.bf16.mxu0 %v2791
        %3722 = vmatmul.mubr.bf16.gmra.mrb[0].mxu0 %v2790
        %v3723 = vpop.f32.mrb[0].mxu0
        %v3724 = vadd.f32 %v3681, %v3723
        %v3725 = vpop.f32.mrb[0].mxu0
        %v3726 = vadd.f32 %v3683, %v3725
        %v3727 = vpop.f32.mrb[0].mxu0
        %v3728 = vadd.f32 %v3685, %v3727
        %v3729 = vpop.f32.mrb[0].mxu0
        %v3730 = vadd.f32 %v3687, %v3729
        %3731 = vdwg.mxu0
        %3732 = vst [vmem:[%s369] sm:$0xff] %v3638
        %3733 = vst [vmem:[%s369 + $0x8] sm:$0xff] %v3640
        %3734 = vst [vmem:[%s369 + $0x10] sm:$0xff] %v3724
        %3735 = vst [vmem:[%s369 + $0x18] sm:$0xff] %v3726
        %3736 = vst [vmem:[%s369 + $0x20] sm:$0xff] %v3642
        %3737 = vst [vmem:[%s369 + $0x28] sm:$0xff] %v3644
        %3738 = vst [vmem:[%s369 + $0x30] sm:$0xff] %v3728
        %3739 = vst [vmem:[%s369 + $0x38] sm:$0xff] %v3730
        %s3740 = sand.u32 %s187, 1
        %s3741 = scalar_lea.sflag [#allocation4], %s3740
        %s3742 = sand.u32 %s187, 1
        %s3743 = smul.addr %s3742, 64
        %s3744 = scalar_lea.vmem [#allocation13], %s3743
        // Predicated region
        $region73: #{tpu_custom_call.1} parent=47 // pred_check
          %p3745 = pneg %p197
        $region74: #{tpu_custom_call.1} parent=47 // pred_check_branch
          %3747 = sbr.rel (%p3745) target = $region76
        $region75: #{tpu_custom_call.1} parent=47 // pred_region
          %s3749 = ssub.s32 1024, 1024
          %3750 = vsyncadd %s3741, %s3749
          %s3751 = smul.addr %s27, 8
          %s3752 = smul.addr %s3751, 128
          %s3753 = scalar_lea.hbm %s7, %s3752
          %s3754 = sshll.u32 %s3744, 4
          %s3755 = int_to_ptr.vmem [resolvable:$true] %s3754
          %3760 = dma.vmem_to_hbm [thread:$0]  %s3755, 1024, %s3753, %s3741, 512, 512, 32
        $region76: #{tpu_custom_call.1} parent=47 // pred_fallthru
          _
      $region48: #{tpu_custom_call.1} parent=5 // pred_fallthru
        _
      %p3761 = scmp.le.s32.totalorder 2, %s22
      // Predicated region
      $region77: #{tpu_custom_call.1} parent=5 // pred_check
        %p3762 = pneg %p3761
      $region78: #{tpu_custom_call.1} parent=5 // pred_check_branch
        %3764 = sbr.rel (%p3762) target = $region80
      $region79: #{tpu_custom_call.1} parent=5 // pred_region
        %s3765 = ssub.s32 %s22, 2
        // Predicated region
        $region81: #{tpu_custom_call.1} parent=79 // pred_check
          %p3766 = pneg %p203
        $region82: #{tpu_custom_call.1} parent=79 // pred_check_branch
          %3768 = sbr.rel (%p3766) target = $region84
        $region83: #{tpu_custom_call.1} parent=79 // pred_region
          %s3769 = sand.u32 %s188, 1
          %s3770 = scalar_lea.sflag [#allocation4], %s3769
          %s3771 = sand.u32 %s188, 1
          %s3772 = smul.addr %s3771, 64
          %s3773 = scalar_lea.vmem [#allocation13], %s3772
          %3774 = dma.done %s3770, 1024
        $region84: #{tpu_custom_call.1} parent=79 // pred_fallthru
          _
      $region80: #{tpu_custom_call.1} parent=5 // pred_fallthru
        _
    $region6: #{tpu_custom_call.1} parent=1 // loop_footer
      %s26 = sadd.s32 1, %s22
    $region7: #{tpu_custom_call.1} parent=1 // loop_footer_branch
      %21 = sbr.rel target = $region3
    $region8: #{tpu_custom_call.1} parent=1 // loop_exit
      _
    %3775 = vsyncpa [#allocation3], 1
    %s3776 = scalar_lea.sflag [#allocation3], 1
    %3777 = vsyncpa %s3776, 1
    %3778 = vsyncpa [#allocation6], 1
    %3779 = vsyncpa [#allocation9], 1
    %3780 = vsyncpa [#allocation12], 1
    %3781 = vsyncpa [#allocation4], 1
    %s3782 = scalar_lea.sflag [#allocation4], 1
    %3783 = vsyncpa %s3782, 1

</llo_original>
